<compile_context>
chip_gen: v7x
topology: tpu7x:2x2x1
jax: 0.10.0
libtpu: 0.0.40
codegen_flags: <defaults>
</compile_context>

<pallas_src>
import jax
import jax.numpy as jnp
from jax.experimental import pallas as pl
from jax.experimental.pallas import tpu as pltpu


def _round_up(x, m):
    return ((x + m - 1) // m) * m


def make_kernel(num_layers, hidden_pad, t_blk, s_len):
    H = hidden_pad
    nl = num_layers

    def _sigmoid(x):
        # 0.5*(1+tanh(x/2)) == 1/(1+exp(-x)); tanh goes to the EUP slot and
        # avoids the VALU divide.
        return 0.5 * (jnp.tanh(0.5 * x) + 1.0)

    def kernel(fmap_ref, *refs):
        wx_refs = [refs[3 * l + 0] for l in range(nl)]
        wh_refs = [refs[3 * l + 1] for l in range(nl)]
        b_refs = [refs[3 * l + 2] for l in range(nl)]
        wha_w_ref, wha_b_ref, fc_w_ref, fc_b_ref = refs[3 * nl:3 * nl + 4]
        feat_out_ref, out_ref = refs[3 * nl + 4:3 * nl + 6]
        h_scr, c_scr = refs[3 * nl + 6:3 * nl + 8]

        # First time-block of each batch block: init hidden/cell state to zeros
        # (matches _init_hidden in the PyTorch module).
        @pl.when(pl.program_id(1) == 0)
        def _():
            h_scr[...] = jnp.zeros_like(h_scr)
            c_scr[...] = jnp.zeros_like(c_scr)

        # Hoist weight loads out of the per-timestep loop (weights are whole
        # array, single-buffered VMEM residents).
        wha_w = wha_w_ref[...]                        # (H, 128)     bf16
        wha_b = wha_b_ref[...]                        # (1, 128)     f32 (-1e9 pad)
        fc_w = fc_w_ref[...]                          # (H, OUT_PAD) bf16
        fc_b = fc_b_ref[...]                          # (1, OUT_PAD) f32
        Wxs = [wx_refs[l][...] for l in range(nl)]    # (in_l, 4H)   bf16
        Whs = [wh_refs[l][...] for l in range(nl)]    # (H, 4H)      bf16
        bs = [b_refs[l][...] for l in range(nl)]      # (1, 4H)      f32

        feats = []      # per-t attention-pooled features -> one block store
        last_h = []     # per-t last-layer hidden state   -> one batched fc
        for t in range(t_blk):                        # unrolled time loop
            # attention_h = last-layer h from previous timestep (zeros at t=0).
            att_h = h_scr[nl - 1]                     # (Bc, H) f32
            logits = jnp.dot(att_h.astype(jnp.bfloat16), wha_w,
                             preferred_element_type=jnp.float32) + wha_b
            # Full-lane (Bc, 128) softmax; padded lanes carry a -1e9 bias so
            # their weight is exactly zero.
            logits = logits - jnp.max(logits, axis=1, keepdims=True)
            e = jnp.exp(logits)
            att = e * pl.reciprocal(jnp.sum(e, axis=1, keepdims=True),
                                    approx=True)
            att = att[:, :s_len]                      # (Bc, 49) f32

            # Attention pooling on VPU (multiply) + XLU (sublane reduce): with
            # tiny M=B a per-batch (1,49)@(49,F) MXU matmul wastes the array.
            fmap = fmap_ref[t].astype(jnp.float32)    # (Bc, 49, F)
            att_feat = jnp.sum(att[:, :, None] * fmap, axis=1)   # (Bc, F) f32
            feats.append(att_feat)

            # Stacked LSTM cells: gates = x@Wx + h@Wh + b (gate order i,f,g,o),
            # no lane-dim concat copies.
            x = att_feat
            for l in range(nl):
                h_prev = h_scr[l]
                c_prev = c_scr[l]
                gates = (jnp.dot(x.astype(jnp.bfloat16), Wxs[l],
                                 preferred_element_type=jnp.float32)
                         + jnp.dot(h_prev.astype(jnp.bfloat16), Whs[l],
                                   preferred_element_type=jnp.float32)
                         + bs[l])
                # H padded to a multiple of 128 -> all gate slices lane-aligned.
                i_t = _sigmoid(gates[:, 0 * H:1 * H])
                f_t = _sigmoid(gates[:, 1 * H:2 * H])
                g_t = jnp.tanh(gates[:, 2 * H:3 * H])
                o_t = _sigmoid(gates[:, 3 * H:4 * H])
                c_new = f_t * c_prev + i_t * g_t
                h_new = o_t * jnp.tanh(c_new)
                h_scr[l] = h_new
                c_scr[l] = c_new
                x = h_new
            last_h.append(x)

        # One dense block store for the feature cube (no per-t masked sublane
        # stores) ...
        feat_out_ref[...] = jnp.stack(feats, axis=0).astype(feat_out_ref.dtype)
        # ... and one fc matmul batched over the whole time block
        # (M = t_blk*Bc instead of Bc) followed by a single lane-dense store.
        hs = jnp.concatenate(last_h, axis=0).astype(jnp.bfloat16)  # (t_blk*Bc, H)
        out2 = jnp.dot(hs, fc_w, preferred_element_type=jnp.float32) + fc_b
        out_ref[...] = out2.reshape(out_ref.shape).astype(out_ref.dtype)

    return kernel


def spatio_att_net_pallas(fmaps, params, *, t_blk=4, b_blk=None):
    """fmaps: (T, B, 49, F) float32 post-backbone feature maps.

    Returns (feature_cube (T, B, F), out (B, T, out_num)) matching the PyTorch
    module's (torch.stack(feature_cube, 0), torch.stack(out_list, 1)).
    """
    T, B, S, F = fmaps.shape
    nl = params["num_layers"]
    H = params["hidden"]
    out_num = params["fc_w"].shape[1]

    H_pad = _round_up(H, 128)          # lane-aligned gate slices / state
    out_pad = _round_up(out_num, 128)  # lane-dense logits writeback
    s_pad = _round_up(S, 128)          # full-lane softmax over attention logits

    if b_blk is None:
        b_blk = B
    assert B % b_blk == 0 and (b_blk == B or b_blk % 8 == 0), \
        "batch block must divide B and be sublane-aligned (or equal B)"

    # Pad T to a multiple of t_blk. Padded trailing steps run the full LSTM on
    # zero fmaps; their outputs are sliced off below. Harmless today because
    # the recurrent state is not exported -- gate with pl.when if that changes.
    t_pad = _round_up(T, t_blk)
    fmaps_bf = fmaps.astype(jnp.bfloat16)
    if t_pad != T:
        fmaps_bf = jnp.pad(fmaps_bf, ((0, t_pad - T), (0, 0), (0, 0), (0, 0)))

    # ---- weight packing (zero-padded to lane-aligned shapes) ----
    def pad_gate_cols(w):  # (..., 4H) -> (..., 4H_pad), per-gate zero pad
        out = jnp.zeros(w.shape[:-1] + (4 * H_pad,), jnp.float32)
        for g in range(4):
            out = out.at[..., g * H_pad:g * H_pad + H].set(
                w[..., g * H:(g + 1) * H])
        return out

    def pad_rows(w, rows):  # zero-pad the leading (contraction) dim
        return jnp.zeros((rows,) + w.shape[1:], w.dtype).at[:w.shape[0]].set(w)

    weight_args = []
    in_specs = [pl.BlockSpec((t_blk, b_blk, S, F), lambda b, tb: (tb, b, 0, 0))]

    def add_weight(w, dtype):
        weight_args.append(w.astype(dtype))
        # Whole array resident in VMEM, single-buffered: it never changes
        # across the grid, so there is no reason to double-buffer it.
        in_specs.append(pl.BlockSpec(memory_space=pltpu.MemorySpace.VMEM))

    for l in range(nl):
        wx_p = pad_gate_cols(params[f"wx{l}"])
        if l > 0:
            wx_p = pad_rows(wx_p, H_pad)              # input of layer l>0 is h
        add_weight(wx_p, jnp.bfloat16)
        add_weight(pad_rows(pad_gate_cols(params[f"wh{l}"]), H_pad), jnp.bfloat16)
        add_weight(pad_gate_cols(params[f"bx{l}"]), jnp.float32)

    wha_w_p = jnp.zeros((H_pad, s_pad), jnp.float32).at[:H, :S].set(params["wha_w"])
    wha_b_p = jnp.full((1, s_pad), -1e9, jnp.float32).at[:, :S].set(params["wha_b"])
    add_weight(wha_w_p, jnp.bfloat16)
    add_weight(wha_b_p, jnp.float32)

    fc_w_p = jnp.zeros((H_pad, out_pad), jnp.float32).at[:H, :out_num].set(params["fc_w"])
    fc_b_p = jnp.zeros((1, out_pad), jnp.float32).at[:, :out_num].set(params["fc_b"])
    add_weight(fc_w_p, jnp.bfloat16)
    add_weight(fc_b_p, jnp.float32)

    out_shapes = (
        jax.ShapeDtypeStruct((t_pad, B, F), jnp.float32),
        jax.ShapeDtypeStruct((t_pad, B, out_pad), jnp.float32),
    )
    out_specs = [
        pl.BlockSpec((t_blk, b_blk, F), lambda b, tb: (tb, b, 0)),
        pl.BlockSpec((t_blk, b_blk, out_pad), lambda b, tb: (tb, b, 0)),
    ]

    # Explicit VMEM budget: 2x fmap block (double buffered) + 1x weights
    # (single buffered) + 2x each output block + state scratch + headroom.
    weight_bytes = sum(int(w.size) * w.dtype.itemsize for w in weight_args)
    fmap_blk_bytes = t_blk * b_blk * S * F * 2
    out_blk_bytes = t_blk * b_blk * (F + out_pad) * 4
    state_bytes = 2 * nl * b_blk * H_pad * 4
    need = weight_bytes + 2 * fmap_blk_bytes + 2 * out_blk_bytes + state_bytes
    vmem_limit = max(32 << 20, min(128 << 20, int(1.25 * need) + (4 << 20)))

    feat_cube, out_t = pl.pallas_call(
        make_kernel(nl, H_pad, t_blk, S),
        out_shape=out_shapes,
        grid_spec=pltpu.PrefetchScalarGridSpec(
            num_scalar_prefetch=0,
            # Leading batch axis is "parallel" (keeps both v7x TensorCores busy
            # when the batch is blocked); the time axis is the recurrence.
            grid=(B // b_blk, t_pad // t_blk),
            in_specs=in_specs,
            out_specs=out_specs,
            scratch_shapes=[
                pltpu.VMEM((nl, b_blk, H_pad), jnp.float32),  # h state
                pltpu.VMEM((nl, b_blk, H_pad), jnp.float32),  # c state
            ],
        ),
        compiler_params=pltpu.CompilerParams(
            dimension_semantics=("parallel", "arbitrary"),
            vmem_limit_bytes=vmem_limit,
        ),
    )(fmaps_bf, *weight_args)

    feat_cube = feat_cube[:T]
    out = jnp.transpose(out_t[:T, :, :out_num], (1, 0, 2))
    return feat_cube, out


def reference(fmaps, params, dot_dtype=jnp.float32):
    """Pure-JAX reference mirroring the PyTorch forward semantics.

    dot_dtype=jnp.float32  -> exact f32 forward (PyTorch-equivalent).
    dot_dtype=jnp.bfloat16 -> same mixed precision as the kernel (bf16 matmul
    operands, f32 accumulation), for a tight consistency check.
    """
    T, B, S, F = fmaps.shape
    nl = params["num_layers"]
    H = params["hidden"]
    cast = lambda a: a.astype(dot_dtype)
    dot = lambda a, b: jnp.dot(cast(a), cast(b), preferred_element_type=jnp.float32)
    sig = lambda z: 1.0 / (1.0 + jnp.exp(-z))
    h = [jnp.zeros((B, H), jnp.float32) for _ in range(nl)]
    c = [jnp.zeros((B, H), jnp.float32) for _ in range(nl)]
    feats, outs = [], []
    for t in range(T):
        att_h = h[-1]
        logits = dot(att_h, params["wha_w"]) + params["wha_b"]
        logits = logits - jnp.max(logits, axis=1, keepdims=True)
        e = jnp.exp(logits)
        att = e / jnp.sum(e, axis=1, keepdims=True)
        att_feat = jnp.einsum("bs,bsf->bf", cast(att), cast(fmaps[t]),
                              preferred_element_type=jnp.float32)
        feats.append(att_feat)
        x = att_feat
        for l in range(nl):
            gates = (dot(x, params[f"wx{l}"]) + params[f"bx{l}"]
                     + dot(h[l], params[f"wh{l}"]))
            it = sig(gates[:, :H])
            ft = sig(gates[:, H:2 * H])
            gt = jnp.tanh(gates[:, 2 * H:3 * H])
            ot = sig(gates[:, 3 * H:])
            c[l] = ft * c[l] + it * gt
            h[l] = ot * jnp.tanh(c[l])
            x = h[l]
        outs.append(dot(x, params["fc_w"]) + params["fc_b"])
    return jnp.stack(feats, 0), jnp.stack(outs, 1)


if __name__ == "__main__":
    B, C, T, HW = 2, 3, 8, 14      # video input (B, C, T, 14, 14)
    F = 8                          # stand-in feature channels (resnet101 -> 2048)
    hidden = 32
    num_layers = 2
    out_num = 4
    T_BLK = 4                      # timesteps per grid step (time grid = 2)

    ks = jax.random.split(jax.random.PRNGKey(0), 16)
    x = jax.random.normal(ks[0], (B, C, T, HW, HW), jnp.float32)

    # TODO(synk): stand-in for the frozen resnet101 backbone: avg-pool 14x14 -> 7x7
    # plus a 1x1 conv, laid out as (T, B, 49, F) so F sits on the lane axis.
    conv_w = 0.1 * jax.random.normal(ks[1], (F, C), jnp.float32)
    xp = x.reshape(B, C, T, 7, 2, 7, 2).mean(axis=(4, 6))            # (B, C, T, 7, 7)
    fmaps = jnp.einsum("bcthw,fc->tbhwf", xp, conv_w).reshape(T, B, 49, F)

    params = {"num_layers": num_layers, "hidden": hidden}
    kidx = 2
    for l in range(num_layers):
        in_dim = F if l == 0 else hidden
        params[f"wx{l}"] = 0.1 * jax.random.normal(ks[kidx], (in_dim, 4 * hidden), jnp.float32); kidx += 1
        params[f"bx{l}"] = 0.1 * jax.random.normal(ks[kidx], (1, 4 * hidden), jnp.float32); kidx += 1
        params[f"wh{l}"] = 0.1 * jax.random.normal(ks[kidx], (hidden, 4 * hidden), jnp.float32); kidx += 1
    params["wha_w"] = 0.1 * jax.random.normal(ks[kidx], (hidden, 49), jnp.float32); kidx += 1
    params["wha_b"] = 0.1 * jax.random.normal(ks[kidx], (1, 49), jnp.float32); kidx += 1
    params["fc_w"] = 0.1 * jax.random.normal(ks[kidx], (hidden, out_num), jnp.float32); kidx += 1
    params["fc_b"] = 0.1 * jax.random.normal(ks[kidx], (1, out_num), jnp.float32); kidx += 1

    feat_cube, out = spatio_att_net_pallas(fmaps, params, t_blk=T_BLK)
    jax.block_until_ready((feat_cube, out))

    # Tight check vs. the same mixed-precision math in plain JAX, and a looser
    # check vs. the pure-f32 (PyTorch-equivalent) forward; the tolerance gap is
    # the bf16-matmul / approx-reciprocal mixed precision used on the MXU/EUP.
    ref_feat_mx, ref_out_mx = reference(fmaps, params, dot_dtype=jnp.bfloat16)
    ref_feat_f32, ref_out_f32 = reference(fmaps, params, dot_dtype=jnp.float32)

    assert feat_cube.shape == (T, B, F) and out.shape == (B, T, out_num)
    assert jnp.allclose(feat_cube, ref_feat_mx, atol=1e-2), "feature_cube mismatch (mixed ref)"
    assert jnp.allclose(out, ref_out_mx, atol=1e-2), "output mismatch (mixed ref)"
    assert jnp.allclose(feat_cube, ref_feat_f32, atol=5e-2), "feature_cube mismatch (f32 ref)"
    assert jnp.allclose(out, ref_out_f32, atol=5e-2), "output mismatch (f32 ref)"
    print("KERNEL_OK")
</pallas_src>

<mosaic_0001>
module attributes {stable_mosaic.version = 11 : i64} {
  func.func @kernel(%arg0: i32, %arg1: i32, %arg2: memref<4x2x49x8xbf16, #tpu.memory_space<vmem>>, %arg3: memref<8x512xbf16, #tpu.memory_space<vmem>>, %arg4: memref<128x512xbf16, #tpu.memory_space<vmem>>, %arg5: memref<1x512xf32, #tpu.memory_space<vmem>>, %arg6: memref<128x512xbf16, #tpu.memory_space<vmem>>, %arg7: memref<128x512xbf16, #tpu.memory_space<vmem>>, %arg8: memref<1x512xf32, #tpu.memory_space<vmem>>, %arg9: memref<128x128xbf16, #tpu.memory_space<vmem>>, %arg10: memref<1x128xf32, #tpu.memory_space<vmem>>, %arg11: memref<128x128xbf16, #tpu.memory_space<vmem>>, %arg12: memref<1x128xf32, #tpu.memory_space<vmem>>, %arg13: memref<4x2x8xf32, #tpu.memory_space<vmem>>, %arg14: memref<4x2x128xf32, #tpu.memory_space<vmem>>, %arg15: memref<2x2x128xf32, #tpu.memory_space<vmem>>, %arg16: memref<2x2x128xf32, #tpu.memory_space<vmem>>) attributes {dimension_semantics = [#tpu.dimension_semantics<parallel>, #tpu.dimension_semantics<arbitrary>], iteration_bounds = array<i64: 1, 2>, scalar_prefetch = 0 : i64, scratch_operands = 2 : i64, tpu.core_type = #tpu.core_type<tc>, window_params = [{transform_indices = @transform_0, window_bounds = array<i64: 4, 2, 49, 8>}, {pipeline_mode = #tpu.pipeline_mode<synchronous>, transform_indices = @transform_1, window_bounds = array<i64: 8, 512>}, {pipeline_mode = #tpu.pipeline_mode<synchronous>, transform_indices = @transform_2, window_bounds = array<i64: 128, 512>}, {pipeline_mode = #tpu.pipeline_mode<synchronous>, transform_indices = @transform_3, window_bounds = array<i64: 1, 512>}, {pipeline_mode = #tpu.pipeline_mode<synchronous>, transform_indices = @transform_4, window_bounds = array<i64: 128, 512>}, {pipeline_mode = #tpu.pipeline_mode<synchronous>, transform_indices = @transform_5, window_bounds = array<i64: 128, 512>}, {pipeline_mode = #tpu.pipeline_mode<synchronous>, transform_indices = @transform_6, window_bounds = array<i64: 1, 512>}, {pipeline_mode = #tpu.pipeline_mode<synchronous>, transform_indices = @transform_7, window_bounds = array<i64: 128, 128>}, {pipeline_mode = #tpu.pipeline_mode<synchronous>, transform_indices = @transform_8, window_bounds = array<i64: 1, 128>}, {pipeline_mode = #tpu.pipeline_mode<synchronous>, transform_indices = @transform_9, window_bounds = array<i64: 128, 128>}, {pipeline_mode = #tpu.pipeline_mode<synchronous>, transform_indices = @transform_10, window_bounds = array<i64: 1, 128>}, {transform_indices = @transform_11, window_bounds = array<i64: 4, 2, 8>}, {transform_indices = @transform_12, window_bounds = array<i64: 4, 2, 128>}]} {
    %c0_i32 = arith.constant 0 : i32
    %0 = arith.cmpi eq, %arg1, %c0_i32 : i32
    %1 = arith.extui %0 : i1 to i32
    %c0_i32_0 = arith.constant 0 : i32
    %2 = arith.cmpi ne, %1, %c0_i32_0 : i32
    scf.if %2 {
      %cst_251 = arith.constant 0.000000e+00 : f32
      %506 = vector.broadcast %cst_251 : f32 to vector<2x2x128xf32>
      %c0_252 = arith.constant 0 : index
      %c0_253 = arith.constant 0 : index
      %c0_254 = arith.constant 0 : index
      %507 = vector.load %arg15[%c0_252, %c0_253, %c0_254] : memref<2x2x128xf32, #tpu.memory_space<vmem>>, vector<2x2x128xf32>
      tpu.vector_store %arg15[%c0_252, %c0_253, %c0_254], %506 {strides = array<i32>} : memref<2x2x128xf32, #tpu.memory_space<vmem>>, vector<2x2x128xf32>,
      %cst_255 = arith.constant 0.000000e+00 : f32
      %508 = vector.broadcast %cst_255 : f32 to vector<2x2x128xf32>
      %c0_256 = arith.constant 0 : index
      %c0_257 = arith.constant 0 : index
      %c0_258 = arith.constant 0 : index
      %509 = vector.load %arg16[%c0_256, %c0_257, %c0_258] : memref<2x2x128xf32, #tpu.memory_space<vmem>>, vector<2x2x128xf32>
      tpu.vector_store %arg16[%c0_256, %c0_257, %c0_258], %508 {strides = array<i32>} : memref<2x2x128xf32, #tpu.memory_space<vmem>>, vector<2x2x128xf32>,
    } else {
    }
    %c0 = arith.constant 0 : index
    %c0_1 = arith.constant 0 : index
    %3 = vector.load %arg9[%c0, %c0_1] : memref<128x128xbf16, #tpu.memory_space<vmem>>, vector<128x128xbf16>
    %c0_2 = arith.constant 0 : index
    %c0_3 = arith.constant 0 : index
    %4 = vector.load %arg10[%c0_2, %c0_3] : memref<1x128xf32, #tpu.memory_space<vmem>>, vector<1x128xf32>
    %c0_4 = arith.constant 0 : index
    %c0_5 = arith.constant 0 : index
    %5 = vector.load %arg11[%c0_4, %c0_5] : memref<128x128xbf16, #tpu.memory_space<vmem>>, vector<128x128xbf16>
    %c0_6 = arith.constant 0 : index
    %c0_7 = arith.constant 0 : index
    %6 = vector.load %arg12[%c0_6, %c0_7] : memref<1x128xf32, #tpu.memory_space<vmem>>, vector<1x128xf32>
    %c0_8 = arith.constant 0 : index
    %c0_9 = arith.constant 0 : index
    %7 = vector.load %arg3[%c0_8, %c0_9] : memref<8x512xbf16, #tpu.memory_space<vmem>>, vector<8x512xbf16>
    %c0_10 = arith.constant 0 : index
    %c0_11 = arith.constant 0 : index
    %8 = vector.load %arg6[%c0_10, %c0_11] : memref<128x512xbf16, #tpu.memory_space<vmem>>, vector<128x512xbf16>
    %c0_12 = arith.constant 0 : index
    %c0_13 = arith.constant 0 : index
    %9 = vector.load %arg4[%c0_12, %c0_13] : memref<128x512xbf16, #tpu.memory_space<vmem>>, vector<128x512xbf16>
    %c0_14 = arith.constant 0 : index
    %c0_15 = arith.constant 0 : index
    %10 = vector.load %arg7[%c0_14, %c0_15] : memref<128x512xbf16, #tpu.memory_space<vmem>>, vector<128x512xbf16>
    %c0_16 = arith.constant 0 : index
    %c0_17 = arith.constant 0 : index
    %11 = vector.load %arg5[%c0_16, %c0_17] : memref<1x512xf32, #tpu.memory_space<vmem>>, vector<1x512xf32>
    %c0_18 = arith.constant 0 : index
    %c0_19 = arith.constant 0 : index
    %12 = vector.load %arg8[%c0_18, %c0_19] : memref<1x512xf32, #tpu.memory_space<vmem>>, vector<1x512xf32>
    %c1 = arith.constant 1 : index
    %c0_20 = arith.constant 0 : index
    %c0_21 = arith.constant 0 : index
    %13 = vector.load %arg15[%c1, %c0_20, %c0_21] : memref<2x2x128xf32, #tpu.memory_space<vmem>>, vector<1x2x128xf32>
    %14 = vector.shape_cast %13 : vector<1x2x128xf32> to vector<2x128xf32>
    %15 = arith.truncf %14 : vector<2x128xf32> to vector<2x128xbf16>
    %cst = arith.constant dense<0.000000e+00> : vector<2x128xf32>
    %16 = tpu.matmul %15, %3, %cst {dimension_numbers = #tpu.dot_dimension_numbers<[1], [0], [0], [1], [0, 0, 1, 1], [], []>} : vector<2x128xbf16>, vector<128x128xbf16>, vector<2x128xf32> -> vector<2x128xf32>
    %17 = vector.broadcast %4 : vector<1x128xf32> to vector<2x128xf32>
    %18 = arith.addf %16, %17 : vector<2x128xf32>
    %cst_22 = arith.constant dense<0xFF800000> : vector<2xf32>
    %19 = vector.multi_reduction <maximumf>, %18, %cst_22 [1] : vector<2x128xf32> to vector<2xf32>
    %20 = vector.shape_cast %19 : vector<2xf32> to vector<2x1xf32>
    %21 = vector.broadcast %20 : vector<2x1xf32> to vector<2x128xf32>
    %22 = arith.subf %18, %21 : vector<2x128xf32>
    %23 = math.exp %22 : vector<2x128xf32>
    %cst_23 = arith.constant dense<0.000000e+00> : vector<2xf32>
    %24 = vector.multi_reduction <add>, %23, %cst_23 [1] : vector<2x128xf32> to vector<2xf32>
    %25 = vector.shape_cast %24 : vector<2xf32> to vector<2x1xf32>
    %26 = tpu.reciprocal %25 {approx = true} : vector<2x1xf32> -> vector<2x1xf32>
    %27 = vector.broadcast %26 : vector<2x1xf32> to vector<2x128xf32>
    %28 = arith.mulf %23, %27 : vector<2x128xf32>
    %29 = vector.extract_strided_slice %28 {offsets = [0, 0], sizes = [2, 49], strides = [1, 1]} : vector<2x128xf32> to vector<2x49xf32>
    %c0_24 = arith.constant 0 : index
    %c0_25 = arith.constant 0 : index
    %c0_26 = arith.constant 0 : index
    %c0_27 = arith.constant 0 : index
    %30 = vector.load %arg2[%c0_24, %c0_25, %c0_26, %c0_27] : memref<4x2x49x8xbf16, #tpu.memory_space<vmem>>, vector<1x2x49x8xbf16>
    %31 = vector.shape_cast %30 : vector<1x2x49x8xbf16> to vector<2x49x8xbf16>
    %32 = arith.extf %31 : vector<2x49x8xbf16> to vector<2x49x8xf32>
    %33 = vector.shape_cast %29 : vector<2x49xf32> to vector<2x49x1xf32>
    %34 = vector.broadcast %33 : vector<2x49x1xf32> to vector<2x49x8xf32>
    %35 = arith.mulf %34, %32 : vector<2x49x8xf32>
    %cst_28 = arith.constant dense<0.000000e+00> : vector<2x8xf32>
    %36 = vector.multi_reduction <add>, %35, %cst_28 [1] : vector<2x49x8xf32> to vector<2x8xf32>
    %c0_29 = arith.constant 0 : index
    %c0_30 = arith.constant 0 : index
    %c0_31 = arith.constant 0 : index
    %37 = vector.load %arg15[%c0_29, %c0_30, %c0_31] : memref<2x2x128xf32, #tpu.memory_space<vmem>>, vector<1x2x128xf32>
    %38 = vector.shape_cast %37 : vector<1x2x128xf32> to vector<2x128xf32>
    %c0_32 = arith.constant 0 : index
    %c0_33 = arith.constant 0 : index
    %c0_34 = arith.constant 0 : index
    %39 = vector.load %arg16[%c0_32, %c0_33, %c0_34] : memref<2x2x128xf32, #tpu.memory_space<vmem>>, vector<1x2x128xf32>
    %40 = vector.shape_cast %39 : vector<1x2x128xf32> to vector<2x128xf32>
    %41 = arith.truncf %36 : vector<2x8xf32> to vector<2x8xbf16>
    %cst_35 = arith.constant dense<0.000000e+00> : vector<2x512xf32>
    %42 = tpu.matmul %41, %7, %cst_35 {dimension_numbers = #tpu.dot_dimension_numbers<[1], [0], [0], [1], [0, 0, 1, 1], [], []>} : vector<2x8xbf16>, vector<8x512xbf16>, vector<2x512xf32> -> vector<2x512xf32>
    %43 = arith.truncf %38 : vector<2x128xf32> to vector<2x128xbf16>
    %cst_36 = arith.constant dense<0.000000e+00> : vector<2x512xf32>
    %44 = tpu.matmul %43, %9, %cst_36 {dimension_numbers = #tpu.dot_dimension_numbers<[1], [0], [0], [1], [0, 0, 1, 1], [], []>} : vector<2x128xbf16>, vector<128x512xbf16>, vector<2x512xf32> -> vector<2x512xf32>
    %45 = arith.addf %42, %44 : vector<2x512xf32>
    %46 = vector.broadcast %11 : vector<1x512xf32> to vector<2x512xf32>
    %47 = arith.addf %45, %46 : vector<2x512xf32>
    %48 = vector.extract_strided_slice %47 {offsets = [0, 0], sizes = [2, 128], strides = [1, 1]} : vector<2x512xf32> to vector<2x128xf32>
    %cst_37 = arith.constant 5.000000e-01 : f32
    %49 = vector.broadcast %cst_37 : f32 to vector<2x128xf32>
    %50 = arith.mulf %49, %48 : vector<2x128xf32>
    %51 = math.tanh %50 : vector<2x128xf32>
    %cst_38 = arith.constant 1.000000e+00 : f32
    %52 = vector.broadcast %cst_38 : f32 to vector<2x128xf32>
    %53 = arith.addf %51, %52 : vector<2x128xf32>
    %cst_39 = arith.constant 5.000000e-01 : f32
    %54 = vector.broadcast %cst_39 : f32 to vector<2x128xf32>
    %55 = arith.mulf %54, %53 : vector<2x128xf32>
    %56 = vector.extract_strided_slice %47 {offsets = [0, 128], sizes = [2, 128], strides = [1, 1]} : vector<2x512xf32> to vector<2x128xf32>
    %cst_40 = arith.constant 5.000000e-01 : f32
    %57 = vector.broadcast %cst_40 : f32 to vector<2x128xf32>
    %58 = arith.mulf %57, %56 : vector<2x128xf32>
    %59 = math.tanh %58 : vector<2x128xf32>
    %cst_41 = arith.constant 1.000000e+00 : f32
    %60 = vector.broadcast %cst_41 : f32 to vector<2x128xf32>
    %61 = arith.addf %59, %60 : vector<2x128xf32>
    %cst_42 = arith.constant 5.000000e-01 : f32
    %62 = vector.broadcast %cst_42 : f32 to vector<2x128xf32>
    %63 = arith.mulf %62, %61 : vector<2x128xf32>
    %64 = vector.extract_strided_slice %47 {offsets = [0, 256], sizes = [2, 128], strides = [1, 1]} : vector<2x512xf32> to vector<2x128xf32>
    %65 = math.tanh %64 : vector<2x128xf32>
    %66 = vector.extract_strided_slice %47 {offsets = [0, 384], sizes = [2, 128], strides = [1, 1]} : vector<2x512xf32> to vector<2x128xf32>
    %cst_43 = arith.constant 5.000000e-01 : f32
    %67 = vector.broadcast %cst_43 : f32 to vector<2x128xf32>
    %68 = arith.mulf %67, %66 : vector<2x128xf32>
    %69 = math.tanh %68 : vector<2x128xf32>
    %cst_44 = arith.constant 1.000000e+00 : f32
    %70 = vector.broadcast %cst_44 : f32 to vector<2x128xf32>
    %71 = arith.addf %69, %70 : vector<2x128xf32>
    %cst_45 = arith.constant 5.000000e-01 : f32
    %72 = vector.broadcast %cst_45 : f32 to vector<2x128xf32>
    %73 = arith.mulf %72, %71 : vector<2x128xf32>
    %74 = arith.mulf %63, %40 : vector<2x128xf32>
    %75 = arith.mulf %55, %65 : vector<2x128xf32>
    %76 = arith.addf %74, %75 : vector<2x128xf32>
    %77 = math.tanh %76 : vector<2x128xf32>
    %78 = arith.mulf %73, %77 : vector<2x128xf32>
    %c0_46 = arith.constant 0 : index
    %c0_47 = arith.constant 0 : index
    %c0_48 = arith.constant 0 : index
    %79 = vector.load %arg15[%c0_46, %c0_47, %c0_48] : memref<2x2x128xf32, #tpu.memory_space<vmem>>, vector<1x2x128xf32>
    %80 = vector.shape_cast %79 : vector<1x2x128xf32> to vector<2x128xf32>
    %81 = vector.shape_cast %78 : vector<2x128xf32> to vector<1x2x128xf32>
    tpu.vector_store %arg15[%c0_46, %c0_47, %c0_48], %81 {strides = array<i32>} : memref<2x2x128xf32, #tpu.memory_space<vmem>>, vector<1x2x128xf32>,
    %c0_49 = arith.constant 0 : index
    %c0_50 = arith.constant 0 : index
    %c0_51 = arith.constant 0 : index
    %82 = vector.load %arg16[%c0_49, %c0_50, %c0_51] : memref<2x2x128xf32, #tpu.memory_space<vmem>>, vector<1x2x128xf32>
    %83 = vector.shape_cast %82 : vector<1x2x128xf32> to vector<2x128xf32>
    %84 = vector.shape_cast %76 : vector<2x128xf32> to vector<1x2x128xf32>
    tpu.vector_store %arg16[%c0_49, %c0_50, %c0_51], %84 {strides = array<i32>} : memref<2x2x128xf32, #tpu.memory_space<vmem>>, vector<1x2x128xf32>,
    %c1_52 = arith.constant 1 : index
    %c0_53 = arith.constant 0 : index
    %c0_54 = arith.constant 0 : index
    %85 = vector.load %arg15[%c1_52, %c0_53, %c0_54] : memref<2x2x128xf32, #tpu.memory_space<vmem>>, vector<1x2x128xf32>
    %86 = vector.shape_cast %85 : vector<1x2x128xf32> to vector<2x128xf32>
    %c1_55 = arith.constant 1 : index
    %c0_56 = arith.constant 0 : index
    %c0_57 = arith.constant 0 : index
    %87 = vector.load %arg16[%c1_55, %c0_56, %c0_57] : memref<2x2x128xf32, #tpu.memory_space<vmem>>, vector<1x2x128xf32>
    %88 = vector.shape_cast %87 : vector<1x2x128xf32> to vector<2x128xf32>
    %89 = arith.truncf %78 : vector<2x128xf32> to vector<2x128xbf16>
    %cst_58 = arith.constant dense<0.000000e+00> : vector<2x512xf32>
    %90 = tpu.matmul %89, %8, %cst_58 {dimension_numbers = #tpu.dot_dimension_numbers<[1], [0], [0], [1], [0, 0, 1, 1], [], []>} : vector<2x128xbf16>, vector<128x512xbf16>, vector<2x512xf32> -> vector<2x512xf32>
    %91 = arith.truncf %86 : vector<2x128xf32> to vector<2x128xbf16>
    %cst_59 = arith.constant dense<0.000000e+00> : vector<2x512xf32>
    %92 = tpu.matmul %91, %10, %cst_59 {dimension_numbers = #tpu.dot_dimension_numbers<[1], [0], [0], [1], [0, 0, 1, 1], [], []>} : vector<2x128xbf16>, vector<128x512xbf16>, vector<2x512xf32> -> vector<2x512xf32>
    %93 = arith.addf %90, %92 : vector<2x512xf32>
    %94 = vector.broadcast %12 : vector<1x512xf32> to vector<2x512xf32>
    %95 = arith.addf %93, %94 : vector<2x512xf32>
    %96 = vector.extract_strided_slice %95 {offsets = [0, 0], sizes = [2, 128], strides = [1, 1]} : vector<2x512xf32> to vector<2x128xf32>
    %cst_60 = arith.constant 5.000000e-01 : f32
    %97 = vector.broadcast %cst_60 : f32 to vector<2x128xf32>
    %98 = arith.mulf %97, %96 : vector<2x128xf32>
    %99 = math.tanh %98 : vector<2x128xf32>
    %cst_61 = arith.constant 1.000000e+00 : f32
    %100 = vector.broadcast %cst_61 : f32 to vector<2x128xf32>
    %101 = arith.addf %99, %100 : vector<2x128xf32>
    %cst_62 = arith.constant 5.000000e-01 : f32
    %102 = vector.broadcast %cst_62 : f32 to vector<2x128xf32>
    %103 = arith.mulf %102, %101 : vector<2x128xf32>
    %104 = vector.extract_strided_slice %95 {offsets = [0, 128], sizes = [2, 128], strides = [1, 1]} : vector<2x512xf32> to vector<2x128xf32>
    %cst_63 = arith.constant 5.000000e-01 : f32
    %105 = vector.broadcast %cst_63 : f32 to vector<2x128xf32>
    %106 = arith.mulf %105, %104 : vector<2x128xf32>
    %107 = math.tanh %106 : vector<2x128xf32>
    %cst_64 = arith.constant 1.000000e+00 : f32
    %108 = vector.broadcast %cst_64 : f32 to vector<2x128xf32>
    %109 = arith.addf %107, %108 : vector<2x128xf32>
    %cst_65 = arith.constant 5.000000e-01 : f32
    %110 = vector.broadcast %cst_65 : f32 to vector<2x128xf32>
    %111 = arith.mulf %110, %109 : vector<2x128xf32>
    %112 = vector.extract_strided_slice %95 {offsets = [0, 256], sizes = [2, 128], strides = [1, 1]} : vector<2x512xf32> to vector<2x128xf32>
    %113 = math.tanh %112 : vector<2x128xf32>
    %114 = vector.extract_strided_slice %95 {offsets = [0, 384], sizes = [2, 128], strides = [1, 1]} : vector<2x512xf32> to vector<2x128xf32>
    %cst_66 = arith.constant 5.000000e-01 : f32
    %115 = vector.broadcast %cst_66 : f32 to vector<2x128xf32>
    %116 = arith.mulf %115, %114 : vector<2x128xf32>
    %117 = math.tanh %116 : vector<2x128xf32>
    %cst_67 = arith.constant 1.000000e+00 : f32
    %118 = vector.broadcast %cst_67 : f32 to vector<2x128xf32>
    %119 = arith.addf %117, %118 : vector<2x128xf32>
    %cst_68 = arith.constant 5.000000e-01 : f32
    %120 = vector.broadcast %cst_68 : f32 to vector<2x128xf32>
    %121 = arith.mulf %120, %119 : vector<2x128xf32>
    %122 = arith.mulf %111, %88 : vector<2x128xf32>
    %123 = arith.mulf %103, %113 : vector<2x128xf32>
    %124 = arith.addf %122, %123 : vector<2x128xf32>
    %125 = math.tanh %124 : vector<2x128xf32>
    %126 = arith.mulf %121, %125 : vector<2x128xf32>
    %c1_69 = arith.constant 1 : index
    %c0_70 = arith.constant 0 : index
    %c0_71 = arith.constant 0 : index
    %127 = vector.load %arg15[%c1_69, %c0_70, %c0_71] : memref<2x2x128xf32, #tpu.memory_space<vmem>>, vector<1x2x128xf32>
    %128 = vector.shape_cast %127 : vector<1x2x128xf32> to vector<2x128xf32>
    %129 = vector.shape_cast %126 : vector<2x128xf32> to vector<1x2x128xf32>
    tpu.vector_store %arg15[%c1_69, %c0_70, %c0_71], %129 {strides = array<i32>} : memref<2x2x128xf32, #tpu.memory_space<vmem>>, vector<1x2x128xf32>,
    %c1_72 = arith.constant 1 : index
    %c0_73 = arith.constant 0 : index
    %c0_74 = arith.constant 0 : index
    %130 = vector.load %arg16[%c1_72, %c0_73, %c0_74] : memref<2x2x128xf32, #tpu.memory_space<vmem>>, vector<1x2x128xf32>
    %131 = vector.shape_cast %130 : vector<1x2x128xf32> to vector<2x128xf32>
    %132 = vector.shape_cast %124 : vector<2x128xf32> to vector<1x2x128xf32>
    tpu.vector_store %arg16[%c1_72, %c0_73, %c0_74], %132 {strides = array<i32>} : memref<2x2x128xf32, #tpu.memory_space<vmem>>, vector<1x2x128xf32>,
    %c1_75 = arith.constant 1 : index
    %c0_76 = arith.constant 0 : index
    %c0_77 = arith.constant 0 : index
    %133 = vector.load %arg15[%c1_75, %c0_76, %c0_77] : memref<2x2x128xf32, #tpu.memory_space<vmem>>, vector<1x2x128xf32>
    %134 = vector.shape_cast %133 : vector<1x2x128xf32> to vector<2x128xf32>
    %135 = arith.truncf %134 : vector<2x128xf32> to vector<2x128xbf16>
    %cst_78 = arith.constant dense<0.000000e+00> : vector<2x128xf32>
    %136 = tpu.matmul %135, %3, %cst_78 {dimension_numbers = #tpu.dot_dimension_numbers<[1], [0], [0], [1], [0, 0, 1, 1], [], []>} : vector<2x128xbf16>, vector<128x128xbf16>, vector<2x128xf32> -> vector<2x128xf32>
    %137 = vector.broadcast %4 : vector<1x128xf32> to vector<2x128xf32>
    %138 = arith.addf %136, %137 : vector<2x128xf32>
    %cst_79 = arith.constant dense<0xFF800000> : vector<2xf32>
    %139 = vector.multi_reduction <maximumf>, %138, %cst_79 [1] : vector<2x128xf32> to vector<2xf32>
    %140 = vector.shape_cast %139 : vector<2xf32> to vector<2x1xf32>
    %141 = vector.broadcast %140 : vector<2x1xf32> to vector<2x128xf32>
    %142 = arith.subf %138, %141 : vector<2x128xf32>
    %143 = math.exp %142 : vector<2x128xf32>
    %cst_80 = arith.constant dense<0.000000e+00> : vector<2xf32>
    %144 = vector.multi_reduction <add>, %143, %cst_80 [1] : vector<2x128xf32> to vector<2xf32>
    %145 = vector.shape_cast %144 : vector<2xf32> to vector<2x1xf32>
    %146 = tpu.reciprocal %145 {approx = true} : vector<2x1xf32> -> vector<2x1xf32>
    %147 = vector.broadcast %146 : vector<2x1xf32> to vector<2x128xf32>
    %148 = arith.mulf %143, %147 : vector<2x128xf32>
    %149 = vector.extract_strided_slice %148 {offsets = [0, 0], sizes = [2, 49], strides = [1, 1]} : vector<2x128xf32> to vector<2x49xf32>
    %c1_81 = arith.constant 1 : index
    %c0_82 = arith.constant 0 : index
    %c0_83 = arith.constant 0 : index
    %c0_84 = arith.constant 0 : index
    %150 = vector.load %arg2[%c1_81, %c0_82, %c0_83, %c0_84] : memref<4x2x49x8xbf16, #tpu.memory_space<vmem>>, vector<1x2x49x8xbf16>
    %151 = vector.shape_cast %150 : vector<1x2x49x8xbf16> to vector<2x49x8xbf16>
    %152 = arith.extf %151 : vector<2x49x8xbf16> to vector<2x49x8xf32>
    %153 = vector.shape_cast %149 : vector<2x49xf32> to vector<2x49x1xf32>
    %154 = vector.broadcast %153 : vector<2x49x1xf32> to vector<2x49x8xf32>
    %155 = arith.mulf %154, %152 : vector<2x49x8xf32>
    %cst_85 = arith.constant dense<0.000000e+00> : vector<2x8xf32>
    %156 = vector.multi_reduction <add>, %155, %cst_85 [1] : vector<2x49x8xf32> to vector<2x8xf32>
    %c0_86 = arith.constant 0 : index
    %c0_87 = arith.constant 0 : index
    %c0_88 = arith.constant 0 : index
    %157 = vector.load %arg15[%c0_86, %c0_87, %c0_88] : memref<2x2x128xf32, #tpu.memory_space<vmem>>, vector<1x2x128xf32>
    %158 = vector.shape_cast %157 : vector<1x2x128xf32> to vector<2x128xf32>
    %c0_89 = arith.constant 0 : index
    %c0_90 = arith.constant 0 : index
    %c0_91 = arith.constant 0 : index
    %159 = vector.load %arg16[%c0_89, %c0_90, %c0_91] : memref<2x2x128xf32, #tpu.memory_space<vmem>>, vector<1x2x128xf32>
    %160 = vector.shape_cast %159 : vector<1x2x128xf32> to vector<2x128xf32>
    %161 = arith.truncf %156 : vector<2x8xf32> to vector<2x8xbf16>
    %cst_92 = arith.constant dense<0.000000e+00> : vector<2x512xf32>
    %162 = tpu.matmul %161, %7, %cst_92 {dimension_numbers = #tpu.dot_dimension_numbers<[1], [0], [0], [1], [0, 0, 1, 1], [], []>} : vector<2x8xbf16>, vector<8x512xbf16>, vector<2x512xf32> -> vector<2x512xf32>
    %163 = arith.truncf %158 : vector<2x128xf32> to vector<2x128xbf16>
    %cst_93 = arith.constant dense<0.000000e+00> : vector<2x512xf32>
    %164 = tpu.matmul %163, %9, %cst_93 {dimension_numbers = #tpu.dot_dimension_numbers<[1], [0], [0], [1], [0, 0, 1, 1], [], []>} : vector<2x128xbf16>, vector<128x512xbf16>, vector<2x512xf32> -> vector<2x512xf32>
    %165 = arith.addf %162, %164 : vector<2x512xf32>
    %166 = vector.broadcast %11 : vector<1x512xf32> to vector<2x512xf32>
    %167 = arith.addf %165, %166 : vector<2x512xf32>
    %168 = vector.extract_strided_slice %167 {offsets = [0, 0], sizes = [2, 128], strides = [1, 1]} : vector<2x512xf32> to vector<2x128xf32>
    %cst_94 = arith.constant 5.000000e-01 : f32
    %169 = vector.broadcast %cst_94 : f32 to vector<2x128xf32>
    %170 = arith.mulf %169, %168 : vector<2x128xf32>
    %171 = math.tanh %170 : vector<2x128xf32>
    %cst_95 = arith.constant 1.000000e+00 : f32
    %172 = vector.broadcast %cst_95 : f32 to vector<2x128xf32>
    %173 = arith.addf %171, %172 : vector<2x128xf32>
    %cst_96 = arith.constant 5.000000e-01 : f32
    %174 = vector.broadcast %cst_96 : f32 to vector<2x128xf32>
    %175 = arith.mulf %174, %173 : vector<2x128xf32>
    %176 = vector.extract_strided_slice %167 {offsets = [0, 128], sizes = [2, 128], strides = [1, 1]} : vector<2x512xf32> to vector<2x128xf32>
    %cst_97 = arith.constant 5.000000e-01 : f32
    %177 = vector.broadcast %cst_97 : f32 to vector<2x128xf32>
    %178 = arith.mulf %177, %176 : vector<2x128xf32>
    %179 = math.tanh %178 : vector<2x128xf32>
    %cst_98 = arith.constant 1.000000e+00 : f32
    %180 = vector.broadcast %cst_98 : f32 to vector<2x128xf32>
    %181 = arith.addf %179, %180 : vector<2x128xf32>
    %cst_99 = arith.constant 5.000000e-01 : f32
    %182 = vector.broadcast %cst_99 : f32 to vector<2x128xf32>
    %183 = arith.mulf %182, %181 : vector<2x128xf32>
    %184 = vector.extract_strided_slice %167 {offsets = [0, 256], sizes = [2, 128], strides = [1, 1]} : vector<2x512xf32> to vector<2x128xf32>
    %185 = math.tanh %184 : vector<2x128xf32>
    %186 = vector.extract_strided_slice %167 {offsets = [0, 384], sizes = [2, 128], strides = [1, 1]} : vector<2x512xf32> to vector<2x128xf32>
    %cst_100 = arith.constant 5.000000e-01 : f32
    %187 = vector.broadcast %cst_100 : f32 to vector<2x128xf32>
    %188 = arith.mulf %187, %186 : vector<2x128xf32>
    %189 = math.tanh %188 : vector<2x128xf32>
    %cst_101 = arith.constant 1.000000e+00 : f32
    %190 = vector.broadcast %cst_101 : f32 to vector<2x128xf32>
    %191 = arith.addf %189, %190 : vector<2x128xf32>
    %cst_102 = arith.constant 5.000000e-01 : f32
    %192 = vector.broadcast %cst_102 : f32 to vector<2x128xf32>
    %193 = arith.mulf %192, %191 : vector<2x128xf32>
    %194 = arith.mulf %183, %160 : vector<2x128xf32>
    %195 = arith.mulf %175, %185 : vector<2x128xf32>
    %196 = arith.addf %194, %195 : vector<2x128xf32>
    %197 = math.tanh %196 : vector<2x128xf32>
    %198 = arith.mulf %193, %197 : vector<2x128xf32>
    %c0_103 = arith.constant 0 : index
    %c0_104 = arith.constant 0 : index
    %c0_105 = arith.constant 0 : index
    %199 = vector.load %arg15[%c0_103, %c0_104, %c0_105] : memref<2x2x128xf32, #tpu.memory_space<vmem>>, vector<1x2x128xf32>
    %200 = vector.shape_cast %199 : vector<1x2x128xf32> to vector<2x128xf32>
    %201 = vector.shape_cast %198 : vector<2x128xf32> to vector<1x2x128xf32>
    tpu.vector_store %arg15[%c0_103, %c0_104, %c0_105], %201 {strides = array<i32>} : memref<2x2x128xf32, #tpu.memory_space<vmem>>, vector<1x2x128xf32>,
    %c0_106 = arith.constant 0 : index
    %c0_107 = arith.constant 0 : index
    %c0_108 = arith.constant 0 : index
    %202 = vector.load %arg16[%c0_106, %c0_107, %c0_108] : memref<2x2x128xf32, #tpu.memory_space<vmem>>, vector<1x2x128xf32>
    %203 = vector.shape_cast %202 : vector<1x2x128xf32> to vector<2x128xf32>
    %204 = vector.shape_cast %196 : vector<2x128xf32> to vector<1x2x128xf32>
    tpu.vector_store %arg16[%c0_106, %c0_107, %c0_108], %204 {strides = array<i32>} : memref<2x2x128xf32, #tpu.memory_space<vmem>>, vector<1x2x128xf32>,
    %c1_109 = arith.constant 1 : index
    %c0_110 = arith.constant 0 : index
    %c0_111 = arith.constant 0 : index
    %205 = vector.load %arg15[%c1_109, %c0_110, %c0_111] : memref<2x2x128xf32, #tpu.memory_space<vmem>>, vector<1x2x128xf32>
    %206 = vector.shape_cast %205 : vector<1x2x128xf32> to vector<2x128xf32>
    %c1_112 = arith.constant 1 : index
    %c0_113 = arith.constant 0 : index
    %c0_114 = arith.constant 0 : index
    %207 = vector.load %arg16[%c1_112, %c0_113, %c0_114] : memref<2x2x128xf32, #tpu.memory_space<vmem>>, vector<1x2x128xf32>
    %208 = vector.shape_cast %207 : vector<1x2x128xf32> to vector<2x128xf32>
    %209 = arith.truncf %198 : vector<2x128xf32> to vector<2x128xbf16>
    %cst_115 = arith.constant dense<0.000000e+00> : vector<2x512xf32>
    %210 = tpu.matmul %209, %8, %cst_115 {dimension_numbers = #tpu.dot_dimension_numbers<[1], [0], [0], [1], [0, 0, 1, 1], [], []>} : vector<2x128xbf16>, vector<128x512xbf16>, vector<2x512xf32> -> vector<2x512xf32>
    %211 = arith.truncf %206 : vector<2x128xf32> to vector<2x128xbf16>
    %cst_116 = arith.constant dense<0.000000e+00> : vector<2x512xf32>
    %212 = tpu.matmul %211, %10, %cst_116 {dimension_numbers = #tpu.dot_dimension_numbers<[1], [0], [0], [1], [0, 0, 1, 1], [], []>} : vector<2x128xbf16>, vector<128x512xbf16>, vector<2x512xf32> -> vector<2x512xf32>
    %213 = arith.addf %210, %212 : vector<2x512xf32>
    %214 = vector.broadcast %12 : vector<1x512xf32> to vector<2x512xf32>
    %215 = arith.addf %213, %214 : vector<2x512xf32>
    %216 = vector.extract_strided_slice %215 {offsets = [0, 0], sizes = [2, 128], strides = [1, 1]} : vector<2x512xf32> to vector<2x128xf32>
    %cst_117 = arith.constant 5.000000e-01 : f32
    %217 = vector.broadcast %cst_117 : f32 to vector<2x128xf32>
    %218 = arith.mulf %217, %216 : vector<2x128xf32>
    %219 = math.tanh %218 : vector<2x128xf32>
    %cst_118 = arith.constant 1.000000e+00 : f32
    %220 = vector.broadcast %cst_118 : f32 to vector<2x128xf32>
    %221 = arith.addf %219, %220 : vector<2x128xf32>
    %cst_119 = arith.constant 5.000000e-01 : f32
    %222 = vector.broadcast %cst_119 : f32 to vector<2x128xf32>
    %223 = arith.mulf %222, %221 : vector<2x128xf32>
    %224 = vector.extract_strided_slice %215 {offsets = [0, 128], sizes = [2, 128], strides = [1, 1]} : vector<2x512xf32> to vector<2x128xf32>
    %cst_120 = arith.constant 5.000000e-01 : f32
    %225 = vector.broadcast %cst_120 : f32 to vector<2x128xf32>
    %226 = arith.mulf %225, %224 : vector<2x128xf32>
    %227 = math.tanh %226 : vector<2x128xf32>
    %cst_121 = arith.constant 1.000000e+00 : f32
    %228 = vector.broadcast %cst_121 : f32 to vector<2x128xf32>
    %229 = arith.addf %227, %228 : vector<2x128xf32>
    %cst_122 = arith.constant 5.000000e-01 : f32
    %230 = vector.broadcast %cst_122 : f32 to vector<2x128xf32>
    %231 = arith.mulf %230, %229 : vector<2x128xf32>
    %232 = vector.extract_strided_slice %215 {offsets = [0, 256], sizes = [2, 128], strides = [1, 1]} : vector<2x512xf32> to vector<2x128xf32>
    %233 = math.tanh %232 : vector<2x128xf32>
    %234 = vector.extract_strided_slice %215 {offsets = [0, 384], sizes = [2, 128], strides = [1, 1]} : vector<2x512xf32> to vector<2x128xf32>
    %cst_123 = arith.constant 5.000000e-01 : f32
    %235 = vector.broadcast %cst_123 : f32 to vector<2x128xf32>
    %236 = arith.mulf %235, %234 : vector<2x128xf32>
    %237 = math.tanh %236 : vector<2x128xf32>
    %cst_124 = arith.constant 1.000000e+00 : f32
    %238 = vector.broadcast %cst_124 : f32 to vector<2x128xf32>
    %239 = arith.addf %237, %238 : vector<2x128xf32>
    %cst_125 = arith.constant 5.000000e-01 : f32
    %240 = vector.broadcast %cst_125 : f32 to vector<2x128xf32>
    %241 = arith.mulf %240, %239 : vector<2x128xf32>
    %242 = arith.mulf %231, %208 : vector<2x128xf32>
    %243 = arith.mulf %223, %233 : vector<2x128xf32>
    %244 = arith.addf %242, %243 : vector<2x128xf32>
    %245 = math.tanh %244 : vector<2x128xf32>
    %246 = arith.mulf %241, %245 : vector<2x128xf32>
    %c1_126 = arith.constant 1 : index
    %c0_127 = arith.constant 0 : index
    %c0_128 = arith.constant 0 : index
    %247 = vector.load %arg15[%c1_126, %c0_127, %c0_128] : memref<2x2x128xf32, #tpu.memory_space<vmem>>, vector<1x2x128xf32>
    %248 = vector.shape_cast %247 : vector<1x2x128xf32> to vector<2x128xf32>
    %249 = vector.shape_cast %246 : vector<2x128xf32> to vector<1x2x128xf32>
    tpu.vector_store %arg15[%c1_126, %c0_127, %c0_128], %249 {strides = array<i32>} : memref<2x2x128xf32, #tpu.memory_space<vmem>>, vector<1x2x128xf32>,
    %c1_129 = arith.constant 1 : index
    %c0_130 = arith.constant 0 : index
    %c0_131 = arith.constant 0 : index
    %250 = vector.load %arg16[%c1_129, %c0_130, %c0_131] : memref<2x2x128xf32, #tpu.memory_space<vmem>>, vector<1x2x128xf32>
    %251 = vector.shape_cast %250 : vector<1x2x128xf32> to vector<2x128xf32>
    %252 = vector.shape_cast %244 : vector<2x128xf32> to vector<1x2x128xf32>
    tpu.vector_store %arg16[%c1_129, %c0_130, %c0_131], %252 {strides = array<i32>} : memref<2x2x128xf32, #tpu.memory_space<vmem>>, vector<1x2x128xf32>,
    %c1_132 = arith.constant 1 : index
    %c0_133 = arith.constant 0 : index
    %c0_134 = arith.constant 0 : index
    %253 = vector.load %arg15[%c1_132, %c0_133, %c0_134] : memref<2x2x128xf32, #tpu.memory_space<vmem>>, vector<1x2x128xf32>
    %254 = vector.shape_cast %253 : vector<1x2x128xf32> to vector<2x128xf32>
    %255 = arith.truncf %254 : vector<2x128xf32> to vector<2x128xbf16>
    %cst_135 = arith.constant dense<0.000000e+00> : vector<2x128xf32>
    %256 = tpu.matmul %255, %3, %cst_135 {dimension_numbers = #tpu.dot_dimension_numbers<[1], [0], [0], [1], [0, 0, 1, 1], [], []>} : vector<2x128xbf16>, vector<128x128xbf16>, vector<2x128xf32> -> vector<2x128xf32>
    %257 = vector.broadcast %4 : vector<1x128xf32> to vector<2x128xf32>
    %258 = arith.addf %256, %257 : vector<2x128xf32>
    %cst_136 = arith.constant dense<0xFF800000> : vector<2xf32>
    %259 = vector.multi_reduction <maximumf>, %258, %cst_136 [1] : vector<2x128xf32> to vector<2xf32>
    %260 = vector.shape_cast %259 : vector<2xf32> to vector<2x1xf32>
    %261 = vector.broadcast %260 : vector<2x1xf32> to vector<2x128xf32>
    %262 = arith.subf %258, %261 : vector<2x128xf32>
    %263 = math.exp %262 : vector<2x128xf32>
    %cst_137 = arith.constant dense<0.000000e+00> : vector<2xf32>
    %264 = vector.multi_reduction <add>, %263, %cst_137 [1] : vector<2x128xf32> to vector<2xf32>
    %265 = vector.shape_cast %264 : vector<2xf32> to vector<2x1xf32>
    %266 = tpu.reciprocal %265 {approx = true} : vector<2x1xf32> -> vector<2x1xf32>
    %267 = vector.broadcast %266 : vector<2x1xf32> to vector<2x128xf32>
    %268 = arith.mulf %263, %267 : vector<2x128xf32>
    %269 = vector.extract_strided_slice %268 {offsets = [0, 0], sizes = [2, 49], strides = [1, 1]} : vector<2x128xf32> to vector<2x49xf32>
    %c2 = arith.constant 2 : index
    %c0_138 = arith.constant 0 : index
    %c0_139 = arith.constant 0 : index
    %c0_140 = arith.constant 0 : index
    %270 = vector.load %arg2[%c2, %c0_138, %c0_139, %c0_140] : memref<4x2x49x8xbf16, #tpu.memory_space<vmem>>, vector<1x2x49x8xbf16>
    %271 = vector.shape_cast %270 : vector<1x2x49x8xbf16> to vector<2x49x8xbf16>
    %272 = arith.extf %271 : vector<2x49x8xbf16> to vector<2x49x8xf32>
    %273 = vector.shape_cast %269 : vector<2x49xf32> to vector<2x49x1xf32>
    %274 = vector.broadcast %273 : vector<2x49x1xf32> to vector<2x49x8xf32>
    %275 = arith.mulf %274, %272 : vector<2x49x8xf32>
    %cst_141 = arith.constant dense<0.000000e+00> : vector<2x8xf32>
    %276 = vector.multi_reduction <add>, %275, %cst_141 [1] : vector<2x49x8xf32> to vector<2x8xf32>
    %c0_142 = arith.constant 0 : index
    %c0_143 = arith.constant 0 : index
    %c0_144 = arith.constant 0 : index
    %277 = vector.load %arg15[%c0_142, %c0_143, %c0_144] : memref<2x2x128xf32, #tpu.memory_space<vmem>>, vector<1x2x128xf32>
    %278 = vector.shape_cast %277 : vector<1x2x128xf32> to vector<2x128xf32>
    %c0_145 = arith.constant 0 : index
    %c0_146 = arith.constant 0 : index
    %c0_147 = arith.constant 0 : index
    %279 = vector.load %arg16[%c0_145, %c0_146, %c0_147] : memref<2x2x128xf32, #tpu.memory_space<vmem>>, vector<1x2x128xf32>
    %280 = vector.shape_cast %279 : vector<1x2x128xf32> to vector<2x128xf32>
    %281 = arith.truncf %276 : vector<2x8xf32> to vector<2x8xbf16>
    %cst_148 = arith.constant dense<0.000000e+00> : vector<2x512xf32>
    %282 = tpu.matmul %281, %7, %cst_148 {dimension_numbers = #tpu.dot_dimension_numbers<[1], [0], [0], [1], [0, 0, 1, 1], [], []>} : vector<2x8xbf16>, vector<8x512xbf16>, vector<2x512xf32> -> vector<2x512xf32>
    %283 = arith.truncf %278 : vector<2x128xf32> to vector<2x128xbf16>
    %cst_149 = arith.constant dense<0.000000e+00> : vector<2x512xf32>
    %284 = tpu.matmul %283, %9, %cst_149 {dimension_numbers = #tpu.dot_dimension_numbers<[1], [0], [0], [1], [0, 0, 1, 1], [], []>} : vector<2x128xbf16>, vector<128x512xbf16>, vector<2x512xf32> -> vector<2x512xf32>
    %285 = arith.addf %282, %284 : vector<2x512xf32>
    %286 = vector.broadcast %11 : vector<1x512xf32> to vector<2x512xf32>
    %287 = arith.addf %285, %286 : vector<2x512xf32>
    %288 = vector.extract_strided_slice %287 {offsets = [0, 0], sizes = [2, 128], strides = [1, 1]} : vector<2x512xf32> to vector<2x128xf32>
    %cst_150 = arith.constant 5.000000e-01 : f32
    %289 = vector.broadcast %cst_150 : f32 to vector<2x128xf32>
    %290 = arith.mulf %289, %288 : vector<2x128xf32>
    %291 = math.tanh %290 : vector<2x128xf32>
    %cst_151 = arith.constant 1.000000e+00 : f32
    %292 = vector.broadcast %cst_151 : f32 to vector<2x128xf32>
    %293 = arith.addf %291, %292 : vector<2x128xf32>
    %cst_152 = arith.constant 5.000000e-01 : f32
    %294 = vector.broadcast %cst_152 : f32 to vector<2x128xf32>
    %295 = arith.mulf %294, %293 : vector<2x128xf32>
    %296 = vector.extract_strided_slice %287 {offsets = [0, 128], sizes = [2, 128], strides = [1, 1]} : vector<2x512xf32> to vector<2x128xf32>
    %cst_153 = arith.constant 5.000000e-01 : f32
    %297 = vector.broadcast %cst_153 : f32 to vector<2x128xf32>
    %298 = arith.mulf %297, %296 : vector<2x128xf32>
    %299 = math.tanh %298 : vector<2x128xf32>
    %cst_154 = arith.constant 1.000000e+00 : f32
    %300 = vector.broadcast %cst_154 : f32 to vector<2x128xf32>
    %301 = arith.addf %299, %300 : vector<2x128xf32>
    %cst_155 = arith.constant 5.000000e-01 : f32
    %302 = vector.broadcast %cst_155 : f32 to vector<2x128xf32>
    %303 = arith.mulf %302, %301 : vector<2x128xf32>
    %304 = vector.extract_strided_slice %287 {offsets = [0, 256], sizes = [2, 128], strides = [1, 1]} : vector<2x512xf32> to vector<2x128xf32>
    %305 = math.tanh %304 : vector<2x128xf32>
    %306 = vector.extract_strided_slice %287 {offsets = [0, 384], sizes = [2, 128], strides = [1, 1]} : vector<2x512xf32> to vector<2x128xf32>
    %cst_156 = arith.constant 5.000000e-01 : f32
    %307 = vector.broadcast %cst_156 : f32 to vector<2x128xf32>
    %308 = arith.mulf %307, %306 : vector<2x128xf32>
    %309 = math.tanh %308 : vector<2x128xf32>
    %cst_157 = arith.constant 1.000000e+00 : f32
    %310 = vector.broadcast %cst_157 : f32 to vector<2x128xf32>
    %311 = arith.addf %309, %310 : vector<2x128xf32>
    %cst_158 = arith.constant 5.000000e-01 : f32
    %312 = vector.broadcast %cst_158 : f32 to vector<2x128xf32>
    %313 = arith.mulf %312, %311 : vector<2x128xf32>
    %314 = arith.mulf %303, %280 : vector<2x128xf32>
    %315 = arith.mulf %295, %305 : vector<2x128xf32>
    %316 = arith.addf %314, %315 : vector<2x128xf32>
    %317 = math.tanh %316 : vector<2x128xf32>
    %318 = arith.mulf %313, %317 : vector<2x128xf32>
    %c0_159 = arith.constant 0 : index
    %c0_160 = arith.constant 0 : index
    %c0_161 = arith.constant 0 : index
    %319 = vector.load %arg15[%c0_159, %c0_160, %c0_161] : memref<2x2x128xf32, #tpu.memory_space<vmem>>, vector<1x2x128xf32>
    %320 = vector.shape_cast %319 : vector<1x2x128xf32> to vector<2x128xf32>
    %321 = vector.shape_cast %318 : vector<2x128xf32> to vector<1x2x128xf32>
    tpu.vector_store %arg15[%c0_159, %c0_160, %c0_161], %321 {strides = array<i32>} : memref<2x2x128xf32, #tpu.memory_space<vmem>>, vector<1x2x128xf32>,
    %c0_162 = arith.constant 0 : index
    %c0_163 = arith.constant 0 : index
    %c0_164 = arith.constant 0 : index
    %322 = vector.load %arg16[%c0_162, %c0_163, %c0_164] : memref<2x2x128xf32, #tpu.memory_space<vmem>>, vector<1x2x128xf32>
    %323 = vector.shape_cast %322 : vector<1x2x128xf32> to vector<2x128xf32>
    %324 = vector.shape_cast %316 : vector<2x128xf32> to vector<1x2x128xf32>
    tpu.vector_store %arg16[%c0_162, %c0_163, %c0_164], %324 {strides = array<i32>} : memref<2x2x128xf32, #tpu.memory_space<vmem>>, vector<1x2x128xf32>,
    %c1_165 = arith.constant 1 : index
    %c0_166 = arith.constant 0 : index
    %c0_167 = arith.constant 0 : index
    %325 = vector.load %arg15[%c1_165, %c0_166, %c0_167] : memref<2x2x128xf32, #tpu.memory_space<vmem>>, vector<1x2x128xf32>
    %326 = vector.shape_cast %325 : vector<1x2x128xf32> to vector<2x128xf32>
    %c1_168 = arith.constant 1 : index
    %c0_169 = arith.constant 0 : index
    %c0_170 = arith.constant 0 : index
    %327 = vector.load %arg16[%c1_168, %c0_169, %c0_170] : memref<2x2x128xf32, #tpu.memory_space<vmem>>, vector<1x2x128xf32>
    %328 = vector.shape_cast %327 : vector<1x2x128xf32> to vector<2x128xf32>
    %329 = arith.truncf %318 : vector<2x128xf32> to vector<2x128xbf16>
    %cst_171 = arith.constant dense<0.000000e+00> : vector<2x512xf32>
    %330 = tpu.matmul %329, %8, %cst_171 {dimension_numbers = #tpu.dot_dimension_numbers<[1], [0], [0], [1], [0, 0, 1, 1], [], []>} : vector<2x128xbf16>, vector<128x512xbf16>, vector<2x512xf32> -> vector<2x512xf32>
    %331 = arith.truncf %326 : vector<2x128xf32> to vector<2x128xbf16>
    %cst_172 = arith.constant dense<0.000000e+00> : vector<2x512xf32>
    %332 = tpu.matmul %331, %10, %cst_172 {dimension_numbers = #tpu.dot_dimension_numbers<[1], [0], [0], [1], [0, 0, 1, 1], [], []>} : vector<2x128xbf16>, vector<128x512xbf16>, vector<2x512xf32> -> vector<2x512xf32>
    %333 = arith.addf %330, %332 : vector<2x512xf32>
    %334 = vector.broadcast %12 : vector<1x512xf32> to vector<2x512xf32>
    %335 = arith.addf %333, %334 : vector<2x512xf32>
    %336 = vector.extract_strided_slice %335 {offsets = [0, 0], sizes = [2, 128], strides = [1, 1]} : vector<2x512xf32> to vector<2x128xf32>
    %cst_173 = arith.constant 5.000000e-01 : f32
    %337 = vector.broadcast %cst_173 : f32 to vector<2x128xf32>
    %338 = arith.mulf %337, %336 : vector<2x128xf32>
    %339 = math.tanh %338 : vector<2x128xf32>
    %cst_174 = arith.constant 1.000000e+00 : f32
    %340 = vector.broadcast %cst_174 : f32 to vector<2x128xf32>
    %341 = arith.addf %339, %340 : vector<2x128xf32>
    %cst_175 = arith.constant 5.000000e-01 : f32
    %342 = vector.broadcast %cst_175 : f32 to vector<2x128xf32>
    %343 = arith.mulf %342, %341 : vector<2x128xf32>
    %344 = vector.extract_strided_slice %335 {offsets = [0, 128], sizes = [2, 128], strides = [1, 1]} : vector<2x512xf32> to vector<2x128xf32>
    %cst_176 = arith.constant 5.000000e-01 : f32
    %345 = vector.broadcast %cst_176 : f32 to vector<2x128xf32>
    %346 = arith.mulf %345, %344 : vector<2x128xf32>
    %347 = math.tanh %346 : vector<2x128xf32>
    %cst_177 = arith.constant 1.000000e+00 : f32
    %348 = vector.broadcast %cst_177 : f32 to vector<2x128xf32>
    %349 = arith.addf %347, %348 : vector<2x128xf32>
    %cst_178 = arith.constant 5.000000e-01 : f32
    %350 = vector.broadcast %cst_178 : f32 to vector<2x128xf32>
    %351 = arith.mulf %350, %349 : vector<2x128xf32>
    %352 = vector.extract_strided_slice %335 {offsets = [0, 256], sizes = [2, 128], strides = [1, 1]} : vector<2x512xf32> to vector<2x128xf32>
    %353 = math.tanh %352 : vector<2x128xf32>
    %354 = vector.extract_strided_slice %335 {offsets = [0, 384], sizes = [2, 128], strides = [1, 1]} : vector<2x512xf32> to vector<2x128xf32>
    %cst_179 = arith.constant 5.000000e-01 : f32
    %355 = vector.broadcast %cst_179 : f32 to vector<2x128xf32>
    %356 = arith.mulf %355, %354 : vector<2x128xf32>
    %357 = math.tanh %356 : vector<2x128xf32>
    %cst_180 = arith.constant 1.000000e+00 : f32
    %358 = vector.broadcast %cst_180 : f32 to vector<2x128xf32>
    %359 = arith.addf %357, %358 : vector<2x128xf32>
    %cst_181 = arith.constant 5.000000e-01 : f32
    %360 = vector.broadcast %cst_181 : f32 to vector<2x128xf32>
    %361 = arith.mulf %360, %359 : vector<2x128xf32>
    %362 = arith.mulf %351, %328 : vector<2x128xf32>
    %363 = arith.mulf %343, %353 : vector<2x128xf32>
    %364 = arith.addf %362, %363 : vector<2x128xf32>
    %365 = math.tanh %364 : vector<2x128xf32>
    %366 = arith.mulf %361, %365 : vector<2x128xf32>
    %c1_182 = arith.constant 1 : index
    %c0_183 = arith.constant 0 : index
    %c0_184 = arith.constant 0 : index
    %367 = vector.load %arg15[%c1_182, %c0_183, %c0_184] : memref<2x2x128xf32, #tpu.memory_space<vmem>>, vector<1x2x128xf32>
    %368 = vector.shape_cast %367 : vector<1x2x128xf32> to vector<2x128xf32>
    %369 = vector.shape_cast %366 : vector<2x128xf32> to vector<1x2x128xf32>
    tpu.vector_store %arg15[%c1_182, %c0_183, %c0_184], %369 {strides = array<i32>} : memref<2x2x128xf32, #tpu.memory_space<vmem>>, vector<1x2x128xf32>,
    %c1_185 = arith.constant 1 : index
    %c0_186 = arith.constant 0 : index
    %c0_187 = arith.constant 0 : index
    %370 = vector.load %arg16[%c1_185, %c0_186, %c0_187] : memref<2x2x128xf32, #tpu.memory_space<vmem>>, vector<1x2x128xf32>
    %371 = vector.shape_cast %370 : vector<1x2x128xf32> to vector<2x128xf32>
    %372 = vector.shape_cast %364 : vector<2x128xf32> to vector<1x2x128xf32>
    tpu.vector_store %arg16[%c1_185, %c0_186, %c0_187], %372 {strides = array<i32>} : memref<2x2x128xf32, #tpu.memory_space<vmem>>, vector<1x2x128xf32>,
    %c1_188 = arith.constant 1 : index
    %c0_189 = arith.constant 0 : index
    %c0_190 = arith.constant 0 : index
    %373 = vector.load %arg15[%c1_188, %c0_189, %c0_190] : memref<2x2x128xf32, #tpu.memory_space<vmem>>, vector<1x2x128xf32>
    %374 = vector.shape_cast %373 : vector<1x2x128xf32> to vector<2x128xf32>
    %375 = arith.truncf %374 : vector<2x128xf32> to vector<2x128xbf16>
    %cst_191 = arith.constant dense<0.000000e+00> : vector<2x128xf32>
    %376 = tpu.matmul %375, %3, %cst_191 {dimension_numbers = #tpu.dot_dimension_numbers<[1], [0], [0], [1], [0, 0, 1, 1], [], []>} : vector<2x128xbf16>, vector<128x128xbf16>, vector<2x128xf32> -> vector<2x128xf32>
    %377 = vector.broadcast %4 : vector<1x128xf32> to vector<2x128xf32>
    %378 = arith.addf %376, %377 : vector<2x128xf32>
    %cst_192 = arith.constant dense<0xFF800000> : vector<2xf32>
    %379 = vector.multi_reduction <maximumf>, %378, %cst_192 [1] : vector<2x128xf32> to vector<2xf32>
    %380 = vector.shape_cast %379 : vector<2xf32> to vector<2x1xf32>
    %381 = vector.broadcast %380 : vector<2x1xf32> to vector<2x128xf32>
    %382 = arith.subf %378, %381 : vector<2x128xf32>
    %383 = math.exp %382 : vector<2x128xf32>
    %cst_193 = arith.constant dense<0.000000e+00> : vector<2xf32>
    %384 = vector.multi_reduction <add>, %383, %cst_193 [1] : vector<2x128xf32> to vector<2xf32>
    %385 = vector.shape_cast %384 : vector<2xf32> to vector<2x1xf32>
    %386 = tpu.reciprocal %385 {approx = true} : vector<2x1xf32> -> vector<2x1xf32>
    %387 = vector.broadcast %386 : vector<2x1xf32> to vector<2x128xf32>
    %388 = arith.mulf %383, %387 : vector<2x128xf32>
    %389 = vector.extract_strided_slice %388 {offsets = [0, 0], sizes = [2, 49], strides = [1, 1]} : vector<2x128xf32> to vector<2x49xf32>
    %c3 = arith.constant 3 : index
    %c0_194 = arith.constant 0 : index
    %c0_195 = arith.constant 0 : index
    %c0_196 = arith.constant 0 : index
    %390 = vector.load %arg2[%c3, %c0_194, %c0_195, %c0_196] : memref<4x2x49x8xbf16, #tpu.memory_space<vmem>>, vector<1x2x49x8xbf16>
    %391 = vector.shape_cast %390 : vector<1x2x49x8xbf16> to vector<2x49x8xbf16>
    %392 = arith.extf %391 : vector<2x49x8xbf16> to vector<2x49x8xf32>
    %393 = vector.shape_cast %389 : vector<2x49xf32> to vector<2x49x1xf32>
    %394 = vector.broadcast %393 : vector<2x49x1xf32> to vector<2x49x8xf32>
    %395 = arith.mulf %394, %392 : vector<2x49x8xf32>
    %cst_197 = arith.constant dense<0.000000e+00> : vector<2x8xf32>
    %396 = vector.multi_reduction <add>, %395, %cst_197 [1] : vector<2x49x8xf32> to vector<2x8xf32>
    %c0_198 = arith.constant 0 : index
    %c0_199 = arith.constant 0 : index
    %c0_200 = arith.constant 0 : index
    %397 = vector.load %arg15[%c0_198, %c0_199, %c0_200] : memref<2x2x128xf32, #tpu.memory_space<vmem>>, vector<1x2x128xf32>
    %398 = vector.shape_cast %397 : vector<1x2x128xf32> to vector<2x128xf32>
    %c0_201 = arith.constant 0 : index
    %c0_202 = arith.constant 0 : index
    %c0_203 = arith.constant 0 : index
    %399 = vector.load %arg16[%c0_201, %c0_202, %c0_203] : memref<2x2x128xf32, #tpu.memory_space<vmem>>, vector<1x2x128xf32>
    %400 = vector.shape_cast %399 : vector<1x2x128xf32> to vector<2x128xf32>
    %401 = arith.truncf %396 : vector<2x8xf32> to vector<2x8xbf16>
    %cst_204 = arith.constant dense<0.000000e+00> : vector<2x512xf32>
    %402 = tpu.matmul %401, %7, %cst_204 {dimension_numbers = #tpu.dot_dimension_numbers<[1], [0], [0], [1], [0, 0, 1, 1], [], []>} : vector<2x8xbf16>, vector<8x512xbf16>, vector<2x512xf32> -> vector<2x512xf32>
    %403 = arith.truncf %398 : vector<2x128xf32> to vector<2x128xbf16>
    %cst_205 = arith.constant dense<0.000000e+00> : vector<2x512xf32>
    %404 = tpu.matmul %403, %9, %cst_205 {dimension_numbers = #tpu.dot_dimension_numbers<[1], [0], [0], [1], [0, 0, 1, 1], [], []>} : vector<2x128xbf16>, vector<128x512xbf16>, vector<2x512xf32> -> vector<2x512xf32>
    %405 = arith.addf %402, %404 : vector<2x512xf32>
    %406 = vector.broadcast %11 : vector<1x512xf32> to vector<2x512xf32>
    %407 = arith.addf %405, %406 : vector<2x512xf32>
    %408 = vector.extract_strided_slice %407 {offsets = [0, 0], sizes = [2, 128], strides = [1, 1]} : vector<2x512xf32> to vector<2x128xf32>
    %cst_206 = arith.constant 5.000000e-01 : f32
    %409 = vector.broadcast %cst_206 : f32 to vector<2x128xf32>
    %410 = arith.mulf %409, %408 : vector<2x128xf32>
    %411 = math.tanh %410 : vector<2x128xf32>
    %cst_207 = arith.constant 1.000000e+00 : f32
    %412 = vector.broadcast %cst_207 : f32 to vector<2x128xf32>
    %413 = arith.addf %411, %412 : vector<2x128xf32>
    %cst_208 = arith.constant 5.000000e-01 : f32
    %414 = vector.broadcast %cst_208 : f32 to vector<2x128xf32>
    %415 = arith.mulf %414, %413 : vector<2x128xf32>
    %416 = vector.extract_strided_slice %407 {offsets = [0, 128], sizes = [2, 128], strides = [1, 1]} : vector<2x512xf32> to vector<2x128xf32>
    %cst_209 = arith.constant 5.000000e-01 : f32
    %417 = vector.broadcast %cst_209 : f32 to vector<2x128xf32>
    %418 = arith.mulf %417, %416 : vector<2x128xf32>
    %419 = math.tanh %418 : vector<2x128xf32>
    %cst_210 = arith.constant 1.000000e+00 : f32
    %420 = vector.broadcast %cst_210 : f32 to vector<2x128xf32>
    %421 = arith.addf %419, %420 : vector<2x128xf32>
    %cst_211 = arith.constant 5.000000e-01 : f32
    %422 = vector.broadcast %cst_211 : f32 to vector<2x128xf32>
    %423 = arith.mulf %422, %421 : vector<2x128xf32>
    %424 = vector.extract_strided_slice %407 {offsets = [0, 256], sizes = [2, 128], strides = [1, 1]} : vector<2x512xf32> to vector<2x128xf32>
    %425 = math.tanh %424 : vector<2x128xf32>
    %426 = vector.extract_strided_slice %407 {offsets = [0, 384], sizes = [2, 128], strides = [1, 1]} : vector<2x512xf32> to vector<2x128xf32>
    %cst_212 = arith.constant 5.000000e-01 : f32
    %427 = vector.broadcast %cst_212 : f32 to vector<2x128xf32>
    %428 = arith.mulf %427, %426 : vector<2x128xf32>
    %429 = math.tanh %428 : vector<2x128xf32>
    %cst_213 = arith.constant 1.000000e+00 : f32
    %430 = vector.broadcast %cst_213 : f32 to vector<2x128xf32>
    %431 = arith.addf %429, %430 : vector<2x128xf32>
    %cst_214 = arith.constant 5.000000e-01 : f32
    %432 = vector.broadcast %cst_214 : f32 to vector<2x128xf32>
    %433 = arith.mulf %432, %431 : vector<2x128xf32>
    %434 = arith.mulf %423, %400 : vector<2x128xf32>
    %435 = arith.mulf %415, %425 : vector<2x128xf32>
    %436 = arith.addf %434, %435 : vector<2x128xf32>
    %437 = math.tanh %436 : vector<2x128xf32>
    %438 = arith.mulf %433, %437 : vector<2x128xf32>
    %c0_215 = arith.constant 0 : index
    %c0_216 = arith.constant 0 : index
    %c0_217 = arith.constant 0 : index
    %439 = vector.load %arg15[%c0_215, %c0_216, %c0_217] : memref<2x2x128xf32, #tpu.memory_space<vmem>>, vector<1x2x128xf32>
    %440 = vector.shape_cast %439 : vector<1x2x128xf32> to vector<2x128xf32>
    %441 = vector.shape_cast %438 : vector<2x128xf32> to vector<1x2x128xf32>
    tpu.vector_store %arg15[%c0_215, %c0_216, %c0_217], %441 {strides = array<i32>} : memref<2x2x128xf32, #tpu.memory_space<vmem>>, vector<1x2x128xf32>,
    %c0_218 = arith.constant 0 : index
    %c0_219 = arith.constant 0 : index
    %c0_220 = arith.constant 0 : index
    %442 = vector.load %arg16[%c0_218, %c0_219, %c0_220] : memref<2x2x128xf32, #tpu.memory_space<vmem>>, vector<1x2x128xf32>
    %443 = vector.shape_cast %442 : vector<1x2x128xf32> to vector<2x128xf32>
    %444 = vector.shape_cast %436 : vector<2x128xf32> to vector<1x2x128xf32>
    tpu.vector_store %arg16[%c0_218, %c0_219, %c0_220], %444 {strides = array<i32>} : memref<2x2x128xf32, #tpu.memory_space<vmem>>, vector<1x2x128xf32>,
    %c1_221 = arith.constant 1 : index
    %c0_222 = arith.constant 0 : index
    %c0_223 = arith.constant 0 : index
    %445 = vector.load %arg15[%c1_221, %c0_222, %c0_223] : memref<2x2x128xf32, #tpu.memory_space<vmem>>, vector<1x2x128xf32>
    %446 = vector.shape_cast %445 : vector<1x2x128xf32> to vector<2x128xf32>
    %c1_224 = arith.constant 1 : index
    %c0_225 = arith.constant 0 : index
    %c0_226 = arith.constant 0 : index
    %447 = vector.load %arg16[%c1_224, %c0_225, %c0_226] : memref<2x2x128xf32, #tpu.memory_space<vmem>>, vector<1x2x128xf32>
    %448 = vector.shape_cast %447 : vector<1x2x128xf32> to vector<2x128xf32>
    %449 = arith.truncf %438 : vector<2x128xf32> to vector<2x128xbf16>
    %cst_227 = arith.constant dense<0.000000e+00> : vector<2x512xf32>
    %450 = tpu.matmul %449, %8, %cst_227 {dimension_numbers = #tpu.dot_dimension_numbers<[1], [0], [0], [1], [0, 0, 1, 1], [], []>} : vector<2x128xbf16>, vector<128x512xbf16>, vector<2x512xf32> -> vector<2x512xf32>
    %451 = arith.truncf %446 : vector<2x128xf32> to vector<2x128xbf16>
    %cst_228 = arith.constant dense<0.000000e+00> : vector<2x512xf32>
    %452 = tpu.matmul %451, %10, %cst_228 {dimension_numbers = #tpu.dot_dimension_numbers<[1], [0], [0], [1], [0, 0, 1, 1], [], []>} : vector<2x128xbf16>, vector<128x512xbf16>, vector<2x512xf32> -> vector<2x512xf32>
    %453 = arith.addf %450, %452 : vector<2x512xf32>
    %454 = vector.broadcast %12 : vector<1x512xf32> to vector<2x512xf32>
    %455 = arith.addf %453, %454 : vector<2x512xf32>
    %456 = vector.extract_strided_slice %455 {offsets = [0, 0], sizes = [2, 128], strides = [1, 1]} : vector<2x512xf32> to vector<2x128xf32>
    %cst_229 = arith.constant 5.000000e-01 : f32
    %457 = vector.broadcast %cst_229 : f32 to vector<2x128xf32>
    %458 = arith.mulf %457, %456 : vector<2x128xf32>
    %459 = math.tanh %458 : vector<2x128xf32>
    %cst_230 = arith.constant 1.000000e+00 : f32
    %460 = vector.broadcast %cst_230 : f32 to vector<2x128xf32>
    %461 = arith.addf %459, %460 : vector<2x128xf32>
    %cst_231 = arith.constant 5.000000e-01 : f32
    %462 = vector.broadcast %cst_231 : f32 to vector<2x128xf32>
    %463 = arith.mulf %462, %461 : vector<2x128xf32>
    %464 = vector.extract_strided_slice %455 {offsets = [0, 128], sizes = [2, 128], strides = [1, 1]} : vector<2x512xf32> to vector<2x128xf32>
    %cst_232 = arith.constant 5.000000e-01 : f32
    %465 = vector.broadcast %cst_232 : f32 to vector<2x128xf32>
    %466 = arith.mulf %465, %464 : vector<2x128xf32>
    %467 = math.tanh %466 : vector<2x128xf32>
    %cst_233 = arith.constant 1.000000e+00 : f32
    %468 = vector.broadcast %cst_233 : f32 to vector<2x128xf32>
    %469 = arith.addf %467, %468 : vector<2x128xf32>
    %cst_234 = arith.constant 5.000000e-01 : f32
    %470 = vector.broadcast %cst_234 : f32 to vector<2x128xf32>
    %471 = arith.mulf %470, %469 : vector<2x128xf32>
    %472 = vector.extract_strided_slice %455 {offsets = [0, 256], sizes = [2, 128], strides = [1, 1]} : vector<2x512xf32> to vector<2x128xf32>
    %473 = math.tanh %472 : vector<2x128xf32>
    %474 = vector.extract_strided_slice %455 {offsets = [0, 384], sizes = [2, 128], strides = [1, 1]} : vector<2x512xf32> to vector<2x128xf32>
    %cst_235 = arith.constant 5.000000e-01 : f32
    %475 = vector.broadcast %cst_235 : f32 to vector<2x128xf32>
    %476 = arith.mulf %475, %474 : vector<2x128xf32>
    %477 = math.tanh %476 : vector<2x128xf32>
    %cst_236 = arith.constant 1.000000e+00 : f32
    %478 = vector.broadcast %cst_236 : f32 to vector<2x128xf32>
    %479 = arith.addf %477, %478 : vector<2x128xf32>
    %cst_237 = arith.constant 5.000000e-01 : f32
    %480 = vector.broadcast %cst_237 : f32 to vector<2x128xf32>
    %481 = arith.mulf %480, %479 : vector<2x128xf32>
    %482 = arith.mulf %471, %448 : vector<2x128xf32>
    %483 = arith.mulf %463, %473 : vector<2x128xf32>
    %484 = arith.addf %482, %483 : vector<2x128xf32>
    %485 = math.tanh %484 : vector<2x128xf32>
    %486 = arith.mulf %481, %485 : vector<2x128xf32>
    %c1_238 = arith.constant 1 : index
    %c0_239 = arith.constant 0 : index
    %c0_240 = arith.constant 0 : index
    %487 = vector.load %arg15[%c1_238, %c0_239, %c0_240] : memref<2x2x128xf32, #tpu.memory_space<vmem>>, vector<1x2x128xf32>
    %488 = vector.shape_cast %487 : vector<1x2x128xf32> to vector<2x128xf32>
    %489 = vector.shape_cast %486 : vector<2x128xf32> to vector<1x2x128xf32>
    tpu.vector_store %arg15[%c1_238, %c0_239, %c0_240], %489 {strides = array<i32>} : memref<2x2x128xf32, #tpu.memory_space<vmem>>, vector<1x2x128xf32>,
    %c1_241 = arith.constant 1 : index
    %c0_242 = arith.constant 0 : index
    %c0_243 = arith.constant 0 : index
    %490 = vector.load %arg16[%c1_241, %c0_242, %c0_243] : memref<2x2x128xf32, #tpu.memory_space<vmem>>, vector<1x2x128xf32>
    %491 = vector.shape_cast %490 : vector<1x2x128xf32> to vector<2x128xf32>
    %492 = vector.shape_cast %484 : vector<2x128xf32> to vector<1x2x128xf32>
    tpu.vector_store %arg16[%c1_241, %c0_242, %c0_243], %492 {strides = array<i32>} : memref<2x2x128xf32, #tpu.memory_space<vmem>>, vector<1x2x128xf32>,
    %493 = vector.shape_cast %36 : vector<2x8xf32> to vector<1x2x8xf32>
    %494 = vector.shape_cast %156 : vector<2x8xf32> to vector<1x2x8xf32>
    %495 = vector.shape_cast %276 : vector<2x8xf32> to vector<1x2x8xf32>
    %496 = vector.shape_cast %396 : vector<2x8xf32> to vector<1x2x8xf32>
    %497 = tpu.concatenate %493, %494, %495, %496 in 0 : vector<1x2x8xf32>, vector<1x2x8xf32>, vector<1x2x8xf32>, vector<1x2x8xf32> -> vector<4x2x8xf32>
    %c0_244 = arith.constant 0 : index
    %c0_245 = arith.constant 0 : index
    %c0_246 = arith.constant 0 : index
    %498 = vector.load %arg13[%c0_244, %c0_245, %c0_246] : memref<4x2x8xf32, #tpu.memory_space<vmem>>, vector<4x2x8xf32>
    tpu.vector_store %arg13[%c0_244, %c0_245, %c0_246], %497 {strides = array<i32>} : memref<4x2x8xf32, #tpu.memory_space<vmem>>, vector<4x2x8xf32>,
    %499 = tpu.concatenate %126, %246, %366, %486 in 0 : vector<2x128xf32>, vector<2x128xf32>, vector<2x128xf32>, vector<2x128xf32> -> vector<8x128xf32>
    %500 = arith.truncf %499 : vector<8x128xf32> to vector<8x128xbf16>
    %cst_247 = arith.constant dense<0.000000e+00> : vector<8x128xf32>
    %501 = tpu.matmul %500, %5, %cst_247 {dimension_numbers = #tpu.dot_dimension_numbers<[1], [0], [0], [1], [0, 0, 1, 1], [], []>} : vector<8x128xbf16>, vector<128x128xbf16>, vector<8x128xf32> -> vector<8x128xf32>
    %502 = vector.broadcast %6 : vector<1x128xf32> to vector<8x128xf32>
    %503 = arith.addf %501, %502 : vector<8x128xf32>
    %504 = vector.shape_cast %503 : vector<8x128xf32> to vector<4x2x128xf32>
    %c0_248 = arith.constant 0 : index
    %c0_249 = arith.constant 0 : index
    %c0_250 = arith.constant 0 : index
    %505 = vector.load %arg14[%c0_248, %c0_249, %c0_250] : memref<4x2x128xf32, #tpu.memory_space<vmem>>, vector<4x2x128xf32>
    tpu.vector_store %arg14[%c0_248, %c0_249, %c0_250], %504 {strides = array<i32>} : memref<4x2x128xf32, #tpu.memory_space<vmem>>, vector<4x2x128xf32>,
    return
  }
  func.func @transform_0(%arg0: i32, %arg1: i32) -> (i32, i32, i32, i32) {
    %c0_i32 = arith.constant 0 : i32
    %c0_i32_0 = arith.constant 0 : i32
    %c0_i32_1 = arith.constant 0 : i32
    return %arg1, %arg0, %c0_i32, %c0_i32_0 : i32, i32, i32, i32
  }
  func.func @transform_1(%arg0: i32, %arg1: i32) -> (i32, i32) {
    %c0_i32 = arith.constant 0 : i32
    %c0_i32_0 = arith.constant 0 : i32
    %c0_i32_1 = arith.constant 0 : i32
    return %c0_i32, %c0_i32_0 : i32, i32
  }
  func.func @transform_2(%arg0: i32, %arg1: i32) -> (i32, i32) {
    %c0_i32 = arith.constant 0 : i32
    %c0_i32_0 = arith.constant 0 : i32
    %c0_i32_1 = arith.constant 0 : i32
    return %c0_i32, %c0_i32_0 : i32, i32
  }
  func.func @transform_3(%arg0: i32, %arg1: i32) -> (i32, i32) {
    %c0_i32 = arith.constant 0 : i32
    %c0_i32_0 = arith.constant 0 : i32
    %c0_i32_1 = arith.constant 0 : i32
    return %c0_i32, %c0_i32_0 : i32, i32
  }
  func.func @transform_4(%arg0: i32, %arg1: i32) -> (i32, i32) {
    %c0_i32 = arith.constant 0 : i32
    %c0_i32_0 = arith.constant 0 : i32
    %c0_i32_1 = arith.constant 0 : i32
    return %c0_i32, %c0_i32_0 : i32, i32
  }
  func.func @transform_5(%arg0: i32, %arg1: i32) -> (i32, i32) {
    %c0_i32 = arith.constant 0 : i32
    %c0_i32_0 = arith.constant 0 : i32
    %c0_i32_1 = arith.constant 0 : i32
    return %c0_i32, %c0_i32_0 : i32, i32
  }
  func.func @transform_6(%arg0: i32, %arg1: i32) -> (i32, i32) {
    %c0_i32 = arith.constant 0 : i32
    %c0_i32_0 = arith.constant 0 : i32
    %c0_i32_1 = arith.constant 0 : i32
    return %c0_i32, %c0_i32_0 : i32, i32
  }
  func.func @transform_7(%arg0: i32, %arg1: i32) -> (i32, i32) {
    %c0_i32 = arith.constant 0 : i32
    %c0_i32_0 = arith.constant 0 : i32
    %c0_i32_1 = arith.constant 0 : i32
    return %c0_i32, %c0_i32_0 : i32, i32
  }
  func.func @transform_8(%arg0: i32, %arg1: i32) -> (i32, i32) {
    %c0_i32 = arith.constant 0 : i32
    %c0_i32_0 = arith.constant 0 : i32
    %c0_i32_1 = arith.constant 0 : i32
    return %c0_i32, %c0_i32_0 : i32, i32
  }
  func.func @transform_9(%arg0: i32, %arg1: i32) -> (i32, i32) {
    %c0_i32 = arith.constant 0 : i32
    %c0_i32_0 = arith.constant 0 : i32
    %c0_i32_1 = arith.constant 0 : i32
    return %c0_i32, %c0_i32_0 : i32, i32
  }
  func.func @transform_10(%arg0: i32, %arg1: i32) -> (i32, i32) {
    %c0_i32 = arith.constant 0 : i32
    %c0_i32_0 = arith.constant 0 : i32
    %c0_i32_1 = arith.constant 0 : i32
    return %c0_i32, %c0_i32_0 : i32, i32
  }
  func.func @transform_11(%arg0: i32, %arg1: i32) -> (i32, i32, i32) {
    %c0_i32 = arith.constant 0 : i32
    %c0_i32_0 = arith.constant 0 : i32
    return %arg1, %arg0, %c0_i32 : i32, i32, i32
  }
  func.func @transform_12(%arg0: i32, %arg1: i32) -> (i32, i32, i32) {
    %c0_i32 = arith.constant 0 : i32
    %c0_i32_0 = arith.constant 0 : i32
    return %arg1, %arg0, %c0_i32 : i32, i32, i32
  }
}

</mosaic_0001>

<llo_original>
// kernel: tpu_custom_call.1
$region0: #{tpu_custom_call.1}
  #allocation0 [shape = 'u32[]', space=smem, size = 0x4, offset = 0x4, fixed_abs, tag = 'smem constant byte address 0x4 - core index']
  #allocation1 [shape = 'u32[144,128]{1,0:T(1,128)}', space=vmem, size = 0x12000, scoped, tag = 'internal scratch']
  #allocation2 [shape = 'f32[2,2,128]{2,1,0:T(2,128)}', space=vmem, size = 0x800, scoped, tag = 'scratch operand']
  #allocation3 [shape = 'f32[2,2,128]{2,1,0:T(2,128)}', space=vmem, size = 0x800, scoped, tag = 'scratch operand']
  %s0 = inlined_call_operand.vmem [shape: bf16[8,2,49,8], index: 0, kind: input, shape index: {}]
  %s1 = inlined_call_operand.hbm [shape: bf16[8,512], index: 1, kind: input, shape index: {}]
  %s2 = inlined_call_operand.vmem [shape: bf16[128,512], index: 2, kind: input, shape index: {}]
  %s3 = inlined_call_operand.vmem [shape: f32[1,512], index: 3, kind: input, shape index: {}]
  %s4 = inlined_call_operand.vmem [shape: bf16[128,512], index: 4, kind: input, shape index: {}]
  %s5 = inlined_call_operand.hbm [shape: bf16[128,512], index: 5, kind: input, shape index: {}]
  %s6 = inlined_call_operand.vmem [shape: f32[1,512], index: 6, kind: input, shape index: {}]
  %s7 = inlined_call_operand.hbm [shape: bf16[128,128], index: 7, kind: input, shape index: {}]
  %s8 = inlined_call_operand.vmem [shape: f32[1,128], index: 8, kind: input, shape index: {}]
  %s9 = inlined_call_operand.hbm [shape: bf16[128,128], index: 9, kind: input, shape index: {}]
  %s10 = inlined_call_operand.vmem [shape: f32[1,128], index: 10, kind: input, shape index: {}]
  %s11 = inlined_call_operand.hbm [shape: f32[8,2,8], index: 11, kind: output, shape index: {0}]
  %s12 = inlined_call_operand.hbm [shape: f32[8,2,128], index: 12, kind: output, shape index: {1}]
  %13 = xla_tuple %s11, %s12
  %s14 = sld [smem:[#allocation0]]
  $region105: #{tpu_custom_call.1} parent=0
    _
  %s16 = ssub.s32 1, %s14
  %s17 = scalar_select 0, %s16, %s14
  $region1: #{tpu_custom_call.1} parent=0
    #allocation4 [shape = 'u8[8192]{0}', space=vmem, size = 0x2000, scoped, tag = 'input window, operand 1, single buffered']
    #allocation5 [shape = 's32[2]{0}', space=sflag, size = 0x8, scoped, tag = 'scoped memory for tpu_custom_call.1']
    #allocation6 [shape = 's32[2]{0}', space=sflag, size = 0x8, scoped, tag = 'scoped memory for tpu_custom_call.1']
    #allocation7 [shape = 'u8[131072]{0}', space=vmem, size = 0x20000, scoped, tag = 'input window, operand 5, single buffered']
    #allocation8 [shape = 's32[1]{0}', space=sflag, size = 0x4, scoped, tag = 'scoped memory for tpu_custom_call.1']
    #allocation9 [shape = 'u8[32768]{0}', space=vmem, size = 0x8000, scoped, tag = 'input window, operand 7, single buffered']
    #allocation10 [shape = 'u8[32768]{0}', space=vmem, size = 0x8000, scoped, tag = 'input window, operand 9, single buffered']
    #allocation11 [shape = 's32[1]{0}', space=sflag, size = 0x4, scoped, tag = 'scoped memory for tpu_custom_call.1']
    #allocation12 [shape = 'u8[8192]{0}', space=vmem, size = 0x2000, scoped, tag = 'output window, operand 0']
    #allocation13 [shape = 'u8[8192]{0}', space=vmem, size = 0x2000, scoped, tag = 'output window, operand 1']
    #allocation14 [shape = 's32[2]{0}', space=sflag, size = 0x8, scoped, tag = 'scoped memory for tpu_custom_call.1']
    %18 = vsyncpa [#allocation5], 0
    %19 = vsyncpa [#allocation8], 0
    %20 = vsyncpa [#allocation11], 0
    %21 = vsyncpa [#allocation6], 0
    %s22 = scalar_lea.sflag [#allocation6], 1
    %23 = vsyncpa %s22, 0
    %24 = vsyncpa [#allocation14], 0
    %s25 = scalar_lea.sflag [#allocation14], 1
    %26 = vsyncpa %s25, 0
    loop: start=0, step=1, limit=4
    $region2: #{tpu_custom_call.1} parent=1 // loop_pre_header
      _
    $region3: #{tpu_custom_call.1} parent=1 // loop_header
      %s28 = sphi 0, %s32
      %p29 = scmp.ge.s32.totalorder %s28, 4
      %s35 = sphi 0, %s47
      %s36 = sphi 0, %s43
      %s37 = sphi 0, %s35
      %s38 = sphi 0, %s36
      %s39 = sphi 0, %s37
      %s40 = sphi 0, %s38
      %s52 = sphi 0, %s54
      %s55 = sphi 0, %s52
      %s56 = sphi 0, %s55
      %s72 = sphi 0, %s56
      %s76 = sphi 0, %s76
      %s78 = sphi 0, %s76
      %s79 = sphi 0, %s78
      %s93 = sphi 0, %s79
      %s97 = sphi 0, %s97
      %s99 = sphi 0, %s97
      %s100 = sphi 0, %s99
      %s114 = sphi 0, %s100
      %s118 = sphi 0, %s118
      %s120 = sphi 0, %s118
      %s121 = sphi 0, %s120
      %s135 = sphi 0, %s121
      %s139 = sphi 0, %s139
      %s141 = sphi 0, %s139
      %s142 = sphi 0, %s141
      %s156 = sphi 0, %s142
      %s160 = sphi 0, %s160
      %s162 = sphi 0, %s160
      %s163 = sphi 0, %s162
      %s177 = sphi 0, %s163
      %s181 = sphi 0, %s181
      %s183 = sphi 0, %s181
      %s184 = sphi 0, %s183
      %s198 = sphi 0, %s184
      %s202 = sphi 0, %s202
      %s204 = sphi 0, %s202
      %s205 = sphi 0, %s204
      %s219 = sphi 0, %s205
      %s223 = sphi 0, %s223
      %s225 = sphi 0, %s223
      %s226 = sphi 0, %s225
      %s240 = sphi 0, %s226
      %s244 = sphi 0, %s244
      %s246 = sphi 0, %s244
      %s247 = sphi 0, %s246
      %s261 = sphi 0, %s247
      %s265 = sphi 0, %s265
      %s267 = sphi 0, %s265
      %s268 = sphi 0, %s267
      %s282 = sphi 0, %s268
      %s290 = sphi 0, %s292
      %s293 = sphi 0, %s290
      %s294 = sphi 0, %s293
      %s310 = sphi 0, %s294
      %s318 = sphi 0, %s320
      %s321 = sphi 0, %s318
      %s322 = sphi 0, %s321
      %s338 = sphi 0, %s322
    $region4: #{tpu_custom_call.1} parent=1 // loop_header_branch
      %31 = sbr.rel (%p29) target = $region8
    $region5: #{tpu_custom_call.1} parent=1 // loop_body
      %s33 = ssub.s32 %s28, 1
      %s34 = ssub.s32 %s28, 2
      %s41 = sadd.s32 1, %s36
      %p42 = scmp.ge.s32.totalorder %s41, 2
      %s43 = scalar_select %p42, 0, %s41
      %s44 = sadd.s32 1, %s35
      %s45 = scalar_select %p42, %s44, %s35
      %p46 = scmp.ge.s32.totalorder %s45, 1
      %s47 = scalar_select %p46, 0, %s45
      %s48 = ssub.s32 %s36, %s43
      %s49 = ssub.s32 %s35, %s47
      %s50 = sor.u32 %s48, %s49
      %p51 = scmp.eq.s32.totalorder %s50, 0
      %s53 = sadd.s32 %s52, 1
      %s54 = scalar_select %p51, %s52, %s53
      %p57 = pneg %p51
      %p58 = scmp.eq.s32.totalorder %s28, 1
      %p59 = por %p57, %p58
      %p60 = scmp.ne.s32.totalorder %s52, %s55
      %p61 = scmp.eq.s32.totalorder %s28, 0
      %p62 = por %p60, %p61
      %p63 = scmp.ne.s32.totalorder %s52, %s55
      %p64 = scmp.eq.s32.totalorder %s33, 1
      %p65 = por %p63, %p64
      %p66 = scmp.ne.s32.totalorder %s55, %s56
      %p67 = scmp.eq.s32.totalorder %s33, 0
      %p68 = por %p66, %p67
      %p69 = scmp.ne.s32.totalorder %s55, %s56
      %p70 = scmp.eq.s32.totalorder %s34, 1
      %p71 = por %p69, %p70
      %p73 = scmp.ne.s32.totalorder %s56, %s72
      %p74 = scmp.eq.s32.totalorder %s34, 0
      %p75 = por %p73, %p74
      %s77 = sadd.s32 %s76, 1
      %p80 = scmp.eq.s32.totalorder %s28, 1
      %p81 = scmp.ne.s32.totalorder %s76, %s78
      %p82 = scmp.eq.s32.totalorder %s28, 0
      %p83 = por %p81, %p82
      %p84 = scmp.ne.s32.totalorder %s76, %s78
      %p85 = scmp.eq.s32.totalorder %s33, 1
      %p86 = por %p84, %p85
      %p87 = scmp.ne.s32.totalorder %s78, %s79
      %p88 = scmp.eq.s32.totalorder %s33, 0
      %p89 = por %p87, %p88
      %p90 = scmp.ne.s32.totalorder %s78, %s79
      %p91 = scmp.eq.s32.totalorder %s34, 1
      %p92 = por %p90, %p91
      %p94 = scmp.ne.s32.totalorder %s79, %s93
      %p95 = scmp.eq.s32.totalorder %s34, 0
      %p96 = por %p94, %p95
      %s98 = sadd.s32 %s97, 1
      %p101 = scmp.eq.s32.totalorder %s28, 1
      %p102 = scmp.ne.s32.totalorder %s97, %s99
      %p103 = scmp.eq.s32.totalorder %s28, 0
      %p104 = por %p102, %p103
      %p105 = scmp.ne.s32.totalorder %s97, %s99
      %p106 = scmp.eq.s32.totalorder %s33, 1
      %p107 = por %p105, %p106
      %p108 = scmp.ne.s32.totalorder %s99, %s100
      %p109 = scmp.eq.s32.totalorder %s33, 0
      %p110 = por %p108, %p109
      %p111 = scmp.ne.s32.totalorder %s99, %s100
      %p112 = scmp.eq.s32.totalorder %s34, 1
      %p113 = por %p111, %p112
      %p115 = scmp.ne.s32.totalorder %s100, %s114
      %p116 = scmp.eq.s32.totalorder %s34, 0
      %p117 = por %p115, %p116
      %s119 = sadd.s32 %s118, 1
      %p122 = scmp.eq.s32.totalorder %s28, 1
      %p123 = scmp.ne.s32.totalorder %s118, %s120
      %p124 = scmp.eq.s32.totalorder %s28, 0
      %p125 = por %p123, %p124
      %p126 = scmp.ne.s32.totalorder %s118, %s120
      %p127 = scmp.eq.s32.totalorder %s33, 1
      %p128 = por %p126, %p127
      %p129 = scmp.ne.s32.totalorder %s120, %s121
      %p130 = scmp.eq.s32.totalorder %s33, 0
      %p131 = por %p129, %p130
      %p132 = scmp.ne.s32.totalorder %s120, %s121
      %p133 = scmp.eq.s32.totalorder %s34, 1
      %p134 = por %p132, %p133
      %p136 = scmp.ne.s32.totalorder %s121, %s135
      %p137 = scmp.eq.s32.totalorder %s34, 0
      %p138 = por %p136, %p137
      %s140 = sadd.s32 %s139, 1
      %p143 = scmp.eq.s32.totalorder %s28, 1
      %p144 = scmp.ne.s32.totalorder %s139, %s141
      %p145 = scmp.eq.s32.totalorder %s28, 0
      %p146 = por %p144, %p145
      %p147 = scmp.ne.s32.totalorder %s139, %s141
      %p148 = scmp.eq.s32.totalorder %s33, 1
      %p149 = por %p147, %p148
      %p150 = scmp.ne.s32.totalorder %s141, %s142
      %p151 = scmp.eq.s32.totalorder %s33, 0
      %p152 = por %p150, %p151
      %p153 = scmp.ne.s32.totalorder %s141, %s142
      %p154 = scmp.eq.s32.totalorder %s34, 1
      %p155 = por %p153, %p154
      %p157 = scmp.ne.s32.totalorder %s142, %s156
      %p158 = scmp.eq.s32.totalorder %s34, 0
      %p159 = por %p157, %p158
      %s161 = sadd.s32 %s160, 1
      %p164 = scmp.eq.s32.totalorder %s28, 1
      %p165 = scmp.ne.s32.totalorder %s160, %s162
      %p166 = scmp.eq.s32.totalorder %s28, 0
      %p167 = por %p165, %p166
      %p168 = scmp.ne.s32.totalorder %s160, %s162
      %p169 = scmp.eq.s32.totalorder %s33, 1
      %p170 = por %p168, %p169
      %p171 = scmp.ne.s32.totalorder %s162, %s163
      %p172 = scmp.eq.s32.totalorder %s33, 0
      %p173 = por %p171, %p172
      %p174 = scmp.ne.s32.totalorder %s162, %s163
      %p175 = scmp.eq.s32.totalorder %s34, 1
      %p176 = por %p174, %p175
      %p178 = scmp.ne.s32.totalorder %s163, %s177
      %p179 = scmp.eq.s32.totalorder %s34, 0
      %p180 = por %p178, %p179
      %s182 = sadd.s32 %s181, 1
      %p185 = scmp.eq.s32.totalorder %s28, 1
      %p186 = scmp.ne.s32.totalorder %s181, %s183
      %p187 = scmp.eq.s32.totalorder %s28, 0
      %p188 = por %p186, %p187
      %p189 = scmp.ne.s32.totalorder %s181, %s183
      %p190 = scmp.eq.s32.totalorder %s33, 1
      %p191 = por %p189, %p190
      %p192 = scmp.ne.s32.totalorder %s183, %s184
      %p193 = scmp.eq.s32.totalorder %s33, 0
      %p194 = por %p192, %p193
      %p195 = scmp.ne.s32.totalorder %s183, %s184
      %p196 = scmp.eq.s32.totalorder %s34, 1
      %p197 = por %p195, %p196
      %p199 = scmp.ne.s32.totalorder %s184, %s198
      %p200 = scmp.eq.s32.totalorder %s34, 0
      %p201 = por %p199, %p200
      %s203 = sadd.s32 %s202, 1
      %p206 = scmp.eq.s32.totalorder %s28, 1
      %p207 = scmp.ne.s32.totalorder %s202, %s204
      %p208 = scmp.eq.s32.totalorder %s28, 0
      %p209 = por %p207, %p208
      %p210 = scmp.ne.s32.totalorder %s202, %s204
      %p211 = scmp.eq.s32.totalorder %s33, 1
      %p212 = por %p210, %p211
      %p213 = scmp.ne.s32.totalorder %s204, %s205
      %p214 = scmp.eq.s32.totalorder %s33, 0
      %p215 = por %p213, %p214
      %p216 = scmp.ne.s32.totalorder %s204, %s205
      %p217 = scmp.eq.s32.totalorder %s34, 1
      %p218 = por %p216, %p217
      %p220 = scmp.ne.s32.totalorder %s205, %s219
      %p221 = scmp.eq.s32.totalorder %s34, 0
      %p222 = por %p220, %p221
      %s224 = sadd.s32 %s223, 1
      %p227 = scmp.eq.s32.totalorder %s28, 1
      %p228 = scmp.ne.s32.totalorder %s223, %s225
      %p229 = scmp.eq.s32.totalorder %s28, 0
      %p230 = por %p228, %p229
      %p231 = scmp.ne.s32.totalorder %s223, %s225
      %p232 = scmp.eq.s32.totalorder %s33, 1
      %p233 = por %p231, %p232
      %p234 = scmp.ne.s32.totalorder %s225, %s226
      %p235 = scmp.eq.s32.totalorder %s33, 0
      %p236 = por %p234, %p235
      %p237 = scmp.ne.s32.totalorder %s225, %s226
      %p238 = scmp.eq.s32.totalorder %s34, 1
      %p239 = por %p237, %p238
      %p241 = scmp.ne.s32.totalorder %s226, %s240
      %p242 = scmp.eq.s32.totalorder %s34, 0
      %p243 = por %p241, %p242
      %s245 = sadd.s32 %s244, 1
      %p248 = scmp.eq.s32.totalorder %s28, 1
      %p249 = scmp.ne.s32.totalorder %s244, %s246
      %p250 = scmp.eq.s32.totalorder %s28, 0
      %p251 = por %p249, %p250
      %p252 = scmp.ne.s32.totalorder %s244, %s246
      %p253 = scmp.eq.s32.totalorder %s33, 1
      %p254 = por %p252, %p253
      %p255 = scmp.ne.s32.totalorder %s246, %s247
      %p256 = scmp.eq.s32.totalorder %s33, 0
      %p257 = por %p255, %p256
      %p258 = scmp.ne.s32.totalorder %s246, %s247
      %p259 = scmp.eq.s32.totalorder %s34, 1
      %p260 = por %p258, %p259
      %p262 = scmp.ne.s32.totalorder %s247, %s261
      %p263 = scmp.eq.s32.totalorder %s34, 0
      %p264 = por %p262, %p263
      %s266 = sadd.s32 %s265, 1
      %p269 = scmp.eq.s32.totalorder %s28, 1
      %p270 = scmp.ne.s32.totalorder %s265, %s267
      %p271 = scmp.eq.s32.totalorder %s28, 0
      %p272 = por %p270, %p271
      %p273 = scmp.ne.s32.totalorder %s265, %s267
      %p274 = scmp.eq.s32.totalorder %s33, 1
      %p275 = por %p273, %p274
      %p276 = scmp.ne.s32.totalorder %s267, %s268
      %p277 = scmp.eq.s32.totalorder %s33, 0
      %p278 = por %p276, %p277
      %p279 = scmp.ne.s32.totalorder %s267, %s268
      %p280 = scmp.eq.s32.totalorder %s34, 1
      %p281 = por %p279, %p280
      %p283 = scmp.ne.s32.totalorder %s268, %s282
      %p284 = scmp.eq.s32.totalorder %s34, 0
      %p285 = por %p283, %p284
      %s286 = ssub.s32 %s36, %s43
      %s287 = ssub.s32 %s35, %s47
      %s288 = sor.u32 %s286, %s287
      %p289 = scmp.eq.s32.totalorder %s288, 0
      %s291 = sadd.s32 %s290, 1
      %s292 = scalar_select %p289, %s290, %s291
      %p295 = pneg %p289
      %p296 = scmp.eq.s32.totalorder %s28, 1
      %p297 = por %p295, %p296
      %p298 = scmp.ne.s32.totalorder %s290, %s293
      %p299 = scmp.eq.s32.totalorder %s28, 0
      %p300 = por %p298, %p299
      %p301 = scmp.ne.s32.totalorder %s290, %s293
      %p302 = scmp.eq.s32.totalorder %s33, 1
      %p303 = por %p301, %p302
      %p304 = scmp.ne.s32.totalorder %s293, %s294
      %p305 = scmp.eq.s32.totalorder %s33, 0
      %p306 = por %p304, %p305
      %p307 = scmp.ne.s32.totalorder %s293, %s294
      %p308 = scmp.eq.s32.totalorder %s34, 1
      %p309 = por %p307, %p308
      %p311 = scmp.ne.s32.totalorder %s294, %s310
      %p312 = scmp.eq.s32.totalorder %s34, 0
      %p313 = por %p311, %p312
      %s314 = ssub.s32 %s36, %s43
      %s315 = ssub.s32 %s35, %s47
      %s316 = sor.u32 %s314, %s315
      %p317 = scmp.eq.s32.totalorder %s316, 0
      %s319 = sadd.s32 %s318, 1
      %s320 = scalar_select %p317, %s318, %s319
      %p323 = pneg %p317
      %p324 = scmp.eq.s32.totalorder %s28, 1
      %p325 = por %p323, %p324
      %p326 = scmp.ne.s32.totalorder %s318, %s321
      %p327 = scmp.eq.s32.totalorder %s28, 0
      %p328 = por %p326, %p327
      %p329 = scmp.ne.s32.totalorder %s318, %s321
      %p330 = scmp.eq.s32.totalorder %s33, 1
      %p331 = por %p329, %p330
      %p332 = scmp.ne.s32.totalorder %s321, %s322
      %p333 = scmp.eq.s32.totalorder %s33, 0
      %p334 = por %p332, %p333
      %p335 = scmp.ne.s32.totalorder %s321, %s322
      %p336 = scmp.eq.s32.totalorder %s34, 1
      %p337 = por %p335, %p336
      %p339 = scmp.ne.s32.totalorder %s322, %s338
      %p340 = scmp.eq.s32.totalorder %s34, 0
      %p341 = por %p339, %p340
      %p342 = scmp.le.s32.totalorder 1, %s28
      %p343 = scmp.lt.s32.totalorder %s28, 3
      %p344 = pnand %p342, %p343
      %p345 = pneg %p344
      // Predicated region
      $region9: #{tpu_custom_call.1} parent=5 // pred_check
        _
      $region10: #{tpu_custom_call.1} parent=5 // pred_check_branch
        %347 = sbr.rel (%p344) target = $region12
      $region11: #{tpu_custom_call.1} parent=5 // pred_region
        %s348 = ssub.s32 %s28, 1
        // Predicated region
        $region13: #{tpu_custom_call.1} parent=11 // pred_check
          %p349 = pneg %p89
        $region14: #{tpu_custom_call.1} parent=11 // pred_check_branch
          %351 = sbr.rel (%p349) target = $region16
        $region15: #{tpu_custom_call.1} parent=11 // pred_region
          %s353 = ssub.s32 256, 256
          %354 = vsyncadd [#allocation5], %s353
          %s356 = sshll.u32 [#allocation4], 4
          %s357 = int_to_ptr.vmem [resolvable:$true] %s356
          %359 = dma.hbm_to_vmem [thread:$0]  %s1, 256, %s357, [#allocation5]
        $region16: #{tpu_custom_call.1} parent=11 // pred_fallthru
          _
        // Predicated region
        $region17: #{tpu_custom_call.1} parent=11 // pred_check
          %p360 = pneg %p110
        $region18: #{tpu_custom_call.1} parent=11 // pred_check_branch
          %362 = sbr.rel (%p360) target = $region20
        $region19: #{tpu_custom_call.1} parent=11 // pred_region
          _
        $region20: #{tpu_custom_call.1} parent=11 // pred_fallthru
          _
        // Predicated region
        $region21: #{tpu_custom_call.1} parent=11 // pred_check
          %p363 = pneg %p131
        $region22: #{tpu_custom_call.1} parent=11 // pred_check_branch
          %365 = sbr.rel (%p363) target = $region24
        $region23: #{tpu_custom_call.1} parent=11 // pred_region
          _
        $region24: #{tpu_custom_call.1} parent=11 // pred_fallthru
          _
        // Predicated region
        $region25: #{tpu_custom_call.1} parent=11 // pred_check
          %p366 = pneg %p152
        $region26: #{tpu_custom_call.1} parent=11 // pred_check_branch
          %368 = sbr.rel (%p366) target = $region28
        $region27: #{tpu_custom_call.1} parent=11 // pred_region
          _
        $region28: #{tpu_custom_call.1} parent=11 // pred_fallthru
          _
        // Predicated region
        $region29: #{tpu_custom_call.1} parent=11 // pred_check
          %p369 = pneg %p173
        $region30: #{tpu_custom_call.1} parent=11 // pred_check_branch
          %371 = sbr.rel (%p369) target = $region32
        $region31: #{tpu_custom_call.1} parent=11 // pred_region
          %s373 = ssub.s32 4096, 4096
          %374 = vsyncadd [#allocation8], %s373
          %s375 = sshll.u32 [#allocation7], 4
          %s376 = int_to_ptr.vmem [resolvable:$true] %s375
          %381 = dma.hbm_to_vmem [thread:$0]  %s5, 4096, %s376, [#allocation8], 256, 256, 16
        $region32: #{tpu_custom_call.1} parent=11 // pred_fallthru
          _
        // Predicated region
        $region33: #{tpu_custom_call.1} parent=11 // pred_check
          %p382 = pneg %p194
        $region34: #{tpu_custom_call.1} parent=11 // pred_check_branch
          %384 = sbr.rel (%p382) target = $region36
        $region35: #{tpu_custom_call.1} parent=11 // pred_region
          _
        $region36: #{tpu_custom_call.1} parent=11 // pred_fallthru
          _
        // Predicated region
        $region37: #{tpu_custom_call.1} parent=11 // pred_check
          %p385 = pneg %p215
        $region38: #{tpu_custom_call.1} parent=11 // pred_check_branch
          %387 = sbr.rel (%p385) target = $region40
        $region39: #{tpu_custom_call.1} parent=11 // pred_region
          %s389 = ssub.s32 1024, 1024
          %390 = vsyncadd [#allocation8], %s389
          %s391 = sshll.u32 [#allocation9], 4
          %s392 = int_to_ptr.vmem [resolvable:$true] %s391
          %397 = dma.hbm_to_vmem [thread:$0]  %s7, 1024, %s392, [#allocation8], 64, 64, 4
        $region40: #{tpu_custom_call.1} parent=11 // pred_fallthru
          _
        // Predicated region
        $region41: #{tpu_custom_call.1} parent=11 // pred_check
          %p398 = pneg %p236
        $region42: #{tpu_custom_call.1} parent=11 // pred_check_branch
          %400 = sbr.rel (%p398) target = $region44
        $region43: #{tpu_custom_call.1} parent=11 // pred_region
          _
        $region44: #{tpu_custom_call.1} parent=11 // pred_fallthru
          _
        // Predicated region
        $region45: #{tpu_custom_call.1} parent=11 // pred_check
          %p401 = pneg %p257
        $region46: #{tpu_custom_call.1} parent=11 // pred_check_branch
          %403 = sbr.rel (%p401) target = $region48
        $region47: #{tpu_custom_call.1} parent=11 // pred_region
          %s405 = ssub.s32 1024, 1024
          %406 = vsyncadd [#allocation11], %s405
          %s407 = sshll.u32 [#allocation10], 4
          %s408 = int_to_ptr.vmem [resolvable:$true] %s407
          %413 = dma.hbm_to_vmem [thread:$0]  %s9, 1024, %s408, [#allocation11], 64, 64, 4
        $region48: #{tpu_custom_call.1} parent=11 // pred_fallthru
          _
        // Predicated region
        $region49: #{tpu_custom_call.1} parent=11 // pred_check
          %p414 = pneg %p278
        $region50: #{tpu_custom_call.1} parent=11 // pred_check_branch
          %416 = sbr.rel (%p414) target = $region52
        $region51: #{tpu_custom_call.1} parent=11 // pred_region
          _
        $region52: #{tpu_custom_call.1} parent=11 // pred_fallthru
          _
      $region12: #{tpu_custom_call.1} parent=5 // pred_fallthru
        _
      %p417 = scmp.lt.s32.totalorder %s28, 2
      // Predicated region
      $region53: #{tpu_custom_call.1} parent=5 // pred_check
        %p418 = pneg %p417
      $region54: #{tpu_custom_call.1} parent=5 // pred_check_branch
        %420 = sbr.rel (%p418) target = $region56
      $region55: #{tpu_custom_call.1} parent=5 // pred_region
        // Predicated region
        $region57: #{tpu_custom_call.1} parent=55 // pred_check
          %p421 = pneg %p62
        $region58: #{tpu_custom_call.1} parent=55 // pred_check_branch
          %423 = sbr.rel (%p421) target = $region60
        $region59: #{tpu_custom_call.1} parent=55 // pred_region
          %s424 = smul.u32 4, %s36
          %s425 = smul.u32 2, %s35
          %p426 = scmp.lt.s32.totalorder %s424, 7
          %s427 = scalar_select %p426, %s424, 7
          %p428 = scmp.lt.s32.totalorder %s425, 1
          %s429 = scalar_select %p428, %s425, 1
          %s430 = smul.addr %s429, 7
          %s431 = smul.addr %s427, 14
          %s432 = sadd.s32 %s430, %s431
          %s433 = smul.addr %s432, 4
          %s434 = scalar_lea.vmem %s0, %s433
          %s435 = smul.u32 4, %s36
          %s436 = smul.u32 2, %s35
        $region60: #{tpu_custom_call.1} parent=55 // pred_fallthru
          _
      $region56: #{tpu_custom_call.1} parent=5 // pred_fallthru
        _
      %p437 = scmp.le.s32.totalorder 1, %s28
      %p438 = scmp.lt.s32.totalorder %s28, 3
      %p439 = pnand %p437, %p438
      %p440 = pneg %p439
      // Predicated region
      $region61: #{tpu_custom_call.1} parent=5 // pred_check
        _
      $region62: #{tpu_custom_call.1} parent=5 // pred_check_branch
        %442 = sbr.rel (%p439) target = $region64
      $region63: #{tpu_custom_call.1} parent=5 // pred_region
        %s443 = ssub.s32 %s28, 1
        // Predicated region
        $region65: #{tpu_custom_call.1} parent=63 // pred_check
          %p444 = pneg %p89
        $region66: #{tpu_custom_call.1} parent=63 // pred_check_branch
          %446 = sbr.rel (%p444) target = $region68
        $region67: #{tpu_custom_call.1} parent=63 // pred_region
          %447 = dma.done [#allocation5], 256
        $region68: #{tpu_custom_call.1} parent=63 // pred_fallthru
          _
        // Predicated region
        $region69: #{tpu_custom_call.1} parent=63 // pred_check
          %p448 = pneg %p173
        $region70: #{tpu_custom_call.1} parent=63 // pred_check_branch
          %450 = sbr.rel (%p448) target = $region72
        $region71: #{tpu_custom_call.1} parent=63 // pred_region
          %451 = dma.done [#allocation8], 4096
        $region72: #{tpu_custom_call.1} parent=63 // pred_fallthru
          _
        // Predicated region
        $region73: #{tpu_custom_call.1} parent=63 // pred_check
          %p452 = pneg %p215
        $region74: #{tpu_custom_call.1} parent=63 // pred_check_branch
          %454 = sbr.rel (%p452) target = $region76
        $region75: #{tpu_custom_call.1} parent=63 // pred_region
          %455 = dma.done [#allocation8], 1024
        $region76: #{tpu_custom_call.1} parent=63 // pred_fallthru
          _
        // Predicated region
        $region77: #{tpu_custom_call.1} parent=63 // pred_check
          %p456 = pneg %p257
        $region78: #{tpu_custom_call.1} parent=63 // pred_check_branch
          %458 = sbr.rel (%p456) target = $region80
        $region79: #{tpu_custom_call.1} parent=63 // pred_region
          %459 = dma.done [#allocation11], 1024
        $region80: #{tpu_custom_call.1} parent=63 // pred_fallthru
          _
        %s460 = smul.u32 4, %s38
        %s461 = smul.u32 2, %s37
        %p462 = scmp.lt.s32.totalorder %s460, 7
        %s463 = scalar_select %p462, %s460, 7
        %p464 = scmp.lt.s32.totalorder %s461, 1
        %s465 = scalar_select %p464, %s461, 1
        %s466 = smul.addr %s465, 7
        %s467 = smul.addr %s463, 14
        %s468 = sadd.s32 %s466, %s467
        %s469 = smul.addr %s468, 4
        %s470 = scalar_lea.vmem %s0, %s469
        %p471 = pneg %p68
        %p472 = pneg %p65
        %p473 = pneg %p89
        %p474 = pneg %p86
        %p475 = pneg %p110
        %p476 = pneg %p107
        %p477 = pneg %p131
        %p478 = pneg %p128
        %p479 = pneg %p152
        %p480 = pneg %p149
        %p481 = pneg %p173
        %p482 = pneg %p170
        %p483 = pneg %p194
        %p484 = pneg %p191
        %p485 = pneg %p215
        %p486 = pneg %p212
        %p487 = pneg %p236
        %p488 = pneg %p233
        %p489 = pneg %p257
        %p490 = pneg %p254
        %p491 = pneg %p278
        %p492 = pneg %p275
        %p493 = pneg %p306
        %p494 = pneg %p303
        %s495 = sand.u32 %s293, 1
        %s496 = scalar_lea.sflag [#allocation6], %s495
        %s497 = sand.u32 %s293, 1
        %s498 = smul.addr %s497, 8
        %s499 = scalar_lea.vmem [#allocation12], %s498
        %p500 = pneg %p334
        %p501 = pneg %p331
        %s502 = sand.u32 %s321, 1
        %s503 = scalar_lea.sflag [#allocation14], %s502
        %s504 = sand.u32 %s321, 1
        %s505 = smul.addr %s504, 8
        %s506 = scalar_lea.vmem [#allocation13], %s505
        %s507 = smul.u32 4, %s38
        %s508 = smul.u32 2, %s37
        %p509 = scmp.lt.s32.totalorder %s507, 7
        %s510 = scalar_select %p509, %s507, 7
        %p511 = scmp.lt.s32.totalorder %s508, 1
        %s512 = scalar_select %p511, %s508, 1
        %s513 = smul.addr %s512, 7
        %s514 = smul.addr %s510, 14
        %s515 = sadd.s32 %s513, %s514
        %s516 = smul.addr %s515, 4
        %s517 = scalar_lea.vmem %s0, %s516
        %s518 = smul.u32 4, %s38
        %s519 = smul.u32 2, %s37
        %s520 = smul.u32 4, %s38
        %s521 = smul.u32 4, %s38
        %p523 = scmp.eq.s32.totalorder %s38, 0
        // Predicated region
        $region81: #{tpu_custom_call.1} parent=63 // pred_check
          %p524 = pneg %p523
        $region82: #{tpu_custom_call.1} parent=63 // pred_check_branch
          %526 = sbr.rel (%p524) target = $region84
        $region83: #{tpu_custom_call.1} parent=63 // pred_region
          %527 = vst [vmem:[#allocation2] sm:$0x3] 0.0
          %528 = vst [vmem:[#allocation2 + $0x2] sm:$0x3] 0.0
          %529 = vst [vmem:[#allocation3] sm:$0x3] 0.0
          %530 = vst [vmem:[#allocation3 + $0x2] sm:$0x3] 0.0
        $region84: #{tpu_custom_call.1} parent=63 // pred_fallthru
          _
        %v531 = vld [vmem:[#allocation9] sm:$0xf]
        %v532 = vld [vmem:[#allocation9 + $0x4] sm:$0xf]
        %v533 = vld [vmem:[#allocation9 + $0x8] sm:$0xf]
        %v534 = vld [vmem:[#allocation9 + $0xc] sm:$0xf]
        %v535 = vld [vmem:[#allocation9 + $0x10] sm:$0xf]
        %v536 = vld [vmem:[#allocation9 + $0x14] sm:$0xf]
        %v537 = vld [vmem:[#allocation9 + $0x18] sm:$0xf]
        %v538 = vld [vmem:[#allocation9 + $0x1c] sm:$0xf]
        %v539 = vld [vmem:[#allocation9 + $0x20] sm:$0xf]
        %v540 = vld [vmem:[#allocation9 + $0x24] sm:$0xf]
        %v541 = vld [vmem:[#allocation9 + $0x28] sm:$0xf]
        %v542 = vld [vmem:[#allocation9 + $0x2c] sm:$0xf]
        %v543 = vld [vmem:[#allocation9 + $0x30] sm:$0xf]
        %v544 = vld [vmem:[#allocation9 + $0x34] sm:$0xf]
        %v545 = vld [vmem:[#allocation9 + $0x38] sm:$0xf]
        %v546 = vld [vmem:[#allocation9 + $0x3c] sm:$0xf]
        %v547 = vld [vmem:[%s8] sm:$0x1]
        %v548 = vld [vmem:[#allocation10] sm:$0xf]
        %v549 = vld [vmem:[#allocation10 + $0x4] sm:$0xf]
        %v550 = vld [vmem:[#allocation10 + $0x8] sm:$0xf]
        %v551 = vld [vmem:[#allocation10 + $0xc] sm:$0xf]
        %v552 = vld [vmem:[#allocation10 + $0x10] sm:$0xf]
        %v553 = vld [vmem:[#allocation10 + $0x14] sm:$0xf]
        %v554 = vld [vmem:[#allocation10 + $0x18] sm:$0xf]
        %v555 = vld [vmem:[#allocation10 + $0x1c] sm:$0xf]
        %v556 = vld [vmem:[#allocation10 + $0x20] sm:$0xf]
        %v557 = vld [vmem:[#allocation10 + $0x24] sm:$0xf]
        %v558 = vld [vmem:[#allocation10 + $0x28] sm:$0xf]
        %v559 = vld [vmem:[#allocation10 + $0x2c] sm:$0xf]
        %v560 = vld [vmem:[#allocation10 + $0x30] sm:$0xf]
        %v561 = vld [vmem:[#allocation10 + $0x34] sm:$0xf]
        %v562 = vld [vmem:[#allocation10 + $0x38] sm:$0xf]
        %v563 = vld [vmem:[#allocation10 + $0x3c] sm:$0xf]
        %v564 = vld [vmem:[%s10] sm:$0x1]
        %v565 = vld [vmem:[#allocation4] sm:$0xff]
        %v566 = vld [vmem:[#allocation4 + $0x8] sm:$0xff]
        %v567 = vld [vmem:[%s4] sm:$0xff]
        %v568 = vld [vmem:[%s4 + $0x8] sm:$0xff]
        %v569 = vld [vmem:[%s4 + $0x10] sm:$0xff]
        %v570 = vld [vmem:[%s4 + $0x18] sm:$0xff]
        %v571 = vld [vmem:[%s4 + $0x20] sm:$0xff]
        %v572 = vld [vmem:[%s4 + $0x28] sm:$0xff]
        %v573 = vld [vmem:[%s4 + $0x30] sm:$0xff]
        %v574 = vld [vmem:[%s4 + $0x38] sm:$0xff]
        %v575 = vld [vmem:[%s4 + $0x40] sm:$0xff]
        %v576 = vld [vmem:[%s4 + $0x48] sm:$0xff]
        %v577 = vld [vmem:[%s4 + $0x50] sm:$0xff]
        %v578 = vld [vmem:[%s4 + $0x58] sm:$0xff]
        %v579 = vld [vmem:[%s4 + $0x60] sm:$0xff]
        %v580 = vld [vmem:[%s4 + $0x68] sm:$0xff]
        %v581 = vld [vmem:[%s4 + $0x70] sm:$0xff]
        %v582 = vld [vmem:[%s4 + $0x78] sm:$0xff]
        %v583 = vld [vmem:[%s4 + $0x80] sm:$0xff]
        %v584 = vld [vmem:[%s4 + $0x88] sm:$0xff]
        %v585 = vld [vmem:[%s4 + $0x90] sm:$0xff]
        %v586 = vld [vmem:[%s4 + $0x98] sm:$0xff]
        %v587 = vld [vmem:[%s4 + $0xa0] sm:$0xff]
        %v588 = vld [vmem:[%s4 + $0xa8] sm:$0xff]
        %v589 = vld [vmem:[%s4 + $0xb0] sm:$0xff]
        %v590 = vld [vmem:[%s4 + $0xb8] sm:$0xff]
        %v591 = vld [vmem:[%s4 + $0xc0] sm:$0xff]
        %v592 = vld [vmem:[%s4 + $0xc8] sm:$0xff]
        %v593 = vld [vmem:[%s4 + $0xd0] sm:$0xff]
        %v594 = vld [vmem:[%s4 + $0xd8] sm:$0xff]
        %v595 = vld [vmem:[%s4 + $0xe0] sm:$0xff]
        %v596 = vld [vmem:[%s4 + $0xe8] sm:$0xff]
        %v597 = vld [vmem:[%s4 + $0xf0] sm:$0xff]
        %v598 = vld [vmem:[%s4 + $0xf8] sm:$0xff]
        %v599 = vld [vmem:[%s2] sm:$0xff]
        %v600 = vld [vmem:[%s2 + $0x8] sm:$0xff]
        %v601 = vld [vmem:[%s2 + $0x10] sm:$0xff]
        %v602 = vld [vmem:[%s2 + $0x18] sm:$0xff]
        %v603 = vld [vmem:[%s2 + $0x20] sm:$0xff]
        %v604 = vld [vmem:[%s2 + $0x28] sm:$0xff]
        %v605 = vld [vmem:[%s2 + $0x30] sm:$0xff]
        %v606 = vld [vmem:[%s2 + $0x38] sm:$0xff]
        %v607 = vld [vmem:[%s2 + $0x40] sm:$0xff]
        %v608 = vld [vmem:[%s2 + $0x48] sm:$0xff]
        %v609 = vld [vmem:[%s2 + $0x50] sm:$0xff]
        %v610 = vld [vmem:[%s2 + $0x58] sm:$0xff]
        %v611 = vld [vmem:[%s2 + $0x60] sm:$0xff]
        %v612 = vld [vmem:[%s2 + $0x68] sm:$0xff]
        %v613 = vld [vmem:[%s2 + $0x70] sm:$0xff]
        %v614 = vld [vmem:[%s2 + $0x78] sm:$0xff]
        %v615 = vld [vmem:[%s2 + $0x80] sm:$0xff]
        %v616 = vld [vmem:[%s2 + $0x88] sm:$0xff]
        %v617 = vld [vmem:[%s2 + $0x90] sm:$0xff]
        %v618 = vld [vmem:[%s2 + $0x98] sm:$0xff]
        %v619 = vld [vmem:[%s2 + $0xa0] sm:$0xff]
        %v620 = vld [vmem:[%s2 + $0xa8] sm:$0xff]
        %v621 = vld [vmem:[%s2 + $0xb0] sm:$0xff]
        %v622 = vld [vmem:[%s2 + $0xb8] sm:$0xff]
        %v623 = vld [vmem:[%s2 + $0xc0] sm:$0xff]
        %v624 = vld [vmem:[%s2 + $0xc8] sm:$0xff]
        %v625 = vld [vmem:[%s2 + $0xd0] sm:$0xff]
        %v626 = vld [vmem:[%s2 + $0xd8] sm:$0xff]
        %v627 = vld [vmem:[%s2 + $0xe0] sm:$0xff]
        %v628 = vld [vmem:[%s2 + $0xe8] sm:$0xff]
        %v629 = vld [vmem:[%s2 + $0xf0] sm:$0xff]
        %v630 = vld [vmem:[%s2 + $0xf8] sm:$0xff]
        %v631 = vld [vmem:[#allocation7] sm:$0xff]
        %v632 = vld [vmem:[#allocation7 + $0x8] sm:$0xff]
        %v633 = vld [vmem:[#allocation7 + $0x10] sm:$0xff]
        %v634 = vld [vmem:[#allocation7 + $0x18] sm:$0xff]
        %v635 = vld [vmem:[#allocation7 + $0x20] sm:$0xff]
        %v636 = vld [vmem:[#allocation7 + $0x28] sm:$0xff]
        %v637 = vld [vmem:[#allocation7 + $0x30] sm:$0xff]
        %v638 = vld [vmem:[#allocation7 + $0x38] sm:$0xff]
        %v639 = vld [vmem:[#allocation7 + $0x40] sm:$0xff]
        %v640 = vld [vmem:[#allocation7 + $0x48] sm:$0xff]
        %v641 = vld [vmem:[#allocation7 + $0x50] sm:$0xff]
        %v642 = vld [vmem:[#allocation7 + $0x58] sm:$0xff]
        %v643 = vld [vmem:[#allocation7 + $0x60] sm:$0xff]
        %v644 = vld [vmem:[#allocation7 + $0x68] sm:$0xff]
        %v645 = vld [vmem:[#allocation7 + $0x70] sm:$0xff]
        %v646 = vld [vmem:[#allocation7 + $0x78] sm:$0xff]
        %v647 = vld [vmem:[#allocation7 + $0x80] sm:$0xff]
        %v648 = vld [vmem:[#allocation7 + $0x88] sm:$0xff]
        %v649 = vld [vmem:[#allocation7 + $0x90] sm:$0xff]
        %v650 = vld [vmem:[#allocation7 + $0x98] sm:$0xff]
        %v651 = vld [vmem:[#allocation7 + $0xa0] sm:$0xff]
        %v652 = vld [vmem:[#allocation7 + $0xa8] sm:$0xff]
        %v653 = vld [vmem:[#allocation7 + $0xb0] sm:$0xff]
        %v654 = vld [vmem:[#allocation7 + $0xb8] sm:$0xff]
        %v655 = vld [vmem:[#allocation7 + $0xc0] sm:$0xff]
        %v656 = vld [vmem:[#allocation7 + $0xc8] sm:$0xff]
        %v657 = vld [vmem:[#allocation7 + $0xd0] sm:$0xff]
        %v658 = vld [vmem:[#allocation7 + $0xd8] sm:$0xff]
        %v659 = vld [vmem:[#allocation7 + $0xe0] sm:$0xff]
        %v660 = vld [vmem:[#allocation7 + $0xe8] sm:$0xff]
        %v661 = vld [vmem:[#allocation7 + $0xf0] sm:$0xff]
        %v662 = vld [vmem:[#allocation7 + $0xf8] sm:$0xff]
        %v663 = vld [vmem:[%s3] sm:$0xf]
        %v664 = vld [vmem:[%s6] sm:$0xf]
        %s665 = scalar_lea.vmem [#allocation2], 2
        %v666 = vld [vmem:[%s665] sm:$0x3]
        %v667 = vpack.c.bf16 %v666, %v666
        %v669 = vlaneseq
        %v670 = vshrl.u32 %v669, 7
        %v671 = vsub.s32 0, %v670
        %v672 = vrot.slane %v547, %v671
        %v690 = vunpack.c.l.b16 %v531
        %v691 = vunpack.c.l.b16 %v532
        %v692 = vunpack.c.l.b16 %v533
        %v693 = vunpack.c.l.b16 %v534
        %v694 = vunpack.c.l.b16 %v535
        %v695 = vunpack.c.l.b16 %v536
        %v696 = vunpack.c.l.b16 %v537
        %v697 = vunpack.c.l.b16 %v538
        %v698 = vunpack.c.l.b16 %v539
        %v699 = vunpack.c.l.b16 %v540
        %v700 = vunpack.c.l.b16 %v541
        %v701 = vunpack.c.l.b16 %v542
        %v702 = vunpack.c.l.b16 %v543
        %v703 = vunpack.c.l.b16 %v544
        %v704 = vunpack.c.l.b16 %v545
        %v705 = vunpack.c.l.b16 %v546
        %v706 = vpack.c.b16 %v691, %v690
        %v707 = vpack.c.b16 %v693, %v692
        %v708 = vpack.c.b16 %v695, %v694
        %v709 = vpack.c.b16 %v697, %v696
        %v710 = vpack.c.b16 %v699, %v698
        %v711 = vpack.c.b16 %v701, %v700
        %v712 = vpack.c.b16 %v703, %v702
        %v713 = vpack.c.b16 %v705, %v704
        %722 = vmatprep.subr.bf16.mxu0 0
        %723 = vmatpush1.bf16.msra.mxu0 %v706
        %724 = vmatprep.subr.bf16.mxu0 0
        %725 = vmatpush1.bf16.msra.mxu0 %v707
        %726 = vmatprep.subr.bf16.mxu0 0
        %727 = vmatpush1.bf16.msra.mxu0 %v708
        %728 = vmatprep.subr.bf16.mxu0 0
        %729 = vmatpush1.bf16.msra.mxu0 %v709
        %730 = vmatprep.subr.bf16.mxu0 0
        %731 = vmatpush1.bf16.msra.mxu0 %v710
        %732 = vmatprep.subr.bf16.mxu0 0
        %733 = vmatpush1.bf16.msra.mxu0 %v711
        %734 = vmatprep.subr.bf16.mxu0 0
        %735 = vmatpush1.bf16.msra.mxu0 %v712
        %736 = vmatprep.subr.bf16.mxu0 0
        %737 = vmatpush1.bf16.msra.mxu0 %v713
        %738 = vmatprep.subr.bf16.mxu0 0
        %739 = vmatpush1.bf16.msra.mxu0 0
        %740 = vmatprep.subr.bf16.mxu0 0
        %741 = vmatpush1.bf16.msra.mxu0 0
        %742 = vmatprep.subr.bf16.mxu0 0
        %743 = vmatpush1.bf16.msra.mxu0 0
        %744 = vmatprep.subr.bf16.mxu0 0
        %745 = vmatpush1.bf16.msra.mxu0 0
        %746 = vmatprep.subr.bf16.mxu0 0
        %747 = vmatpush1.bf16.msra.mxu0 0
        %748 = vmatprep.subr.bf16.mxu0 0
        %749 = vmatpush1.bf16.msra.mxu0 0
        %750 = vmatprep.subr.bf16.mxu0 0
        %751 = vmatpush1.bf16.msra.mxu0 0
        %752 = vmatprep.subr.bf16.mxu0 0
        %753 = vmatpush1.bf16.msra.mxu0 0
        %754 = vmatprep.mubr.bf16.mxu0 0
        %755 = vmatmul.mubr.bf16.gmra.mrb[0].mxu0 %v667
        %v756 = vpop.f32.mrb[0].mxu0
        %v757 = vadd.f32 %v672, %v756
        %v758 = vpop.f32.mrb[0].mxu0
        %v759 = vpop.f32.mrb[0].mxu0
        %v760 = vpop.f32.mrb[0].mxu0
        %761 = vdwg.mxu0
        %vm762 = vcmask 1041408
        %v763 = vsel %vm762, %v757, -inf
        %764 = vmax.xlane.f32.xlu0 %v763
        %v765 = vpop.xlane.xlu0 %764
        %v766 = vsub.f32 %v757, %v765
        %v767 = vmul.f32 %v766, 1.442695
        %v768 = vpow.pop %v767
        %v769 = vsel %vm762, %v768, 0.0
        %770 = vadd.xlane.f32.xlu0 %v769
        %v771 = vpop.xlane.xlu0 %770
        %v772 = vrcp.pop %v771
        %v773 = vmul.f32 %v768, %v772
        %v774 = vld [vmem:[%s517] sm:$0xf]
        %v775 = vld [vmem:[%s517 + $0x4] sm:$0xf]
        %v776 = vld [vmem:[%s517 + $0x8] sm:$0xf]
        %v777 = vld [vmem:[%s517 + $0xc] sm:$0xf]
        %v778 = vld [vmem:[%s517 + $0x10] sm:$0xf]
        %v779 = vld [vmem:[%s517 + $0x14] sm:$0xf]
        %v780 = vld [vmem:[%s517 + $0x18] sm:$0x1]
        %v781 = vld [vmem:[%s517 + $0x1c] sm:$0xf]
        %v782 = vld [vmem:[%s517 + $0x20] sm:$0xf]
        %v783 = vld [vmem:[%s517 + $0x24] sm:$0xf]
        %v784 = vld [vmem:[%s517 + $0x28] sm:$0xf]
        %v785 = vld [vmem:[%s517 + $0x2c] sm:$0xf]
        %v786 = vld [vmem:[%s517 + $0x30] sm:$0xf]
        %v787 = vld [vmem:[%s517 + $0x34] sm:$0x1]
        %v788 = vunpack.c.l.bf16 %v774
        %v789 = vunpack.c.l.bf16 %v775
        %v790 = vunpack.c.l.bf16 %v776
        %v791 = vunpack.c.l.bf16 %v777
        %v792 = vunpack.c.l.bf16 %v778
        %v793 = vunpack.c.l.bf16 %v779
        %v794 = vunpack.c.l.bf16 %v780
        %v795 = vunpack.c.l.bf16 %v781
        %v796 = vunpack.c.l.bf16 %v782
        %v797 = vunpack.c.l.bf16 %v783
        %v798 = vunpack.c.l.bf16 %v784
        %v799 = vunpack.c.l.bf16 %v785
        %v800 = vunpack.c.l.bf16 %v786
        %v801 = vunpack.c.l.bf16 %v787
        %v802 = vlaneseq
        %v803 = vshrl.u32 %v802, 7
        %v804 = vsub.s32 0, %v803
        %v805 = vrot.slane %v773, %v804
        %807 = vbcast.lane.b32.xlu0 %v805, 256
        %v808 = vpop.permute.xlu0 %807
        %s810 = sor.u32 256, 8
        %811 = vbcast.lane.b32.xlu0 %v805, %s810
        %v812 = vpop.permute.xlu0 %811
        %s814 = sor.u32 256, 16
        %815 = vbcast.lane.b32.xlu0 %v805, %s814
        %v816 = vpop.permute.xlu0 %815
        %s818 = sor.u32 256, 24
        %819 = vbcast.lane.b32.xlu0 %v805, %s818
        %v820 = vpop.permute.xlu0 %819
        %s822 = sor.u32 256, 32
        %823 = vbcast.lane.b32.xlu0 %v805, %s822
        %v824 = vpop.permute.xlu0 %823
        %s826 = sor.u32 256, 40
        %827 = vbcast.lane.b32.xlu0 %v805, %s826
        %v828 = vpop.permute.xlu0 %827
        %s830 = sor.u32 256, 48
        %831 = vbcast.lane.b32.xlu0 %v805, %s830
        %v832 = vpop.permute.xlu0 %831
        %v833 = vlaneseq
        %v834 = vshrl.u32 %v833, 7
        %v835 = vsub.s32 1, %v834
        %v836 = vrot.slane %v773, %v835
        %838 = vbcast.lane.b32.xlu0 %v836, 256
        %v839 = vpop.permute.xlu0 %838
        %s841 = sor.u32 256, 8
        %842 = vbcast.lane.b32.xlu0 %v836, %s841
        %v843 = vpop.permute.xlu0 %842
        %s845 = sor.u32 256, 16
        %846 = vbcast.lane.b32.xlu0 %v836, %s845
        %v847 = vpop.permute.xlu0 %846
        %s849 = sor.u32 256, 24
        %850 = vbcast.lane.b32.xlu0 %v836, %s849
        %v851 = vpop.permute.xlu0 %850
        %s853 = sor.u32 256, 32
        %854 = vbcast.lane.b32.xlu0 %v836, %s853
        %v855 = vpop.permute.xlu0 %854
        %s857 = sor.u32 256, 40
        %858 = vbcast.lane.b32.xlu0 %v836, %s857
        %v859 = vpop.permute.xlu0 %858
        %s861 = sor.u32 256, 48
        %862 = vbcast.lane.b32.xlu0 %v836, %s861
        %v863 = vpop.permute.xlu0 %862
        %v864 = vmul.f32 %v808, %v788
        %v865 = vmul.f32 %v812, %v789
        %v866 = vmul.f32 %v816, %v790
        %v867 = vmul.f32 %v820, %v791
        %v868 = vmul.f32 %v824, %v792
        %v869 = vmul.f32 %v828, %v793
        %v870 = vmul.f32 %v832, %v794
        %v871 = vmul.f32 %v839, %v795
        %v872 = vmul.f32 %v843, %v796
        %v873 = vmul.f32 %v847, %v797
        %v874 = vmul.f32 %v851, %v798
        %v875 = vmul.f32 %v855, %v799
        %v876 = vmul.f32 %v859, %v800
        %v877 = vmul.f32 %v863, %v801
        %vm878 = vcmask 64512
        %v879 = vsel %vm878, %v864, 0.0
        %v880 = vsel %vm878, %v865, 0.0
        %v881 = vadd.f32 %v879, %v880
        %v882 = vsel %vm878, %v866, 0.0
        %v883 = vadd.f32 %v881, %v882
        %v884 = vsel %vm878, %v867, 0.0
        %v885 = vadd.f32 %v883, %v884
        %v886 = vsel %vm878, %v868, 0.0
        %v887 = vadd.f32 %v885, %v886
        %v888 = vsel %vm878, %v869, 0.0
        %v889 = vadd.f32 %v887, %v888
        %vm890 = vcmask 57344
        %v891 = vsel %vm890, %v870, 0.0
        %v892 = vadd.f32 %v889, %v891
        %v893 = vrot.slane %v892, 4
        %v894 = vadd.f32 %v892, %v893
        %v895 = vrot.slane %v894, 2
        %v896 = vadd.f32 %v894, %v895
        %v897 = vrot.slane %v896, 1
        %v898 = vadd.f32 %v896, %v897
        %v899 = vsel %vm878, %v871, 0.0
        %v900 = vsel %vm878, %v872, 0.0
        %v901 = vadd.f32 %v899, %v900
        %v902 = vsel %vm878, %v873, 0.0
        %v903 = vadd.f32 %v901, %v902
        %v904 = vsel %vm878, %v874, 0.0
        %v905 = vadd.f32 %v903, %v904
        %v906 = vsel %vm878, %v875, 0.0
        %v907 = vadd.f32 %v905, %v906
        %v908 = vsel %vm878, %v876, 0.0
        %v909 = vadd.f32 %v907, %v908
        %v910 = vsel %vm890, %v877, 0.0
        %v911 = vadd.f32 %v909, %v910
        %v912 = vrot.slane %v911, 4
        %v913 = vadd.f32 %v911, %v912
        %v914 = vrot.slane %v913, 2
        %v915 = vadd.f32 %v913, %v914
        %v916 = vrot.slane %v915, 1
        %v917 = vadd.f32 %v915, %v916
        %v918 = vld [vmem:[#allocation2] sm:$0x3]
        %v919 = vld [vmem:[#allocation3] sm:$0x3]
        %v920 = vpack.c.bf16 %v898, %v898
        %v921 = vpack.c.bf16 %v917, %v917
        %v922 = vpack.c.bf16 %v918, %v918
        %v955 = vunpack.c.l.b16 %v599
        %v956 = vunpack.c.h.b16 %v599
        %v957 = vunpack.c.l.b16 %v600
        %v958 = vunpack.c.h.b16 %v600
        %v959 = vunpack.c.l.b16 %v601
        %v960 = vunpack.c.h.b16 %v601
        %v961 = vunpack.c.l.b16 %v602
        %v962 = vunpack.c.h.b16 %v602
        %v963 = vunpack.c.l.b16 %v603
        %v964 = vunpack.c.h.b16 %v603
        %v965 = vunpack.c.l.b16 %v604
        %v966 = vunpack.c.h.b16 %v604
        %v967 = vunpack.c.l.b16 %v605
        %v968 = vunpack.c.h.b16 %v605
        %v969 = vunpack.c.l.b16 %v606
        %v970 = vunpack.c.h.b16 %v606
        %v971 = vunpack.c.l.b16 %v607
        %v972 = vunpack.c.h.b16 %v607
        %v973 = vunpack.c.l.b16 %v608
        %v974 = vunpack.c.h.b16 %v608
        %v975 = vunpack.c.l.b16 %v609
        %v976 = vunpack.c.h.b16 %v609
        %v977 = vunpack.c.l.b16 %v610
        %v978 = vunpack.c.h.b16 %v610
        %v979 = vunpack.c.l.b16 %v611
        %v980 = vunpack.c.h.b16 %v611
        %v981 = vunpack.c.l.b16 %v612
        %v982 = vunpack.c.h.b16 %v612
        %v983 = vunpack.c.l.b16 %v613
        %v984 = vunpack.c.h.b16 %v613
        %v985 = vunpack.c.l.b16 %v614
        %v986 = vunpack.c.h.b16 %v614
        %v987 = vunpack.c.l.b16 %v615
        %v988 = vunpack.c.h.b16 %v615
        %v989 = vunpack.c.l.b16 %v616
        %v990 = vunpack.c.h.b16 %v616
        %v991 = vunpack.c.l.b16 %v617
        %v992 = vunpack.c.h.b16 %v617
        %v993 = vunpack.c.l.b16 %v618
        %v994 = vunpack.c.h.b16 %v618
        %v995 = vunpack.c.l.b16 %v619
        %v996 = vunpack.c.h.b16 %v619
        %v997 = vunpack.c.l.b16 %v620
        %v998 = vunpack.c.h.b16 %v620
        %v999 = vunpack.c.l.b16 %v621
        %v1000 = vunpack.c.h.b16 %v621
        %v1001 = vunpack.c.l.b16 %v622
        %v1002 = vunpack.c.h.b16 %v622
        %v1003 = vunpack.c.l.b16 %v623
        %v1004 = vunpack.c.h.b16 %v623
        %v1005 = vunpack.c.l.b16 %v624
        %v1006 = vunpack.c.h.b16 %v624
        %v1007 = vunpack.c.l.b16 %v625
        %v1008 = vunpack.c.h.b16 %v625
        %v1009 = vunpack.c.l.b16 %v626
        %v1010 = vunpack.c.h.b16 %v626
        %v1011 = vunpack.c.l.b16 %v627
        %v1012 = vunpack.c.h.b16 %v627
        %v1013 = vunpack.c.l.b16 %v628
        %v1014 = vunpack.c.h.b16 %v628
        %v1015 = vunpack.c.l.b16 %v629
        %v1016 = vunpack.c.h.b16 %v629
        %v1017 = vunpack.c.l.b16 %v630
        %v1018 = vunpack.c.h.b16 %v630
        %v1019 = vpack.c.b16 %v959, %v955
        %v1020 = vpack.c.b16 %v960, %v956
        %v1021 = vpack.c.b16 %v961, %v957
        %v1022 = vpack.c.b16 %v962, %v958
        %v1023 = vpack.c.b16 %v967, %v963
        %v1024 = vpack.c.b16 %v968, %v964
        %v1025 = vpack.c.b16 %v969, %v965
        %v1026 = vpack.c.b16 %v970, %v966
        %v1027 = vpack.c.b16 %v975, %v971
        %v1028 = vpack.c.b16 %v976, %v972
        %v1029 = vpack.c.b16 %v977, %v973
        %v1030 = vpack.c.b16 %v978, %v974
        %v1031 = vpack.c.b16 %v983, %v979
        %v1032 = vpack.c.b16 %v984, %v980
        %v1033 = vpack.c.b16 %v985, %v981
        %v1034 = vpack.c.b16 %v986, %v982
        %v1035 = vpack.c.b16 %v991, %v987
        %v1036 = vpack.c.b16 %v992, %v988
        %v1037 = vpack.c.b16 %v993, %v989
        %v1038 = vpack.c.b16 %v994, %v990
        %v1039 = vpack.c.b16 %v999, %v995
        %v1040 = vpack.c.b16 %v1000, %v996
        %v1041 = vpack.c.b16 %v1001, %v997
        %v1042 = vpack.c.b16 %v1002, %v998
        %v1043 = vpack.c.b16 %v1007, %v1003
        %v1044 = vpack.c.b16 %v1008, %v1004
        %v1045 = vpack.c.b16 %v1009, %v1005
        %v1046 = vpack.c.b16 %v1010, %v1006
        %v1047 = vpack.c.b16 %v1015, %v1011
        %v1048 = vpack.c.b16 %v1016, %v1012
        %v1049 = vpack.c.b16 %v1017, %v1013
        %v1050 = vpack.c.b16 %v1018, %v1014
        %1083 = vmatprep.subr.bf16.mxu0 %v1020
        %1084 = vmatpush1.bf16.msra.mxu0 %v1019
        %1085 = vmatprep.subr.bf16.mxu0 %v1024
        %1086 = vmatpush1.bf16.msra.mxu0 %v1023
        %1087 = vmatprep.subr.bf16.mxu0 %v1028
        %1088 = vmatpush1.bf16.msra.mxu0 %v1027
        %1089 = vmatprep.subr.bf16.mxu0 %v1032
        %1090 = vmatpush1.bf16.msra.mxu0 %v1031
        %1091 = vmatprep.subr.bf16.mxu0 %v1036
        %1092 = vmatpush1.bf16.msra.mxu0 %v1035
        %1093 = vmatprep.subr.bf16.mxu0 %v1040
        %1094 = vmatpush1.bf16.msra.mxu0 %v1039
        %1095 = vmatprep.subr.bf16.mxu0 %v1044
        %1096 = vmatpush1.bf16.msra.mxu0 %v1043
        %1097 = vmatprep.subr.bf16.mxu0 %v1048
        %1098 = vmatpush1.bf16.msra.mxu0 %v1047
        %1099 = vmatprep.subr.bf16.mxu0 0
        %1100 = vmatpush1.bf16.msra.mxu0 0
        %1101 = vmatprep.subr.bf16.mxu0 0
        %1102 = vmatpush1.bf16.msra.mxu0 0
        %1103 = vmatprep.subr.bf16.mxu0 0
        %1104 = vmatpush1.bf16.msra.mxu0 0
        %1105 = vmatprep.subr.bf16.mxu0 0
        %1106 = vmatpush1.bf16.msra.mxu0 0
        %1107 = vmatprep.subr.bf16.mxu0 0
        %1108 = vmatpush1.bf16.msra.mxu0 0
        %1109 = vmatprep.subr.bf16.mxu0 0
        %1110 = vmatpush1.bf16.msra.mxu0 0
        %1111 = vmatprep.subr.bf16.mxu0 0
        %1112 = vmatpush1.bf16.msra.mxu0 0
        %1113 = vmatprep.subr.bf16.mxu0 0
        %1114 = vmatpush1.bf16.msra.mxu0 0
        %1115 = vmatprep.mubr.bf16.mxu0 0
        %1116 = vmatmul.mubr.bf16.gmra.mrb[0].mxu0 %v922
        %v1117 = vpop.f32.mrb[0].mxu0
        %v1118 = vadd.f32 0.0, %v1117
        %v1119 = vpop.f32.mrb[0].mxu0
        %v1120 = vadd.f32 0.0, %v1119
        %v1121 = vpop.f32.mrb[0].mxu0
        %v1122 = vpop.f32.mrb[0].mxu0
        %1123 = vdwg.mxu0
        %1124 = vmatprep.subr.bf16.mxu0 %v1022
        %1125 = vmatpush1.bf16.msra.mxu0 %v1021
        %1126 = vmatprep.subr.bf16.mxu0 %v1026
        %1127 = vmatpush1.bf16.msra.mxu0 %v1025
        %1128 = vmatprep.subr.bf16.mxu0 %v1030
        %1129 = vmatpush1.bf16.msra.mxu0 %v1029
        %1130 = vmatprep.subr.bf16.mxu0 %v1034
        %1131 = vmatpush1.bf16.msra.mxu0 %v1033
        %1132 = vmatprep.subr.bf16.mxu0 %v1038
        %1133 = vmatpush1.bf16.msra.mxu0 %v1037
        %1134 = vmatprep.subr.bf16.mxu0 %v1042
        %1135 = vmatpush1.bf16.msra.mxu0 %v1041
        %1136 = vmatprep.subr.bf16.mxu0 %v1046
        %1137 = vmatpush1.bf16.msra.mxu0 %v1045
        %1138 = vmatprep.subr.bf16.mxu0 %v1050
        %1139 = vmatpush1.bf16.msra.mxu0 %v1049
        %1140 = vmatprep.subr.bf16.mxu0 0
        %1141 = vmatpush1.bf16.msra.mxu0 0
        %1142 = vmatprep.subr.bf16.mxu0 0
        %1143 = vmatpush1.bf16.msra.mxu0 0
        %1144 = vmatprep.subr.bf16.mxu0 0
        %1145 = vmatpush1.bf16.msra.mxu0 0
        %1146 = vmatprep.subr.bf16.mxu0 0
        %1147 = vmatpush1.bf16.msra.mxu0 0
        %1148 = vmatprep.subr.bf16.mxu0 0
        %1149 = vmatpush1.bf16.msra.mxu0 0
        %1150 = vmatprep.subr.bf16.mxu0 0
        %1151 = vmatpush1.bf16.msra.mxu0 0
        %1152 = vmatprep.subr.bf16.mxu0 0
        %1153 = vmatpush1.bf16.msra.mxu0 0
        %1154 = vmatprep.subr.bf16.mxu0 0
        %1155 = vmatpush1.bf16.msra.mxu0 0
        %1156 = vmatprep.mubr.bf16.mxu0 0
        %1157 = vmatmul.mubr.bf16.gmra.mrb[0].mxu0 %v922
        %v1158 = vpop.f32.mrb[0].mxu0
        %v1159 = vadd.f32 0.0, %v1158
        %v1160 = vpop.f32.mrb[0].mxu0
        %v1161 = vadd.f32 0.0, %v1160
        %v1162 = vpop.f32.mrb[0].mxu0
        %v1163 = vpop.f32.mrb[0].mxu0
        %1164 = vdwg.mxu0
        %v1167 = vunpack.c.l.b16 %v920
        %v1168 = vunpack.c.l.b16 %v921
        %vm1169 = vcmask 1041409
        %v1170 = vsel %vm1169, %v1168, %v1167
        %v1171 = vpack.c.b16 %v1170, %v1170
        %v1174 = vunpack.c.l.b16 %v565
        %v1175 = vunpack.c.h.b16 %v565
        %v1176 = vunpack.c.l.b16 %v566
        %v1177 = vunpack.c.h.b16 %v566
        %v1178 = vpack.c.b16 %v1174, %v1174
        %v1179 = vpack.c.b16 %v1175, %v1175
        %v1180 = vpack.c.b16 %v1176, %v1176
        %v1181 = vpack.c.b16 %v1177, %v1177
        %v1183 = vsel %vm878, %v1171, 0
        %vm1185 = vcmask 1043456
        %v1187 = vsel %vm1185, %v1178, 0
        %v1190 = vsel %vm1185, %v1179, 0
        %v1193 = vsel %vm1185, %v1180, 0
        %v1196 = vsel %vm1185, %v1181, 0
        %1198 = vmatprep.subr.bf16.mxu0 %v1190
        %1199 = vmatpush1.bf16.msra.mxu0 %v1187
        %1200 = vmatprep.subr.bf16.mxu0 0
        %1201 = vmatpush1.bf16.msra.mxu0 0
        %1202 = vmatprep.subr.bf16.mxu0 0
        %1203 = vmatpush1.bf16.msra.mxu0 0
        %1204 = vmatprep.subr.bf16.mxu0 0
        %1205 = vmatpush1.bf16.msra.mxu0 0
        %1206 = vmatprep.subr.bf16.mxu0 0
        %1207 = vmatpush1.bf16.msra.mxu0 0
        %1208 = vmatprep.subr.bf16.mxu0 0
        %1209 = vmatpush1.bf16.msra.mxu0 0
        %1210 = vmatprep.subr.bf16.mxu0 0
        %1211 = vmatpush1.bf16.msra.mxu0 0
        %1212 = vmatprep.subr.bf16.mxu0 0
        %1213 = vmatpush1.bf16.msra.mxu0 0
        %1214 = vmatprep.subr.bf16.mxu0 0
        %1215 = vmatpush1.bf16.msra.mxu0 0
        %1216 = vmatprep.subr.bf16.mxu0 0
        %1217 = vmatpush1.bf16.msra.mxu0 0
        %1218 = vmatprep.subr.bf16.mxu0 0
        %1219 = vmatpush1.bf16.msra.mxu0 0
        %1220 = vmatprep.subr.bf16.mxu0 0
        %1221 = vmatpush1.bf16.msra.mxu0 0
        %1222 = vmatprep.subr.bf16.mxu0 0
        %1223 = vmatpush1.bf16.msra.mxu0 0
        %1224 = vmatprep.subr.bf16.mxu0 0
        %1225 = vmatpush1.bf16.msra.mxu0 0
        %1226 = vmatprep.subr.bf16.mxu0 0
        %1227 = vmatpush1.bf16.msra.mxu0 0
        %1228 = vmatprep.subr.bf16.mxu0 0
        %1229 = vmatpush1.bf16.msra.mxu0 0
        %1230 = vmatprep.mubr.bf16.mxu0 0
        %1231 = vmatmul.mubr.bf16.gmra.mrb[0].mxu0 %v1183
        %v1232 = vpop.f32.mrb[0].mxu0
        %v1233 = vadd.f32 %v1118, %v1232
        %v1234 = vpop.f32.mrb[0].mxu0
        %v1235 = vadd.f32 %v1120, %v1234
        %v1236 = vpop.f32.mrb[0].mxu0
        %v1237 = vpop.f32.mrb[0].mxu0
        %1238 = vdwg.mxu0
        %1239 = vmatprep.subr.bf16.mxu0 %v1196
        %1240 = vmatpush1.bf16.msra.mxu0 %v1193
        %1241 = vmatprep.subr.bf16.mxu0 0
        %1242 = vmatpush1.bf16.msra.mxu0 0
        %1243 = vmatprep.subr.bf16.mxu0 0
        %1244 = vmatpush1.bf16.msra.mxu0 0
        %1245 = vmatprep.subr.bf16.mxu0 0
        %1246 = vmatpush1.bf16.msra.mxu0 0
        %1247 = vmatprep.subr.bf16.mxu0 0
        %1248 = vmatpush1.bf16.msra.mxu0 0
        %1249 = vmatprep.subr.bf16.mxu0 0
        %1250 = vmatpush1.bf16.msra.mxu0 0
        %1251 = vmatprep.subr.bf16.mxu0 0
        %1252 = vmatpush1.bf16.msra.mxu0 0
        %1253 = vmatprep.subr.bf16.mxu0 0
        %1254 = vmatpush1.bf16.msra.mxu0 0
        %1255 = vmatprep.subr.bf16.mxu0 0
        %1256 = vmatpush1.bf16.msra.mxu0 0
        %1257 = vmatprep.subr.bf16.mxu0 0
        %1258 = vmatpush1.bf16.msra.mxu0 0
        %1259 = vmatprep.subr.bf16.mxu0 0
        %1260 = vmatpush1.bf16.msra.mxu0 0
        %1261 = vmatprep.subr.bf16.mxu0 0
        %1262 = vmatpush1.bf16.msra.mxu0 0
        %1263 = vmatprep.subr.bf16.mxu0 0
        %1264 = vmatpush1.bf16.msra.mxu0 0
        %1265 = vmatprep.subr.bf16.mxu0 0
        %1266 = vmatpush1.bf16.msra.mxu0 0
        %1267 = vmatprep.subr.bf16.mxu0 0
        %1268 = vmatpush1.bf16.msra.mxu0 0
        %1269 = vmatprep.subr.bf16.mxu0 0
        %1270 = vmatpush1.bf16.msra.mxu0 0
        %1271 = vmatprep.mubr.bf16.mxu0 0
        %1272 = vmatmul.mubr.bf16.gmra.mrb[0].mxu0 %v1183
        %v1273 = vpop.f32.mrb[0].mxu0
        %v1274 = vadd.f32 %v1159, %v1273
        %v1275 = vpop.f32.mrb[0].mxu0
        %v1276 = vadd.f32 %v1161, %v1275
        %v1277 = vpop.f32.mrb[0].mxu0
        %v1278 = vpop.f32.mrb[0].mxu0
        %1279 = vdwg.mxu0
        %v1281 = vlaneseq
        %v1282 = vshrl.u32 %v1281, 7
        %v1283 = vsub.s32 0, %v1282
        %v1284 = vrot.slane %v663, %v1283
        %v1285 = vlaneseq
        %v1286 = vshrl.u32 %v1285, 7
        %v1287 = vsub.s32 1, %v1286
        %v1288 = vrot.slane %v663, %v1287
        %v1289 = vlaneseq
        %v1290 = vshrl.u32 %v1289, 7
        %v1291 = vsub.s32 2, %v1290
        %v1292 = vrot.slane %v663, %v1291
        %v1293 = vlaneseq
        %v1294 = vshrl.u32 %v1293, 7
        %v1295 = vsub.s32 3, %v1294
        %v1296 = vrot.slane %v663, %v1295
        %v1301 = vadd.f32 %v1233, %v1284
        %v1302 = vadd.f32 %v1235, %v1288
        %v1303 = vadd.f32 %v1274, %v1292
        %v1304 = vadd.f32 %v1276, %v1296
        %v1305 = vmul.f32 %v1301, 0.5
        %v1306 = vtanh.pop %v1305
        %v1307 = vadd.f32 %v1306, 1.0
        %v1308 = vmul.f32 %v1307, 0.5
        %v1309 = vmul.f32 %v1302, 0.5
        %v1310 = vtanh.pop %v1309
        %v1311 = vadd.f32 %v1310, 1.0
        %v1312 = vmul.f32 %v1311, 0.5
        %v1313 = vtanh.pop %v1303
        %v1314 = vmul.f32 %v1304, 0.5
        %v1315 = vtanh.pop %v1314
        %v1316 = vadd.f32 %v1315, 1.0
        %v1317 = vmul.f32 %v1316, 0.5
        %v1318 = vmul.f32 %v1312, %v919
        %v1319 = vmul.f32 %v1308, %v1313
        %v1320 = vadd.f32 %v1318, %v1319
        %v1321 = vtanh.pop %v1320
        %v1322 = vmul.f32 %v1317, %v1321
        %1323 = vst [vmem:[#allocation2] sm:$0x3] %v1322
        %1324 = vst [vmem:[#allocation3] sm:$0x3] %v1320
        %v1325 = vld [vmem:[%s665] sm:$0x3]
        %s1326 = scalar_lea.vmem [#allocation3], 2
        %v1327 = vld [vmem:[%s1326] sm:$0x3]
        %v1328 = vpack.c.bf16 %v1322, %v1322
        %v1329 = vpack.c.bf16 %v1325, %v1325
        %v1362 = vunpack.c.l.b16 %v631
        %v1363 = vunpack.c.h.b16 %v631
        %v1364 = vunpack.c.l.b16 %v632
        %v1365 = vunpack.c.h.b16 %v632
        %v1366 = vunpack.c.l.b16 %v633
        %v1367 = vunpack.c.h.b16 %v633
        %v1368 = vunpack.c.l.b16 %v634
        %v1369 = vunpack.c.h.b16 %v634
        %v1370 = vunpack.c.l.b16 %v635
        %v1371 = vunpack.c.h.b16 %v635
        %v1372 = vunpack.c.l.b16 %v636
        %v1373 = vunpack.c.h.b16 %v636
        %v1374 = vunpack.c.l.b16 %v637
        %v1375 = vunpack.c.h.b16 %v637
        %v1376 = vunpack.c.l.b16 %v638
        %v1377 = vunpack.c.h.b16 %v638
        %v1378 = vunpack.c.l.b16 %v639
        %v1379 = vunpack.c.h.b16 %v639
        %v1380 = vunpack.c.l.b16 %v640
        %v1381 = vunpack.c.h.b16 %v640
        %v1382 = vunpack.c.l.b16 %v641
        %v1383 = vunpack.c.h.b16 %v641
        %v1384 = vunpack.c.l.b16 %v642
        %v1385 = vunpack.c.h.b16 %v642
        %v1386 = vunpack.c.l.b16 %v643
        %v1387 = vunpack.c.h.b16 %v643
        %v1388 = vunpack.c.l.b16 %v644
        %v1389 = vunpack.c.h.b16 %v644
        %v1390 = vunpack.c.l.b16 %v645
        %v1391 = vunpack.c.h.b16 %v645
        %v1392 = vunpack.c.l.b16 %v646
        %v1393 = vunpack.c.h.b16 %v646
        %v1394 = vunpack.c.l.b16 %v647
        %v1395 = vunpack.c.h.b16 %v647
        %v1396 = vunpack.c.l.b16 %v648
        %v1397 = vunpack.c.h.b16 %v648
        %v1398 = vunpack.c.l.b16 %v649
        %v1399 = vunpack.c.h.b16 %v649
        %v1400 = vunpack.c.l.b16 %v650
        %v1401 = vunpack.c.h.b16 %v650
        %v1402 = vunpack.c.l.b16 %v651
        %v1403 = vunpack.c.h.b16 %v651
        %v1404 = vunpack.c.l.b16 %v652
        %v1405 = vunpack.c.h.b16 %v652
        %v1406 = vunpack.c.l.b16 %v653
        %v1407 = vunpack.c.h.b16 %v653
        %v1408 = vunpack.c.l.b16 %v654
        %v1409 = vunpack.c.h.b16 %v654
        %v1410 = vunpack.c.l.b16 %v655
        %v1411 = vunpack.c.h.b16 %v655
        %v1412 = vunpack.c.l.b16 %v656
        %v1413 = vunpack.c.h.b16 %v656
        %v1414 = vunpack.c.l.b16 %v657
        %v1415 = vunpack.c.h.b16 %v657
        %v1416 = vunpack.c.l.b16 %v658
        %v1417 = vunpack.c.h.b16 %v658
        %v1418 = vunpack.c.l.b16 %v659
        %v1419 = vunpack.c.h.b16 %v659
        %v1420 = vunpack.c.l.b16 %v660
        %v1421 = vunpack.c.h.b16 %v660
        %v1422 = vunpack.c.l.b16 %v661
        %v1423 = vunpack.c.h.b16 %v661
        %v1424 = vunpack.c.l.b16 %v662
        %v1425 = vunpack.c.h.b16 %v662
        %v1426 = vpack.c.b16 %v1366, %v1362
        %v1427 = vpack.c.b16 %v1367, %v1363
        %v1428 = vpack.c.b16 %v1368, %v1364
        %v1429 = vpack.c.b16 %v1369, %v1365
        %v1430 = vpack.c.b16 %v1374, %v1370
        %v1431 = vpack.c.b16 %v1375, %v1371
        %v1432 = vpack.c.b16 %v1376, %v1372
        %v1433 = vpack.c.b16 %v1377, %v1373
        %v1434 = vpack.c.b16 %v1382, %v1378
        %v1435 = vpack.c.b16 %v1383, %v1379
        %v1436 = vpack.c.b16 %v1384, %v1380
        %v1437 = vpack.c.b16 %v1385, %v1381
        %v1438 = vpack.c.b16 %v1390, %v1386
        %v1439 = vpack.c.b16 %v1391, %v1387
        %v1440 = vpack.c.b16 %v1392, %v1388
        %v1441 = vpack.c.b16 %v1393, %v1389
        %v1442 = vpack.c.b16 %v1398, %v1394
        %v1443 = vpack.c.b16 %v1399, %v1395
        %v1444 = vpack.c.b16 %v1400, %v1396
        %v1445 = vpack.c.b16 %v1401, %v1397
        %v1446 = vpack.c.b16 %v1406, %v1402
        %v1447 = vpack.c.b16 %v1407, %v1403
        %v1448 = vpack.c.b16 %v1408, %v1404
        %v1449 = vpack.c.b16 %v1409, %v1405
        %v1450 = vpack.c.b16 %v1414, %v1410
        %v1451 = vpack.c.b16 %v1415, %v1411
        %v1452 = vpack.c.b16 %v1416, %v1412
        %v1453 = vpack.c.b16 %v1417, %v1413
        %v1454 = vpack.c.b16 %v1422, %v1418
        %v1455 = vpack.c.b16 %v1423, %v1419
        %v1456 = vpack.c.b16 %v1424, %v1420
        %v1457 = vpack.c.b16 %v1425, %v1421
        %1490 = vmatprep.subr.bf16.mxu0 %v1427
        %1491 = vmatpush1.bf16.msra.mxu0 %v1426
        %1492 = vmatprep.subr.bf16.mxu0 %v1431
        %1493 = vmatpush1.bf16.msra.mxu0 %v1430
        %1494 = vmatprep.subr.bf16.mxu0 %v1435
        %1495 = vmatpush1.bf16.msra.mxu0 %v1434
        %1496 = vmatprep.subr.bf16.mxu0 %v1439
        %1497 = vmatpush1.bf16.msra.mxu0 %v1438
        %1498 = vmatprep.subr.bf16.mxu0 %v1443
        %1499 = vmatpush1.bf16.msra.mxu0 %v1442
        %1500 = vmatprep.subr.bf16.mxu0 %v1447
        %1501 = vmatpush1.bf16.msra.mxu0 %v1446
        %1502 = vmatprep.subr.bf16.mxu0 %v1451
        %1503 = vmatpush1.bf16.msra.mxu0 %v1450
        %1504 = vmatprep.subr.bf16.mxu0 %v1455
        %1505 = vmatpush1.bf16.msra.mxu0 %v1454
        %1506 = vmatprep.subr.bf16.mxu0 0
        %1507 = vmatpush1.bf16.msra.mxu0 0
        %1508 = vmatprep.subr.bf16.mxu0 0
        %1509 = vmatpush1.bf16.msra.mxu0 0
        %1510 = vmatprep.subr.bf16.mxu0 0
        %1511 = vmatpush1.bf16.msra.mxu0 0
        %1512 = vmatprep.subr.bf16.mxu0 0
        %1513 = vmatpush1.bf16.msra.mxu0 0
        %1514 = vmatprep.subr.bf16.mxu0 0
        %1515 = vmatpush1.bf16.msra.mxu0 0
        %1516 = vmatprep.subr.bf16.mxu0 0
        %1517 = vmatpush1.bf16.msra.mxu0 0
        %1518 = vmatprep.subr.bf16.mxu0 0
        %1519 = vmatpush1.bf16.msra.mxu0 0
        %1520 = vmatprep.subr.bf16.mxu0 0
        %1521 = vmatpush1.bf16.msra.mxu0 0
        %1522 = vmatprep.mubr.bf16.mxu0 0
        %1523 = vmatmul.mubr.bf16.gmra.mrb[0].mxu0 %v1329
        %v1524 = vpop.f32.mrb[0].mxu0
        %v1525 = vadd.f32 0.0, %v1524
        %v1526 = vpop.f32.mrb[0].mxu0
        %v1527 = vadd.f32 0.0, %v1526
        %v1528 = vpop.f32.mrb[0].mxu0
        %v1529 = vpop.f32.mrb[0].mxu0
        %1530 = vdwg.mxu0
        %1531 = vmatprep.subr.bf16.mxu0 %v1429
        %1532 = vmatpush1.bf16.msra.mxu0 %v1428
        %1533 = vmatprep.subr.bf16.mxu0 %v1433
        %1534 = vmatpush1.bf16.msra.mxu0 %v1432
        %1535 = vmatprep.subr.bf16.mxu0 %v1437
        %1536 = vmatpush1.bf16.msra.mxu0 %v1436
        %1537 = vmatprep.subr.bf16.mxu0 %v1441
        %1538 = vmatpush1.bf16.msra.mxu0 %v1440
        %1539 = vmatprep.subr.bf16.mxu0 %v1445
        %1540 = vmatpush1.bf16.msra.mxu0 %v1444
        %1541 = vmatprep.subr.bf16.mxu0 %v1449
        %1542 = vmatpush1.bf16.msra.mxu0 %v1448
        %1543 = vmatprep.subr.bf16.mxu0 %v1453
        %1544 = vmatpush1.bf16.msra.mxu0 %v1452
        %1545 = vmatprep.subr.bf16.mxu0 %v1457
        %1546 = vmatpush1.bf16.msra.mxu0 %v1456
        %1547 = vmatprep.subr.bf16.mxu0 0
        %1548 = vmatpush1.bf16.msra.mxu0 0
        %1549 = vmatprep.subr.bf16.mxu0 0
        %1550 = vmatpush1.bf16.msra.mxu0 0
        %1551 = vmatprep.subr.bf16.mxu0 0
        %1552 = vmatpush1.bf16.msra.mxu0 0
        %1553 = vmatprep.subr.bf16.mxu0 0
        %1554 = vmatpush1.bf16.msra.mxu0 0
        %1555 = vmatprep.subr.bf16.mxu0 0
        %1556 = vmatpush1.bf16.msra.mxu0 0
        %1557 = vmatprep.subr.bf16.mxu0 0
        %1558 = vmatpush1.bf16.msra.mxu0 0
        %1559 = vmatprep.subr.bf16.mxu0 0
        %1560 = vmatpush1.bf16.msra.mxu0 0
        %1561 = vmatprep.subr.bf16.mxu0 0
        %1562 = vmatpush1.bf16.msra.mxu0 0
        %1563 = vmatprep.mubr.bf16.mxu0 0
        %1564 = vmatmul.mubr.bf16.gmra.mrb[0].mxu0 %v1329
        %v1565 = vpop.f32.mrb[0].mxu0
        %v1566 = vadd.f32 0.0, %v1565
        %v1567 = vpop.f32.mrb[0].mxu0
        %v1568 = vadd.f32 0.0, %v1567
        %v1569 = vpop.f32.mrb[0].mxu0
        %v1570 = vpop.f32.mrb[0].mxu0
        %1571 = vdwg.mxu0
        %v1604 = vunpack.c.l.b16 %v567
        %v1605 = vunpack.c.h.b16 %v567
        %v1606 = vunpack.c.l.b16 %v568
        %v1607 = vunpack.c.h.b16 %v568
        %v1608 = vunpack.c.l.b16 %v569
        %v1609 = vunpack.c.h.b16 %v569
        %v1610 = vunpack.c.l.b16 %v570
        %v1611 = vunpack.c.h.b16 %v570
        %v1612 = vunpack.c.l.b16 %v571
        %v1613 = vunpack.c.h.b16 %v571
        %v1614 = vunpack.c.l.b16 %v572
        %v1615 = vunpack.c.h.b16 %v572
        %v1616 = vunpack.c.l.b16 %v573
        %v1617 = vunpack.c.h.b16 %v573
        %v1618 = vunpack.c.l.b16 %v574
        %v1619 = vunpack.c.h.b16 %v574
        %v1620 = vunpack.c.l.b16 %v575
        %v1621 = vunpack.c.h.b16 %v575
        %v1622 = vunpack.c.l.b16 %v576
        %v1623 = vunpack.c.h.b16 %v576
        %v1624 = vunpack.c.l.b16 %v577
        %v1625 = vunpack.c.h.b16 %v577
        %v1626 = vunpack.c.l.b16 %v578
        %v1627 = vunpack.c.h.b16 %v578
        %v1628 = vunpack.c.l.b16 %v579
        %v1629 = vunpack.c.h.b16 %v579
        %v1630 = vunpack.c.l.b16 %v580
        %v1631 = vunpack.c.h.b16 %v580
        %v1632 = vunpack.c.l.b16 %v581
        %v1633 = vunpack.c.h.b16 %v581
        %v1634 = vunpack.c.l.b16 %v582
        %v1635 = vunpack.c.h.b16 %v582
        %v1636 = vunpack.c.l.b16 %v583
        %v1637 = vunpack.c.h.b16 %v583
        %v1638 = vunpack.c.l.b16 %v584
        %v1639 = vunpack.c.h.b16 %v584
        %v1640 = vunpack.c.l.b16 %v585
        %v1641 = vunpack.c.h.b16 %v585
        %v1642 = vunpack.c.l.b16 %v586
        %v1643 = vunpack.c.h.b16 %v586
        %v1644 = vunpack.c.l.b16 %v587
        %v1645 = vunpack.c.h.b16 %v587
        %v1646 = vunpack.c.l.b16 %v588
        %v1647 = vunpack.c.h.b16 %v588
        %v1648 = vunpack.c.l.b16 %v589
        %v1649 = vunpack.c.h.b16 %v589
        %v1650 = vunpack.c.l.b16 %v590
        %v1651 = vunpack.c.h.b16 %v590
        %v1652 = vunpack.c.l.b16 %v591
        %v1653 = vunpack.c.h.b16 %v591
        %v1654 = vunpack.c.l.b16 %v592
        %v1655 = vunpack.c.h.b16 %v592
        %v1656 = vunpack.c.l.b16 %v593
        %v1657 = vunpack.c.h.b16 %v593
        %v1658 = vunpack.c.l.b16 %v594
        %v1659 = vunpack.c.h.b16 %v594
        %v1660 = vunpack.c.l.b16 %v595
        %v1661 = vunpack.c.h.b16 %v595
        %v1662 = vunpack.c.l.b16 %v596
        %v1663 = vunpack.c.h.b16 %v596
        %v1664 = vunpack.c.l.b16 %v597
        %v1665 = vunpack.c.h.b16 %v597
        %v1666 = vunpack.c.l.b16 %v598
        %v1667 = vunpack.c.h.b16 %v598
        %v1668 = vpack.c.b16 %v1608, %v1604
        %v1669 = vpack.c.b16 %v1609, %v1605
        %v1670 = vpack.c.b16 %v1610, %v1606
        %v1671 = vpack.c.b16 %v1611, %v1607
        %v1672 = vpack.c.b16 %v1616, %v1612
        %v1673 = vpack.c.b16 %v1617, %v1613
        %v1674 = vpack.c.b16 %v1618, %v1614
        %v1675 = vpack.c.b16 %v1619, %v1615
        %v1676 = vpack.c.b16 %v1624, %v1620
        %v1677 = vpack.c.b16 %v1625, %v1621
        %v1678 = vpack.c.b16 %v1626, %v1622
        %v1679 = vpack.c.b16 %v1627, %v1623
        %v1680 = vpack.c.b16 %v1632, %v1628
        %v1681 = vpack.c.b16 %v1633, %v1629
        %v1682 = vpack.c.b16 %v1634, %v1630
        %v1683 = vpack.c.b16 %v1635, %v1631
        %v1684 = vpack.c.b16 %v1640, %v1636
        %v1685 = vpack.c.b16 %v1641, %v1637
        %v1686 = vpack.c.b16 %v1642, %v1638
        %v1687 = vpack.c.b16 %v1643, %v1639
        %v1688 = vpack.c.b16 %v1648, %v1644
        %v1689 = vpack.c.b16 %v1649, %v1645
        %v1690 = vpack.c.b16 %v1650, %v1646
        %v1691 = vpack.c.b16 %v1651, %v1647
        %v1692 = vpack.c.b16 %v1656, %v1652
        %v1693 = vpack.c.b16 %v1657, %v1653
        %v1694 = vpack.c.b16 %v1658, %v1654
        %v1695 = vpack.c.b16 %v1659, %v1655
        %v1696 = vpack.c.b16 %v1664, %v1660
        %v1697 = vpack.c.b16 %v1665, %v1661
        %v1698 = vpack.c.b16 %v1666, %v1662
        %v1699 = vpack.c.b16 %v1667, %v1663
        %1732 = vmatprep.subr.bf16.mxu0 %v1669
        %1733 = vmatpush1.bf16.msra.mxu0 %v1668
        %1734 = vmatprep.subr.bf16.mxu0 %v1673
        %1735 = vmatpush1.bf16.msra.mxu0 %v1672
        %1736 = vmatprep.subr.bf16.mxu0 %v1677
        %1737 = vmatpush1.bf16.msra.mxu0 %v1676
        %1738 = vmatprep.subr.bf16.mxu0 %v1681
        %1739 = vmatpush1.bf16.msra.mxu0 %v1680
        %1740 = vmatprep.subr.bf16.mxu0 %v1685
        %1741 = vmatpush1.bf16.msra.mxu0 %v1684
        %1742 = vmatprep.subr.bf16.mxu0 %v1689
        %1743 = vmatpush1.bf16.msra.mxu0 %v1688
        %1744 = vmatprep.subr.bf16.mxu0 %v1693
        %1745 = vmatpush1.bf16.msra.mxu0 %v1692
        %1746 = vmatprep.subr.bf16.mxu0 %v1697
        %1747 = vmatpush1.bf16.msra.mxu0 %v1696
        %1748 = vmatprep.subr.bf16.mxu0 0
        %1749 = vmatpush1.bf16.msra.mxu0 0
        %1750 = vmatprep.subr.bf16.mxu0 0
        %1751 = vmatpush1.bf16.msra.mxu0 0
        %1752 = vmatprep.subr.bf16.mxu0 0
        %1753 = vmatpush1.bf16.msra.mxu0 0
        %1754 = vmatprep.subr.bf16.mxu0 0
        %1755 = vmatpush1.bf16.msra.mxu0 0
        %1756 = vmatprep.subr.bf16.mxu0 0
        %1757 = vmatpush1.bf16.msra.mxu0 0
        %1758 = vmatprep.subr.bf16.mxu0 0
        %1759 = vmatpush1.bf16.msra.mxu0 0
        %1760 = vmatprep.subr.bf16.mxu0 0
        %1761 = vmatpush1.bf16.msra.mxu0 0
        %1762 = vmatprep.subr.bf16.mxu0 0
        %1763 = vmatpush1.bf16.msra.mxu0 0
        %1764 = vmatprep.mubr.bf16.mxu0 0
        %1765 = vmatmul.mubr.bf16.gmra.mrb[0].mxu0 %v1328
        %v1766 = vpop.f32.mrb[0].mxu0
        %v1767 = vadd.f32 %v1525, %v1766
        %v1768 = vpop.f32.mrb[0].mxu0
        %v1769 = vadd.f32 %v1527, %v1768
        %v1770 = vpop.f32.mrb[0].mxu0
        %v1771 = vpop.f32.mrb[0].mxu0
        %1772 = vdwg.mxu0
        %1773 = vmatprep.subr.bf16.mxu0 %v1671
        %1774 = vmatpush1.bf16.msra.mxu0 %v1670
        %1775 = vmatprep.subr.bf16.mxu0 %v1675
        %1776 = vmatpush1.bf16.msra.mxu0 %v1674
        %1777 = vmatprep.subr.bf16.mxu0 %v1679
        %1778 = vmatpush1.bf16.msra.mxu0 %v1678
        %1779 = vmatprep.subr.bf16.mxu0 %v1683
        %1780 = vmatpush1.bf16.msra.mxu0 %v1682
        %1781 = vmatprep.subr.bf16.mxu0 %v1687
        %1782 = vmatpush1.bf16.msra.mxu0 %v1686
        %1783 = vmatprep.subr.bf16.mxu0 %v1691
        %1784 = vmatpush1.bf16.msra.mxu0 %v1690
        %1785 = vmatprep.subr.bf16.mxu0 %v1695
        %1786 = vmatpush1.bf16.msra.mxu0 %v1694
        %1787 = vmatprep.subr.bf16.mxu0 %v1699
        %1788 = vmatpush1.bf16.msra.mxu0 %v1698
        %1789 = vmatprep.subr.bf16.mxu0 0
        %1790 = vmatpush1.bf16.msra.mxu0 0
        %1791 = vmatprep.subr.bf16.mxu0 0
        %1792 = vmatpush1.bf16.msra.mxu0 0
        %1793 = vmatprep.subr.bf16.mxu0 0
        %1794 = vmatpush1.bf16.msra.mxu0 0
        %1795 = vmatprep.subr.bf16.mxu0 0
        %1796 = vmatpush1.bf16.msra.mxu0 0
        %1797 = vmatprep.subr.bf16.mxu0 0
        %1798 = vmatpush1.bf16.msra.mxu0 0
        %1799 = vmatprep.subr.bf16.mxu0 0
        %1800 = vmatpush1.bf16.msra.mxu0 0
        %1801 = vmatprep.subr.bf16.mxu0 0
        %1802 = vmatpush1.bf16.msra.mxu0 0
        %1803 = vmatprep.subr.bf16.mxu0 0
        %1804 = vmatpush1.bf16.msra.mxu0 0
        %1805 = vmatprep.mubr.bf16.mxu0 0
        %1806 = vmatmul.mubr.bf16.gmra.mrb[0].mxu0 %v1328
        %v1807 = vpop.f32.mrb[0].mxu0
        %v1808 = vadd.f32 %v1566, %v1807
        %v1809 = vpop.f32.mrb[0].mxu0
        %v1810 = vadd.f32 %v1568, %v1809
        %v1811 = vpop.f32.mrb[0].mxu0
        %v1812 = vpop.f32.mrb[0].mxu0
        %1813 = vdwg.mxu0
        %v1815 = vlaneseq
        %v1816 = vshrl.u32 %v1815, 7
        %v1817 = vsub.s32 0, %v1816
        %v1818 = vrot.slane %v664, %v1817
        %v1819 = vlaneseq
        %v1820 = vshrl.u32 %v1819, 7
        %v1821 = vsub.s32 1, %v1820
        %v1822 = vrot.slane %v664, %v1821
        %v1823 = vlaneseq
        %v1824 = vshrl.u32 %v1823, 7
        %v1825 = vsub.s32 2, %v1824
        %v1826 = vrot.slane %v664, %v1825
        %v1827 = vlaneseq
        %v1828 = vshrl.u32 %v1827, 7
        %v1829 = vsub.s32 3, %v1828
        %v1830 = vrot.slane %v664, %v1829
        %v1835 = vadd.f32 %v1767, %v1818
        %v1836 = vadd.f32 %v1769, %v1822
        %v1837 = vadd.f32 %v1808, %v1826
        %v1838 = vadd.f32 %v1810, %v1830
        %v1839 = vmul.f32 %v1835, 0.5
        %v1840 = vtanh.pop %v1839
        %v1841 = vadd.f32 %v1840, 1.0
        %v1842 = vmul.f32 %v1841, 0.5
        %v1843 = vmul.f32 %v1836, 0.5
        %v1844 = vtanh.pop %v1843
        %v1845 = vadd.f32 %v1844, 1.0
        %v1846 = vmul.f32 %v1845, 0.5
        %v1847 = vtanh.pop %v1837
        %v1848 = vmul.f32 %v1838, 0.5
        %v1849 = vtanh.pop %v1848
        %v1850 = vadd.f32 %v1849, 1.0
        %v1851 = vmul.f32 %v1850, 0.5
        %v1852 = vmul.f32 %v1846, %v1327
        %v1853 = vmul.f32 %v1842, %v1847
        %v1854 = vadd.f32 %v1852, %v1853
        %v1855 = vtanh.pop %v1854
        %v1856 = vmul.f32 %v1851, %v1855
        %1857 = vst [vmem:[%s665] sm:$0x3] %v1856
        %1858 = vst [vmem:[%s1326] sm:$0x3] %v1854
        %v1859 = vld [vmem:[%s665] sm:$0x3]
        %v1860 = vpack.c.bf16 %v1859, %v1859
        %1861 = vmatprep.subr.bf16.mxu0 0
        %1862 = vmatpush1.bf16.msra.mxu0 %v706
        %1863 = vmatprep.subr.bf16.mxu0 0
        %1864 = vmatpush1.bf16.msra.mxu0 %v707
        %1865 = vmatprep.subr.bf16.mxu0 0
        %1866 = vmatpush1.bf16.msra.mxu0 %v708
        %1867 = vmatprep.subr.bf16.mxu0 0
        %1868 = vmatpush1.bf16.msra.mxu0 %v709
        %1869 = vmatprep.subr.bf16.mxu0 0
        %1870 = vmatpush1.bf16.msra.mxu0 %v710
        %1871 = vmatprep.subr.bf16.mxu0 0
        %1872 = vmatpush1.bf16.msra.mxu0 %v711
        %1873 = vmatprep.subr.bf16.mxu0 0
        %1874 = vmatpush1.bf16.msra.mxu0 %v712
        %1875 = vmatprep.subr.bf16.mxu0 0
        %1876 = vmatpush1.bf16.msra.mxu0 %v713
        %1877 = vmatprep.subr.bf16.mxu0 0
        %1878 = vmatpush1.bf16.msra.mxu0 0
        %1879 = vmatprep.subr.bf16.mxu0 0
        %1880 = vmatpush1.bf16.msra.mxu0 0
        %1881 = vmatprep.subr.bf16.mxu0 0
        %1882 = vmatpush1.bf16.msra.mxu0 0
        %1883 = vmatprep.subr.bf16.mxu0 0
        %1884 = vmatpush1.bf16.msra.mxu0 0
        %1885 = vmatprep.subr.bf16.mxu0 0
        %1886 = vmatpush1.bf16.msra.mxu0 0
        %1887 = vmatprep.subr.bf16.mxu0 0
        %1888 = vmatpush1.bf16.msra.mxu0 0
        %1889 = vmatprep.subr.bf16.mxu0 0
        %1890 = vmatpush1.bf16.msra.mxu0 0
        %1891 = vmatprep.subr.bf16.mxu0 0
        %1892 = vmatpush1.bf16.msra.mxu0 0
        %1893 = vmatprep.mubr.bf16.mxu0 0
        %1894 = vmatmul.mubr.bf16.gmra.mrb[0].mxu0 %v1860
        %v1895 = vpop.f32.mrb[0].mxu0
        %v1896 = vadd.f32 %v672, %v1895
        %v1897 = vpop.f32.mrb[0].mxu0
        %v1898 = vpop.f32.mrb[0].mxu0
        %v1899 = vpop.f32.mrb[0].mxu0
        %1900 = vdwg.mxu0
        %v1901 = vsel %vm762, %v1896, -inf
        %1902 = vmax.xlane.f32.xlu0 %v1901
        %v1903 = vpop.xlane.xlu0 %1902
        %v1904 = vsub.f32 %v1896, %v1903
        %v1905 = vmul.f32 %v1904, 1.442695
        %v1906 = vpow.pop %v1905
        %v1907 = vsel %vm762, %v1906, 0.0
        %1908 = vadd.xlane.f32.xlu0 %v1907
        %v1909 = vpop.xlane.xlu0 %1908
        %v1910 = vrcp.pop %v1909
        %v1911 = vmul.f32 %v1906, %v1910
        %s1912 = scalar_lea.vmem %s517, 56
        %v1913 = vld [vmem:[%s1912] sm:$0xf]
        %v1914 = vld [vmem:[%s1912 + $0x4] sm:$0xf]
        %v1915 = vld [vmem:[%s1912 + $0x8] sm:$0xf]
        %v1916 = vld [vmem:[%s1912 + $0xc] sm:$0xf]
        %v1917 = vld [vmem:[%s1912 + $0x10] sm:$0xf]
        %v1918 = vld [vmem:[%s1912 + $0x14] sm:$0xf]
        %v1919 = vld [vmem:[%s1912 + $0x18] sm:$0x1]
        %v1920 = vld [vmem:[%s1912 + $0x1c] sm:$0xf]
        %v1921 = vld [vmem:[%s1912 + $0x20] sm:$0xf]
        %v1922 = vld [vmem:[%s1912 + $0x24] sm:$0xf]
        %v1923 = vld [vmem:[%s1912 + $0x28] sm:$0xf]
        %v1924 = vld [vmem:[%s1912 + $0x2c] sm:$0xf]
        %v1925 = vld [vmem:[%s1912 + $0x30] sm:$0xf]
        %v1926 = vld [vmem:[%s1912 + $0x34] sm:$0x1]
        %v1927 = vunpack.c.l.bf16 %v1913
        %v1928 = vunpack.c.l.bf16 %v1914
        %v1929 = vunpack.c.l.bf16 %v1915
        %v1930 = vunpack.c.l.bf16 %v1916
        %v1931 = vunpack.c.l.bf16 %v1917
        %v1932 = vunpack.c.l.bf16 %v1918
        %v1933 = vunpack.c.l.bf16 %v1919
        %v1934 = vunpack.c.l.bf16 %v1920
        %v1935 = vunpack.c.l.bf16 %v1921
        %v1936 = vunpack.c.l.bf16 %v1922
        %v1937 = vunpack.c.l.bf16 %v1923
        %v1938 = vunpack.c.l.bf16 %v1924
        %v1939 = vunpack.c.l.bf16 %v1925
        %v1940 = vunpack.c.l.bf16 %v1926
        %v1941 = vlaneseq
        %v1942 = vshrl.u32 %v1941, 7
        %v1943 = vsub.s32 0, %v1942
        %v1944 = vrot.slane %v1911, %v1943
        %1946 = vbcast.lane.b32.xlu0 %v1944, 256
        %v1947 = vpop.permute.xlu0 %1946
        %s1949 = sor.u32 256, 8
        %1950 = vbcast.lane.b32.xlu0 %v1944, %s1949
        %v1951 = vpop.permute.xlu0 %1950
        %s1953 = sor.u32 256, 16
        %1954 = vbcast.lane.b32.xlu0 %v1944, %s1953
        %v1955 = vpop.permute.xlu0 %1954
        %s1957 = sor.u32 256, 24
        %1958 = vbcast.lane.b32.xlu0 %v1944, %s1957
        %v1959 = vpop.permute.xlu0 %1958
        %s1961 = sor.u32 256, 32
        %1962 = vbcast.lane.b32.xlu0 %v1944, %s1961
        %v1963 = vpop.permute.xlu0 %1962
        %s1965 = sor.u32 256, 40
        %1966 = vbcast.lane.b32.xlu0 %v1944, %s1965
        %v1967 = vpop.permute.xlu0 %1966
        %s1969 = sor.u32 256, 48
        %1970 = vbcast.lane.b32.xlu0 %v1944, %s1969
        %v1971 = vpop.permute.xlu0 %1970
        %v1972 = vlaneseq
        %v1973 = vshrl.u32 %v1972, 7
        %v1974 = vsub.s32 1, %v1973
        %v1975 = vrot.slane %v1911, %v1974
        %1977 = vbcast.lane.b32.xlu0 %v1975, 256
        %v1978 = vpop.permute.xlu0 %1977
        %s1980 = sor.u32 256, 8
        %1981 = vbcast.lane.b32.xlu0 %v1975, %s1980
        %v1982 = vpop.permute.xlu0 %1981
        %s1984 = sor.u32 256, 16
        %1985 = vbcast.lane.b32.xlu0 %v1975, %s1984
        %v1986 = vpop.permute.xlu0 %1985
        %s1988 = sor.u32 256, 24
        %1989 = vbcast.lane.b32.xlu0 %v1975, %s1988
        %v1990 = vpop.permute.xlu0 %1989
        %s1992 = sor.u32 256, 32
        %1993 = vbcast.lane.b32.xlu0 %v1975, %s1992
        %v1994 = vpop.permute.xlu0 %1993
        %s1996 = sor.u32 256, 40
        %1997 = vbcast.lane.b32.xlu0 %v1975, %s1996
        %v1998 = vpop.permute.xlu0 %1997
        %s2000 = sor.u32 256, 48
        %2001 = vbcast.lane.b32.xlu0 %v1975, %s2000
        %v2002 = vpop.permute.xlu0 %2001
        %v2003 = vmul.f32 %v1947, %v1927
        %v2004 = vmul.f32 %v1951, %v1928
        %v2005 = vmul.f32 %v1955, %v1929
        %v2006 = vmul.f32 %v1959, %v1930
        %v2007 = vmul.f32 %v1963, %v1931
        %v2008 = vmul.f32 %v1967, %v1932
        %v2009 = vmul.f32 %v1971, %v1933
        %v2010 = vmul.f32 %v1978, %v1934
        %v2011 = vmul.f32 %v1982, %v1935
        %v2012 = vmul.f32 %v1986, %v1936
        %v2013 = vmul.f32 %v1990, %v1937
        %v2014 = vmul.f32 %v1994, %v1938
        %v2015 = vmul.f32 %v1998, %v1939
        %v2016 = vmul.f32 %v2002, %v1940
        %v2017 = vsel %vm878, %v2003, 0.0
        %v2018 = vsel %vm878, %v2004, 0.0
        %v2019 = vadd.f32 %v2017, %v2018
        %v2020 = vsel %vm878, %v2005, 0.0
        %v2021 = vadd.f32 %v2019, %v2020
        %v2022 = vsel %vm878, %v2006, 0.0
        %v2023 = vadd.f32 %v2021, %v2022
        %v2024 = vsel %vm878, %v2007, 0.0
        %v2025 = vadd.f32 %v2023, %v2024
        %v2026 = vsel %vm878, %v2008, 0.0
        %v2027 = vadd.f32 %v2025, %v2026
        %v2028 = vsel %vm890, %v2009, 0.0
        %v2029 = vadd.f32 %v2027, %v2028
        %v2030 = vrot.slane %v2029, 4
        %v2031 = vadd.f32 %v2029, %v2030
        %v2032 = vrot.slane %v2031, 2
        %v2033 = vadd.f32 %v2031, %v2032
        %v2034 = vrot.slane %v2033, 1
        %v2035 = vadd.f32 %v2033, %v2034
        %v2036 = vsel %vm878, %v2010, 0.0
        %v2037 = vsel %vm878, %v2011, 0.0
        %v2038 = vadd.f32 %v2036, %v2037
        %v2039 = vsel %vm878, %v2012, 0.0
        %v2040 = vadd.f32 %v2038, %v2039
        %v2041 = vsel %vm878, %v2013, 0.0
        %v2042 = vadd.f32 %v2040, %v2041
        %v2043 = vsel %vm878, %v2014, 0.0
        %v2044 = vadd.f32 %v2042, %v2043
        %v2045 = vsel %vm878, %v2015, 0.0
        %v2046 = vadd.f32 %v2044, %v2045
        %v2047 = vsel %vm890, %v2016, 0.0
        %v2048 = vadd.f32 %v2046, %v2047
        %v2049 = vrot.slane %v2048, 4
        %v2050 = vadd.f32 %v2048, %v2049
        %v2051 = vrot.slane %v2050, 2
        %v2052 = vadd.f32 %v2050, %v2051
        %v2053 = vrot.slane %v2052, 1
        %v2054 = vadd.f32 %v2052, %v2053
        %v2055 = vld [vmem:[#allocation2] sm:$0x3]
        %v2056 = vld [vmem:[#allocation3] sm:$0x3]
        %v2057 = vpack.c.bf16 %v2035, %v2035
        %v2058 = vpack.c.bf16 %v2054, %v2054
        %v2059 = vpack.c.bf16 %v2055, %v2055
        %2060 = vmatprep.subr.bf16.mxu0 %v1020
        %2061 = vmatpush1.bf16.msra.mxu0 %v1019
        %2062 = vmatprep.subr.bf16.mxu0 %v1024
        %2063 = vmatpush1.bf16.msra.mxu0 %v1023
        %2064 = vmatprep.subr.bf16.mxu0 %v1028
        %2065 = vmatpush1.bf16.msra.mxu0 %v1027
        %2066 = vmatprep.subr.bf16.mxu0 %v1032
        %2067 = vmatpush1.bf16.msra.mxu0 %v1031
        %2068 = vmatprep.subr.bf16.mxu0 %v1036
        %2069 = vmatpush1.bf16.msra.mxu0 %v1035
        %2070 = vmatprep.subr.bf16.mxu0 %v1040
        %2071 = vmatpush1.bf16.msra.mxu0 %v1039
        %2072 = vmatprep.subr.bf16.mxu0 %v1044
        %2073 = vmatpush1.bf16.msra.mxu0 %v1043
        %2074 = vmatprep.subr.bf16.mxu0 %v1048
        %2075 = vmatpush1.bf16.msra.mxu0 %v1047
        %2076 = vmatprep.subr.bf16.mxu0 0
        %2077 = vmatpush1.bf16.msra.mxu0 0
        %2078 = vmatprep.subr.bf16.mxu0 0
        %2079 = vmatpush1.bf16.msra.mxu0 0
        %2080 = vmatprep.subr.bf16.mxu0 0
        %2081 = vmatpush1.bf16.msra.mxu0 0
        %2082 = vmatprep.subr.bf16.mxu0 0
        %2083 = vmatpush1.bf16.msra.mxu0 0
        %2084 = vmatprep.subr.bf16.mxu0 0
        %2085 = vmatpush1.bf16.msra.mxu0 0
        %2086 = vmatprep.subr.bf16.mxu0 0
        %2087 = vmatpush1.bf16.msra.mxu0 0
        %2088 = vmatprep.subr.bf16.mxu0 0
        %2089 = vmatpush1.bf16.msra.mxu0 0
        %2090 = vmatprep.subr.bf16.mxu0 0
        %2091 = vmatpush1.bf16.msra.mxu0 0
        %2092 = vmatprep.mubr.bf16.mxu0 0
        %2093 = vmatmul.mubr.bf16.gmra.mrb[0].mxu0 %v2059
        %v2094 = vpop.f32.mrb[0].mxu0
        %v2095 = vadd.f32 0.0, %v2094
        %v2096 = vpop.f32.mrb[0].mxu0
        %v2097 = vadd.f32 0.0, %v2096
        %v2098 = vpop.f32.mrb[0].mxu0
        %v2099 = vpop.f32.mrb[0].mxu0
        %2100 = vdwg.mxu0
        %2101 = vmatprep.subr.bf16.mxu0 %v1022
        %2102 = vmatpush1.bf16.msra.mxu0 %v1021
        %2103 = vmatprep.subr.bf16.mxu0 %v1026
        %2104 = vmatpush1.bf16.msra.mxu0 %v1025
        %2105 = vmatprep.subr.bf16.mxu0 %v1030
        %2106 = vmatpush1.bf16.msra.mxu0 %v1029
        %2107 = vmatprep.subr.bf16.mxu0 %v1034
        %2108 = vmatpush1.bf16.msra.mxu0 %v1033
        %2109 = vmatprep.subr.bf16.mxu0 %v1038
        %2110 = vmatpush1.bf16.msra.mxu0 %v1037
        %2111 = vmatprep.subr.bf16.mxu0 %v1042
        %2112 = vmatpush1.bf16.msra.mxu0 %v1041
        %2113 = vmatprep.subr.bf16.mxu0 %v1046
        %2114 = vmatpush1.bf16.msra.mxu0 %v1045
        %2115 = vmatprep.subr.bf16.mxu0 %v1050
        %2116 = vmatpush1.bf16.msra.mxu0 %v1049
        %2117 = vmatprep.subr.bf16.mxu0 0
        %2118 = vmatpush1.bf16.msra.mxu0 0
        %2119 = vmatprep.subr.bf16.mxu0 0
        %2120 = vmatpush1.bf16.msra.mxu0 0
        %2121 = vmatprep.subr.bf16.mxu0 0
        %2122 = vmatpush1.bf16.msra.mxu0 0
        %2123 = vmatprep.subr.bf16.mxu0 0
        %2124 = vmatpush1.bf16.msra.mxu0 0
        %2125 = vmatprep.subr.bf16.mxu0 0
        %2126 = vmatpush1.bf16.msra.mxu0 0
        %2127 = vmatprep.subr.bf16.mxu0 0
        %2128 = vmatpush1.bf16.msra.mxu0 0
        %2129 = vmatprep.subr.bf16.mxu0 0
        %2130 = vmatpush1.bf16.msra.mxu0 0
        %2131 = vmatprep.subr.bf16.mxu0 0
        %2132 = vmatpush1.bf16.msra.mxu0 0
        %2133 = vmatprep.mubr.bf16.mxu0 0
        %2134 = vmatmul.mubr.bf16.gmra.mrb[0].mxu0 %v2059
        %v2135 = vpop.f32.mrb[0].mxu0
        %v2136 = vadd.f32 0.0, %v2135
        %v2137 = vpop.f32.mrb[0].mxu0
        %v2138 = vadd.f32 0.0, %v2137
        %v2139 = vpop.f32.mrb[0].mxu0
        %v2140 = vpop.f32.mrb[0].mxu0
        %2141 = vdwg.mxu0
        %v2144 = vunpack.c.l.b16 %v2057
        %v2145 = vunpack.c.l.b16 %v2058
        %v2146 = vsel %vm1169, %v2145, %v2144
        %v2147 = vpack.c.b16 %v2146, %v2146
        %v2149 = vsel %vm878, %v2147, 0
        %2151 = vmatprep.subr.bf16.mxu0 %v1190
        %2152 = vmatpush1.bf16.msra.mxu0 %v1187
        %2153 = vmatprep.subr.bf16.mxu0 0
        %2154 = vmatpush1.bf16.msra.mxu0 0
        %2155 = vmatprep.subr.bf16.mxu0 0
        %2156 = vmatpush1.bf16.msra.mxu0 0
        %2157 = vmatprep.subr.bf16.mxu0 0
        %2158 = vmatpush1.bf16.msra.mxu0 0
        %2159 = vmatprep.subr.bf16.mxu0 0
        %2160 = vmatpush1.bf16.msra.mxu0 0
        %2161 = vmatprep.subr.bf16.mxu0 0
        %2162 = vmatpush1.bf16.msra.mxu0 0
        %2163 = vmatprep.subr.bf16.mxu0 0
        %2164 = vmatpush1.bf16.msra.mxu0 0
        %2165 = vmatprep.subr.bf16.mxu0 0
        %2166 = vmatpush1.bf16.msra.mxu0 0
        %2167 = vmatprep.subr.bf16.mxu0 0
        %2168 = vmatpush1.bf16.msra.mxu0 0
        %2169 = vmatprep.subr.bf16.mxu0 0
        %2170 = vmatpush1.bf16.msra.mxu0 0
        %2171 = vmatprep.subr.bf16.mxu0 0
        %2172 = vmatpush1.bf16.msra.mxu0 0
        %2173 = vmatprep.subr.bf16.mxu0 0
        %2174 = vmatpush1.bf16.msra.mxu0 0
        %2175 = vmatprep.subr.bf16.mxu0 0
        %2176 = vmatpush1.bf16.msra.mxu0 0
        %2177 = vmatprep.subr.bf16.mxu0 0
        %2178 = vmatpush1.bf16.msra.mxu0 0
        %2179 = vmatprep.subr.bf16.mxu0 0
        %2180 = vmatpush1.bf16.msra.mxu0 0
        %2181 = vmatprep.subr.bf16.mxu0 0
        %2182 = vmatpush1.bf16.msra.mxu0 0
        %2183 = vmatprep.mubr.bf16.mxu0 0
        %2184 = vmatmul.mubr.bf16.gmra.mrb[0].mxu0 %v2149
        %v2185 = vpop.f32.mrb[0].mxu0
        %v2186 = vadd.f32 %v2095, %v2185
        %v2187 = vpop.f32.mrb[0].mxu0
        %v2188 = vadd.f32 %v2097, %v2187
        %v2189 = vpop.f32.mrb[0].mxu0
        %v2190 = vpop.f32.mrb[0].mxu0
        %2191 = vdwg.mxu0
        %2192 = vmatprep.subr.bf16.mxu0 %v1196
        %2193 = vmatpush1.bf16.msra.mxu0 %v1193
        %2194 = vmatprep.subr.bf16.mxu0 0
        %2195 = vmatpush1.bf16.msra.mxu0 0
        %2196 = vmatprep.subr.bf16.mxu0 0
        %2197 = vmatpush1.bf16.msra.mxu0 0
        %2198 = vmatprep.subr.bf16.mxu0 0
        %2199 = vmatpush1.bf16.msra.mxu0 0
        %2200 = vmatprep.subr.bf16.mxu0 0
        %2201 = vmatpush1.bf16.msra.mxu0 0
        %2202 = vmatprep.subr.bf16.mxu0 0
        %2203 = vmatpush1.bf16.msra.mxu0 0
        %2204 = vmatprep.subr.bf16.mxu0 0
        %2205 = vmatpush1.bf16.msra.mxu0 0
        %2206 = vmatprep.subr.bf16.mxu0 0
        %2207 = vmatpush1.bf16.msra.mxu0 0
        %2208 = vmatprep.subr.bf16.mxu0 0
        %2209 = vmatpush1.bf16.msra.mxu0 0
        %2210 = vmatprep.subr.bf16.mxu0 0
        %2211 = vmatpush1.bf16.msra.mxu0 0
        %2212 = vmatprep.subr.bf16.mxu0 0
        %2213 = vmatpush1.bf16.msra.mxu0 0
        %2214 = vmatprep.subr.bf16.mxu0 0
        %2215 = vmatpush1.bf16.msra.mxu0 0
        %2216 = vmatprep.subr.bf16.mxu0 0
        %2217 = vmatpush1.bf16.msra.mxu0 0
        %2218 = vmatprep.subr.bf16.mxu0 0
        %2219 = vmatpush1.bf16.msra.mxu0 0
        %2220 = vmatprep.subr.bf16.mxu0 0
        %2221 = vmatpush1.bf16.msra.mxu0 0
        %2222 = vmatprep.subr.bf16.mxu0 0
        %2223 = vmatpush1.bf16.msra.mxu0 0
        %2224 = vmatprep.mubr.bf16.mxu0 0
        %2225 = vmatmul.mubr.bf16.gmra.mrb[0].mxu0 %v2149
        %v2226 = vpop.f32.mrb[0].mxu0
        %v2227 = vadd.f32 %v2136, %v2226
        %v2228 = vpop.f32.mrb[0].mxu0
        %v2229 = vadd.f32 %v2138, %v2228
        %v2230 = vpop.f32.mrb[0].mxu0
        %v2231 = vpop.f32.mrb[0].mxu0
        %2232 = vdwg.mxu0
        %v2233 = vadd.f32 %v2186, %v1284
        %v2234 = vadd.f32 %v2188, %v1288
        %v2235 = vadd.f32 %v2227, %v1292
        %v2236 = vadd.f32 %v2229, %v1296
        %v2237 = vmul.f32 %v2233, 0.5
        %v2238 = vtanh.pop %v2237
        %v2239 = vadd.f32 %v2238, 1.0
        %v2240 = vmul.f32 %v2239, 0.5
        %v2241 = vmul.f32 %v2234, 0.5
        %v2242 = vtanh.pop %v2241
        %v2243 = vadd.f32 %v2242, 1.0
        %v2244 = vmul.f32 %v2243, 0.5
        %v2245 = vtanh.pop %v2235
        %v2246 = vmul.f32 %v2236, 0.5
        %v2247 = vtanh.pop %v2246
        %v2248 = vadd.f32 %v2247, 1.0
        %v2249 = vmul.f32 %v2248, 0.5
        %v2250 = vmul.f32 %v2244, %v2056
        %v2251 = vmul.f32 %v2240, %v2245
        %v2252 = vadd.f32 %v2250, %v2251
        %v2253 = vtanh.pop %v2252
        %v2254 = vmul.f32 %v2249, %v2253
        %2255 = vst [vmem:[#allocation2] sm:$0x3] %v2254
        %2256 = vst [vmem:[#allocation3] sm:$0x3] %v2252
        %v2257 = vld [vmem:[%s665] sm:$0x3]
        %v2258 = vld [vmem:[%s1326] sm:$0x3]
        %v2259 = vpack.c.bf16 %v2254, %v2254
        %v2260 = vpack.c.bf16 %v2257, %v2257
        %2261 = vmatprep.subr.bf16.mxu0 %v1427
        %2262 = vmatpush1.bf16.msra.mxu0 %v1426
        %2263 = vmatprep.subr.bf16.mxu0 %v1431
        %2264 = vmatpush1.bf16.msra.mxu0 %v1430
        %2265 = vmatprep.subr.bf16.mxu0 %v1435
        %2266 = vmatpush1.bf16.msra.mxu0 %v1434
        %2267 = vmatprep.subr.bf16.mxu0 %v1439
        %2268 = vmatpush1.bf16.msra.mxu0 %v1438
        %2269 = vmatprep.subr.bf16.mxu0 %v1443
        %2270 = vmatpush1.bf16.msra.mxu0 %v1442
        %2271 = vmatprep.subr.bf16.mxu0 %v1447
        %2272 = vmatpush1.bf16.msra.mxu0 %v1446
        %2273 = vmatprep.subr.bf16.mxu0 %v1451
        %2274 = vmatpush1.bf16.msra.mxu0 %v1450
        %2275 = vmatprep.subr.bf16.mxu0 %v1455
        %2276 = vmatpush1.bf16.msra.mxu0 %v1454
        %2277 = vmatprep.subr.bf16.mxu0 0
        %2278 = vmatpush1.bf16.msra.mxu0 0
        %2279 = vmatprep.subr.bf16.mxu0 0
        %2280 = vmatpush1.bf16.msra.mxu0 0
        %2281 = vmatprep.subr.bf16.mxu0 0
        %2282 = vmatpush1.bf16.msra.mxu0 0
        %2283 = vmatprep.subr.bf16.mxu0 0
        %2284 = vmatpush1.bf16.msra.mxu0 0
        %2285 = vmatprep.subr.bf16.mxu0 0
        %2286 = vmatpush1.bf16.msra.mxu0 0
        %2287 = vmatprep.subr.bf16.mxu0 0
        %2288 = vmatpush1.bf16.msra.mxu0 0
        %2289 = vmatprep.subr.bf16.mxu0 0
        %2290 = vmatpush1.bf16.msra.mxu0 0
        %2291 = vmatprep.subr.bf16.mxu0 0
        %2292 = vmatpush1.bf16.msra.mxu0 0
        %2293 = vmatprep.mubr.bf16.mxu0 0
        %2294 = vmatmul.mubr.bf16.gmra.mrb[0].mxu0 %v2260
        %v2295 = vpop.f32.mrb[0].mxu0
        %v2296 = vadd.f32 0.0, %v2295
        %v2297 = vpop.f32.mrb[0].mxu0
        %v2298 = vadd.f32 0.0, %v2297
        %v2299 = vpop.f32.mrb[0].mxu0
        %v2300 = vpop.f32.mrb[0].mxu0
        %2301 = vdwg.mxu0
        %2302 = vmatprep.subr.bf16.mxu0 %v1429
        %2303 = vmatpush1.bf16.msra.mxu0 %v1428
        %2304 = vmatprep.subr.bf16.mxu0 %v1433
        %2305 = vmatpush1.bf16.msra.mxu0 %v1432
        %2306 = vmatprep.subr.bf16.mxu0 %v1437
        %2307 = vmatpush1.bf16.msra.mxu0 %v1436
        %2308 = vmatprep.subr.bf16.mxu0 %v1441
        %2309 = vmatpush1.bf16.msra.mxu0 %v1440
        %2310 = vmatprep.subr.bf16.mxu0 %v1445
        %2311 = vmatpush1.bf16.msra.mxu0 %v1444
        %2312 = vmatprep.subr.bf16.mxu0 %v1449
        %2313 = vmatpush1.bf16.msra.mxu0 %v1448
        %2314 = vmatprep.subr.bf16.mxu0 %v1453
        %2315 = vmatpush1.bf16.msra.mxu0 %v1452
        %2316 = vmatprep.subr.bf16.mxu0 %v1457
        %2317 = vmatpush1.bf16.msra.mxu0 %v1456
        %2318 = vmatprep.subr.bf16.mxu0 0
        %2319 = vmatpush1.bf16.msra.mxu0 0
        %2320 = vmatprep.subr.bf16.mxu0 0
        %2321 = vmatpush1.bf16.msra.mxu0 0
        %2322 = vmatprep.subr.bf16.mxu0 0
        %2323 = vmatpush1.bf16.msra.mxu0 0
        %2324 = vmatprep.subr.bf16.mxu0 0
        %2325 = vmatpush1.bf16.msra.mxu0 0
        %2326 = vmatprep.subr.bf16.mxu0 0
        %2327 = vmatpush1.bf16.msra.mxu0 0
        %2328 = vmatprep.subr.bf16.mxu0 0
        %2329 = vmatpush1.bf16.msra.mxu0 0
        %2330 = vmatprep.subr.bf16.mxu0 0
        %2331 = vmatpush1.bf16.msra.mxu0 0
        %2332 = vmatprep.subr.bf16.mxu0 0
        %2333 = vmatpush1.bf16.msra.mxu0 0
        %2334 = vmatprep.mubr.bf16.mxu0 0
        %2335 = vmatmul.mubr.bf16.gmra.mrb[0].mxu0 %v2260
        %v2336 = vpop.f32.mrb[0].mxu0
        %v2337 = vadd.f32 0.0, %v2336
        %v2338 = vpop.f32.mrb[0].mxu0
        %v2339 = vadd.f32 0.0, %v2338
        %v2340 = vpop.f32.mrb[0].mxu0
        %v2341 = vpop.f32.mrb[0].mxu0
        %2342 = vdwg.mxu0
        %2343 = vmatprep.subr.bf16.mxu0 %v1669
        %2344 = vmatpush1.bf16.msra.mxu0 %v1668
        %2345 = vmatprep.subr.bf16.mxu0 %v1673
        %2346 = vmatpush1.bf16.msra.mxu0 %v1672
        %2347 = vmatprep.subr.bf16.mxu0 %v1677
        %2348 = vmatpush1.bf16.msra.mxu0 %v1676
        %2349 = vmatprep.subr.bf16.mxu0 %v1681
        %2350 = vmatpush1.bf16.msra.mxu0 %v1680
        %2351 = vmatprep.subr.bf16.mxu0 %v1685
        %2352 = vmatpush1.bf16.msra.mxu0 %v1684
        %2353 = vmatprep.subr.bf16.mxu0 %v1689
        %2354 = vmatpush1.bf16.msra.mxu0 %v1688
        %2355 = vmatprep.subr.bf16.mxu0 %v1693
        %2356 = vmatpush1.bf16.msra.mxu0 %v1692
        %2357 = vmatprep.subr.bf16.mxu0 %v1697
        %2358 = vmatpush1.bf16.msra.mxu0 %v1696
        %2359 = vmatprep.subr.bf16.mxu0 0
        %2360 = vmatpush1.bf16.msra.mxu0 0
        %2361 = vmatprep.subr.bf16.mxu0 0
        %2362 = vmatpush1.bf16.msra.mxu0 0
        %2363 = vmatprep.subr.bf16.mxu0 0
        %2364 = vmatpush1.bf16.msra.mxu0 0
        %2365 = vmatprep.subr.bf16.mxu0 0
        %2366 = vmatpush1.bf16.msra.mxu0 0
        %2367 = vmatprep.subr.bf16.mxu0 0
        %2368 = vmatpush1.bf16.msra.mxu0 0
        %2369 = vmatprep.subr.bf16.mxu0 0
        %2370 = vmatpush1.bf16.msra.mxu0 0
        %2371 = vmatprep.subr.bf16.mxu0 0
        %2372 = vmatpush1.bf16.msra.mxu0 0
        %2373 = vmatprep.subr.bf16.mxu0 0
        %2374 = vmatpush1.bf16.msra.mxu0 0
        %2375 = vmatprep.mubr.bf16.mxu0 0
        %2376 = vmatmul.mubr.bf16.gmra.mrb[0].mxu0 %v2259
        %v2377 = vpop.f32.mrb[0].mxu0
        %v2378 = vadd.f32 %v2296, %v2377
        %v2379 = vpop.f32.mrb[0].mxu0
        %v2380 = vadd.f32 %v2298, %v2379
        %v2381 = vpop.f32.mrb[0].mxu0
        %v2382 = vpop.f32.mrb[0].mxu0
        %2383 = vdwg.mxu0
        %2384 = vmatprep.subr.bf16.mxu0 %v1671
        %2385 = vmatpush1.bf16.msra.mxu0 %v1670
        %2386 = vmatprep.subr.bf16.mxu0 %v1675
        %2387 = vmatpush1.bf16.msra.mxu0 %v1674
        %2388 = vmatprep.subr.bf16.mxu0 %v1679
        %2389 = vmatpush1.bf16.msra.mxu0 %v1678
        %2390 = vmatprep.subr.bf16.mxu0 %v1683
        %2391 = vmatpush1.bf16.msra.mxu0 %v1682
        %2392 = vmatprep.subr.bf16.mxu0 %v1687
        %2393 = vmatpush1.bf16.msra.mxu0 %v1686
        %2394 = vmatprep.subr.bf16.mxu0 %v1691
        %2395 = vmatpush1.bf16.msra.mxu0 %v1690
        %2396 = vmatprep.subr.bf16.mxu0 %v1695
        %2397 = vmatpush1.bf16.msra.mxu0 %v1694
        %2398 = vmatprep.subr.bf16.mxu0 %v1699
        %2399 = vmatpush1.bf16.msra.mxu0 %v1698
        %2400 = vmatprep.subr.bf16.mxu0 0
        %2401 = vmatpush1.bf16.msra.mxu0 0
        %2402 = vmatprep.subr.bf16.mxu0 0
        %2403 = vmatpush1.bf16.msra.mxu0 0
        %2404 = vmatprep.subr.bf16.mxu0 0
        %2405 = vmatpush1.bf16.msra.mxu0 0
        %2406 = vmatprep.subr.bf16.mxu0 0
        %2407 = vmatpush1.bf16.msra.mxu0 0
        %2408 = vmatprep.subr.bf16.mxu0 0
        %2409 = vmatpush1.bf16.msra.mxu0 0
        %2410 = vmatprep.subr.bf16.mxu0 0
        %2411 = vmatpush1.bf16.msra.mxu0 0
        %2412 = vmatprep.subr.bf16.mxu0 0
        %2413 = vmatpush1.bf16.msra.mxu0 0
        %2414 = vmatprep.subr.bf16.mxu0 0
        %2415 = vmatpush1.bf16.msra.mxu0 0
        %2416 = vmatprep.mubr.bf16.mxu0 0
        %2417 = vmatmul.mubr.bf16.gmra.mrb[0].mxu0 %v2259
        %v2418 = vpop.f32.mrb[0].mxu0
        %v2419 = vadd.f32 %v2337, %v2418
        %v2420 = vpop.f32.mrb[0].mxu0
        %v2421 = vadd.f32 %v2339, %v2420
        %v2422 = vpop.f32.mrb[0].mxu0
        %v2423 = vpop.f32.mrb[0].mxu0
        %2424 = vdwg.mxu0
        %v2425 = vadd.f32 %v2378, %v1818
        %v2426 = vadd.f32 %v2380, %v1822
        %v2427 = vadd.f32 %v2419, %v1826
        %v2428 = vadd.f32 %v2421, %v1830
        %v2429 = vmul.f32 %v2425, 0.5
        %v2430 = vtanh.pop %v2429
        %v2431 = vadd.f32 %v2430, 1.0
        %v2432 = vmul.f32 %v2431, 0.5
        %v2433 = vmul.f32 %v2426, 0.5
        %v2434 = vtanh.pop %v2433
        %v2435 = vadd.f32 %v2434, 1.0
        %v2436 = vmul.f32 %v2435, 0.5
        %v2437 = vtanh.pop %v2427
        %v2438 = vmul.f32 %v2428, 0.5
        %v2439 = vtanh.pop %v2438
        %v2440 = vadd.f32 %v2439, 1.0
        %v2441 = vmul.f32 %v2440, 0.5
        %v2442 = vmul.f32 %v2436, %v2258
        %v2443 = vmul.f32 %v2432, %v2437
        %v2444 = vadd.f32 %v2442, %v2443
        %v2445 = vtanh.pop %v2444
        %v2446 = vmul.f32 %v2441, %v2445
        %2447 = vst [vmem:[%s665] sm:$0x3] %v2446
        %2448 = vst [vmem:[%s1326] sm:$0x3] %v2444
        %v2449 = vld [vmem:[%s665] sm:$0x3]
        %v2450 = vpack.c.bf16 %v2449, %v2449
        %2451 = vmatprep.subr.bf16.mxu0 0
        %2452 = vmatpush1.bf16.msra.mxu0 %v706
        %2453 = vmatprep.subr.bf16.mxu0 0
        %2454 = vmatpush1.bf16.msra.mxu0 %v707
        %2455 = vmatprep.subr.bf16.mxu0 0
        %2456 = vmatpush1.bf16.msra.mxu0 %v708
        %2457 = vmatprep.subr.bf16.mxu0 0
        %2458 = vmatpush1.bf16.msra.mxu0 %v709
        %2459 = vmatprep.subr.bf16.mxu0 0
        %2460 = vmatpush1.bf16.msra.mxu0 %v710
        %2461 = vmatprep.subr.bf16.mxu0 0
        %2462 = vmatpush1.bf16.msra.mxu0 %v711
        %2463 = vmatprep.subr.bf16.mxu0 0
        %2464 = vmatpush1.bf16.msra.mxu0 %v712
        %2465 = vmatprep.subr.bf16.mxu0 0
        %2466 = vmatpush1.bf16.msra.mxu0 %v713
        %2467 = vmatprep.subr.bf16.mxu0 0
        %2468 = vmatpush1.bf16.msra.mxu0 0
        %2469 = vmatprep.subr.bf16.mxu0 0
        %2470 = vmatpush1.bf16.msra.mxu0 0
        %2471 = vmatprep.subr.bf16.mxu0 0
        %2472 = vmatpush1.bf16.msra.mxu0 0
        %2473 = vmatprep.subr.bf16.mxu0 0
        %2474 = vmatpush1.bf16.msra.mxu0 0
        %2475 = vmatprep.subr.bf16.mxu0 0
        %2476 = vmatpush1.bf16.msra.mxu0 0
        %2477 = vmatprep.subr.bf16.mxu0 0
        %2478 = vmatpush1.bf16.msra.mxu0 0
        %2479 = vmatprep.subr.bf16.mxu0 0
        %2480 = vmatpush1.bf16.msra.mxu0 0
        %2481 = vmatprep.subr.bf16.mxu0 0
        %2482 = vmatpush1.bf16.msra.mxu0 0
        %2483 = vmatprep.mubr.bf16.mxu0 0
        %2484 = vmatmul.mubr.bf16.gmra.mrb[0].mxu0 %v2450
        %v2485 = vpop.f32.mrb[0].mxu0
        %v2486 = vadd.f32 %v672, %v2485
        %v2487 = vpop.f32.mrb[0].mxu0
        %v2488 = vpop.f32.mrb[0].mxu0
        %v2489 = vpop.f32.mrb[0].mxu0
        %2490 = vdwg.mxu0
        %v2491 = vsel %vm762, %v2486, -inf
        %2492 = vmax.xlane.f32.xlu0 %v2491
        %v2493 = vpop.xlane.xlu0 %2492
        %v2494 = vsub.f32 %v2486, %v2493
        %v2495 = vmul.f32 %v2494, 1.442695
        %v2496 = vpow.pop %v2495
        %v2497 = vsel %vm762, %v2496, 0.0
        %2498 = vadd.xlane.f32.xlu0 %v2497
        %v2499 = vpop.xlane.xlu0 %2498
        %v2500 = vrcp.pop %v2499
        %v2501 = vmul.f32 %v2496, %v2500
        %s2502 = scalar_lea.vmem %s517, 112
        %v2503 = vld [vmem:[%s2502] sm:$0xf]
        %v2504 = vld [vmem:[%s2502 + $0x4] sm:$0xf]
        %v2505 = vld [vmem:[%s2502 + $0x8] sm:$0xf]
        %v2506 = vld [vmem:[%s2502 + $0xc] sm:$0xf]
        %v2507 = vld [vmem:[%s2502 + $0x10] sm:$0xf]
        %v2508 = vld [vmem:[%s2502 + $0x14] sm:$0xf]
        %v2509 = vld [vmem:[%s2502 + $0x18] sm:$0x1]
        %v2510 = vld [vmem:[%s2502 + $0x1c] sm:$0xf]
        %v2511 = vld [vmem:[%s2502 + $0x20] sm:$0xf]
        %v2512 = vld [vmem:[%s2502 + $0x24] sm:$0xf]
        %v2513 = vld [vmem:[%s2502 + $0x28] sm:$0xf]
        %v2514 = vld [vmem:[%s2502 + $0x2c] sm:$0xf]
        %v2515 = vld [vmem:[%s2502 + $0x30] sm:$0xf]
        %v2516 = vld [vmem:[%s2502 + $0x34] sm:$0x1]
        %v2517 = vunpack.c.l.bf16 %v2503
        %v2518 = vunpack.c.l.bf16 %v2504
        %v2519 = vunpack.c.l.bf16 %v2505
        %v2520 = vunpack.c.l.bf16 %v2506
        %v2521 = vunpack.c.l.bf16 %v2507
        %v2522 = vunpack.c.l.bf16 %v2508
        %v2523 = vunpack.c.l.bf16 %v2509
        %v2524 = vunpack.c.l.bf16 %v2510
        %v2525 = vunpack.c.l.bf16 %v2511
        %v2526 = vunpack.c.l.bf16 %v2512
        %v2527 = vunpack.c.l.bf16 %v2513
        %v2528 = vunpack.c.l.bf16 %v2514
        %v2529 = vunpack.c.l.bf16 %v2515
        %v2530 = vunpack.c.l.bf16 %v2516
        %v2531 = vlaneseq
        %v2532 = vshrl.u32 %v2531, 7
        %v2533 = vsub.s32 0, %v2532
        %v2534 = vrot.slane %v2501, %v2533
        %2536 = vbcast.lane.b32.xlu0 %v2534, 256
        %v2537 = vpop.permute.xlu0 %2536
        %s2539 = sor.u32 256, 8
        %2540 = vbcast.lane.b32.xlu0 %v2534, %s2539
        %v2541 = vpop.permute.xlu0 %2540
        %s2543 = sor.u32 256, 16
        %2544 = vbcast.lane.b32.xlu0 %v2534, %s2543
        %v2545 = vpop.permute.xlu0 %2544
        %s2547 = sor.u32 256, 24
        %2548 = vbcast.lane.b32.xlu0 %v2534, %s2547
        %v2549 = vpop.permute.xlu0 %2548
        %s2551 = sor.u32 256, 32
        %2552 = vbcast.lane.b32.xlu0 %v2534, %s2551
        %v2553 = vpop.permute.xlu0 %2552
        %s2555 = sor.u32 256, 40
        %2556 = vbcast.lane.b32.xlu0 %v2534, %s2555
        %v2557 = vpop.permute.xlu0 %2556
        %s2559 = sor.u32 256, 48
        %2560 = vbcast.lane.b32.xlu0 %v2534, %s2559
        %v2561 = vpop.permute.xlu0 %2560
        %v2562 = vlaneseq
        %v2563 = vshrl.u32 %v2562, 7
        %v2564 = vsub.s32 1, %v2563
        %v2565 = vrot.slane %v2501, %v2564
        %2567 = vbcast.lane.b32.xlu0 %v2565, 256
        %v2568 = vpop.permute.xlu0 %2567
        %s2570 = sor.u32 256, 8
        %2571 = vbcast.lane.b32.xlu0 %v2565, %s2570
        %v2572 = vpop.permute.xlu0 %2571
        %s2574 = sor.u32 256, 16
        %2575 = vbcast.lane.b32.xlu0 %v2565, %s2574
        %v2576 = vpop.permute.xlu0 %2575
        %s2578 = sor.u32 256, 24
        %2579 = vbcast.lane.b32.xlu0 %v2565, %s2578
        %v2580 = vpop.permute.xlu0 %2579
        %s2582 = sor.u32 256, 32
        %2583 = vbcast.lane.b32.xlu0 %v2565, %s2582
        %v2584 = vpop.permute.xlu0 %2583
        %s2586 = sor.u32 256, 40
        %2587 = vbcast.lane.b32.xlu0 %v2565, %s2586
        %v2588 = vpop.permute.xlu0 %2587
        %s2590 = sor.u32 256, 48
        %2591 = vbcast.lane.b32.xlu0 %v2565, %s2590
        %v2592 = vpop.permute.xlu0 %2591
        %v2593 = vmul.f32 %v2537, %v2517
        %v2594 = vmul.f32 %v2541, %v2518
        %v2595 = vmul.f32 %v2545, %v2519
        %v2596 = vmul.f32 %v2549, %v2520
        %v2597 = vmul.f32 %v2553, %v2521
        %v2598 = vmul.f32 %v2557, %v2522
        %v2599 = vmul.f32 %v2561, %v2523
        %v2600 = vmul.f32 %v2568, %v2524
        %v2601 = vmul.f32 %v2572, %v2525
        %v2602 = vmul.f32 %v2576, %v2526
        %v2603 = vmul.f32 %v2580, %v2527
        %v2604 = vmul.f32 %v2584, %v2528
        %v2605 = vmul.f32 %v2588, %v2529
        %v2606 = vmul.f32 %v2592, %v2530
        %v2607 = vsel %vm878, %v2593, 0.0
        %v2608 = vsel %vm878, %v2594, 0.0
        %v2609 = vadd.f32 %v2607, %v2608
        %v2610 = vsel %vm878, %v2595, 0.0
        %v2611 = vadd.f32 %v2609, %v2610
        %v2612 = vsel %vm878, %v2596, 0.0
        %v2613 = vadd.f32 %v2611, %v2612
        %v2614 = vsel %vm878, %v2597, 0.0
        %v2615 = vadd.f32 %v2613, %v2614
        %v2616 = vsel %vm878, %v2598, 0.0
        %v2617 = vadd.f32 %v2615, %v2616
        %v2618 = vsel %vm890, %v2599, 0.0
        %v2619 = vadd.f32 %v2617, %v2618
        %v2620 = vrot.slane %v2619, 4
        %v2621 = vadd.f32 %v2619, %v2620
        %v2622 = vrot.slane %v2621, 2
        %v2623 = vadd.f32 %v2621, %v2622
        %v2624 = vrot.slane %v2623, 1
        %v2625 = vadd.f32 %v2623, %v2624
        %v2626 = vsel %vm878, %v2600, 0.0
        %v2627 = vsel %vm878, %v2601, 0.0
        %v2628 = vadd.f32 %v2626, %v2627
        %v2629 = vsel %vm878, %v2602, 0.0
        %v2630 = vadd.f32 %v2628, %v2629
        %v2631 = vsel %vm878, %v2603, 0.0
        %v2632 = vadd.f32 %v2630, %v2631
        %v2633 = vsel %vm878, %v2604, 0.0
        %v2634 = vadd.f32 %v2632, %v2633
        %v2635 = vsel %vm878, %v2605, 0.0
        %v2636 = vadd.f32 %v2634, %v2635
        %v2637 = vsel %vm890, %v2606, 0.0
        %v2638 = vadd.f32 %v2636, %v2637
        %v2639 = vrot.slane %v2638, 4
        %v2640 = vadd.f32 %v2638, %v2639
        %v2641 = vrot.slane %v2640, 2
        %v2642 = vadd.f32 %v2640, %v2641
        %v2643 = vrot.slane %v2642, 1
        %v2644 = vadd.f32 %v2642, %v2643
        %v2645 = vld [vmem:[#allocation2] sm:$0x3]
        %v2646 = vld [vmem:[#allocation3] sm:$0x3]
        %v2647 = vpack.c.bf16 %v2625, %v2625
        %v2648 = vpack.c.bf16 %v2644, %v2644
        %v2649 = vpack.c.bf16 %v2645, %v2645
        %2650 = vmatprep.subr.bf16.mxu0 %v1020
        %2651 = vmatpush1.bf16.msra.mxu0 %v1019
        %2652 = vmatprep.subr.bf16.mxu0 %v1024
        %2653 = vmatpush1.bf16.msra.mxu0 %v1023
        %2654 = vmatprep.subr.bf16.mxu0 %v1028
        %2655 = vmatpush1.bf16.msra.mxu0 %v1027
        %2656 = vmatprep.subr.bf16.mxu0 %v1032
        %2657 = vmatpush1.bf16.msra.mxu0 %v1031
        %2658 = vmatprep.subr.bf16.mxu0 %v1036
        %2659 = vmatpush1.bf16.msra.mxu0 %v1035
        %2660 = vmatprep.subr.bf16.mxu0 %v1040
        %2661 = vmatpush1.bf16.msra.mxu0 %v1039
        %2662 = vmatprep.subr.bf16.mxu0 %v1044
        %2663 = vmatpush1.bf16.msra.mxu0 %v1043
        %2664 = vmatprep.subr.bf16.mxu0 %v1048
        %2665 = vmatpush1.bf16.msra.mxu0 %v1047
        %2666 = vmatprep.subr.bf16.mxu0 0
        %2667 = vmatpush1.bf16.msra.mxu0 0
        %2668 = vmatprep.subr.bf16.mxu0 0
        %2669 = vmatpush1.bf16.msra.mxu0 0
        %2670 = vmatprep.subr.bf16.mxu0 0
        %2671 = vmatpush1.bf16.msra.mxu0 0
        %2672 = vmatprep.subr.bf16.mxu0 0
        %2673 = vmatpush1.bf16.msra.mxu0 0
        %2674 = vmatprep.subr.bf16.mxu0 0
        %2675 = vmatpush1.bf16.msra.mxu0 0
        %2676 = vmatprep.subr.bf16.mxu0 0
        %2677 = vmatpush1.bf16.msra.mxu0 0
        %2678 = vmatprep.subr.bf16.mxu0 0
        %2679 = vmatpush1.bf16.msra.mxu0 0
        %2680 = vmatprep.subr.bf16.mxu0 0
        %2681 = vmatpush1.bf16.msra.mxu0 0
        %2682 = vmatprep.mubr.bf16.mxu0 0
        %2683 = vmatmul.mubr.bf16.gmra.mrb[0].mxu0 %v2649
        %v2684 = vpop.f32.mrb[0].mxu0
        %v2685 = vadd.f32 0.0, %v2684
        %v2686 = vpop.f32.mrb[0].mxu0
        %v2687 = vadd.f32 0.0, %v2686
        %v2688 = vpop.f32.mrb[0].mxu0
        %v2689 = vpop.f32.mrb[0].mxu0
        %2690 = vdwg.mxu0
        %2691 = vmatprep.subr.bf16.mxu0 %v1022
        %2692 = vmatpush1.bf16.msra.mxu0 %v1021
        %2693 = vmatprep.subr.bf16.mxu0 %v1026
        %2694 = vmatpush1.bf16.msra.mxu0 %v1025
        %2695 = vmatprep.subr.bf16.mxu0 %v1030
        %2696 = vmatpush1.bf16.msra.mxu0 %v1029
        %2697 = vmatprep.subr.bf16.mxu0 %v1034
        %2698 = vmatpush1.bf16.msra.mxu0 %v1033
        %2699 = vmatprep.subr.bf16.mxu0 %v1038
        %2700 = vmatpush1.bf16.msra.mxu0 %v1037
        %2701 = vmatprep.subr.bf16.mxu0 %v1042
        %2702 = vmatpush1.bf16.msra.mxu0 %v1041
        %2703 = vmatprep.subr.bf16.mxu0 %v1046
        %2704 = vmatpush1.bf16.msra.mxu0 %v1045
        %2705 = vmatprep.subr.bf16.mxu0 %v1050
        %2706 = vmatpush1.bf16.msra.mxu0 %v1049
        %2707 = vmatprep.subr.bf16.mxu0 0
        %2708 = vmatpush1.bf16.msra.mxu0 0
        %2709 = vmatprep.subr.bf16.mxu0 0
        %2710 = vmatpush1.bf16.msra.mxu0 0
        %2711 = vmatprep.subr.bf16.mxu0 0
        %2712 = vmatpush1.bf16.msra.mxu0 0
        %2713 = vmatprep.subr.bf16.mxu0 0
        %2714 = vmatpush1.bf16.msra.mxu0 0
        %2715 = vmatprep.subr.bf16.mxu0 0
        %2716 = vmatpush1.bf16.msra.mxu0 0
        %2717 = vmatprep.subr.bf16.mxu0 0
        %2718 = vmatpush1.bf16.msra.mxu0 0
        %2719 = vmatprep.subr.bf16.mxu0 0
        %2720 = vmatpush1.bf16.msra.mxu0 0
        %2721 = vmatprep.subr.bf16.mxu0 0
        %2722 = vmatpush1.bf16.msra.mxu0 0
        %2723 = vmatprep.mubr.bf16.mxu0 0
        %2724 = vmatmul.mubr.bf16.gmra.mrb[0].mxu0 %v2649
        %v2725 = vpop.f32.mrb[0].mxu0
        %v2726 = vadd.f32 0.0, %v2725
        %v2727 = vpop.f32.mrb[0].mxu0
        %v2728 = vadd.f32 0.0, %v2727
        %v2729 = vpop.f32.mrb[0].mxu0
        %v2730 = vpop.f32.mrb[0].mxu0
        %2731 = vdwg.mxu0
        %v2734 = vunpack.c.l.b16 %v2647
        %v2735 = vunpack.c.l.b16 %v2648
        %v2736 = vsel %vm1169, %v2735, %v2734
        %v2737 = vpack.c.b16 %v2736, %v2736
        %v2739 = vsel %vm878, %v2737, 0
        %2741 = vmatprep.subr.bf16.mxu0 %v1190
        %2742 = vmatpush1.bf16.msra.mxu0 %v1187
        %2743 = vmatprep.subr.bf16.mxu0 0
        %2744 = vmatpush1.bf16.msra.mxu0 0
        %2745 = vmatprep.subr.bf16.mxu0 0
        %2746 = vmatpush1.bf16.msra.mxu0 0
        %2747 = vmatprep.subr.bf16.mxu0 0
        %2748 = vmatpush1.bf16.msra.mxu0 0
        %2749 = vmatprep.subr.bf16.mxu0 0
        %2750 = vmatpush1.bf16.msra.mxu0 0
        %2751 = vmatprep.subr.bf16.mxu0 0
        %2752 = vmatpush1.bf16.msra.mxu0 0
        %2753 = vmatprep.subr.bf16.mxu0 0
        %2754 = vmatpush1.bf16.msra.mxu0 0
        %2755 = vmatprep.subr.bf16.mxu0 0
        %2756 = vmatpush1.bf16.msra.mxu0 0
        %2757 = vmatprep.subr.bf16.mxu0 0
        %2758 = vmatpush1.bf16.msra.mxu0 0
        %2759 = vmatprep.subr.bf16.mxu0 0
        %2760 = vmatpush1.bf16.msra.mxu0 0
        %2761 = vmatprep.subr.bf16.mxu0 0
        %2762 = vmatpush1.bf16.msra.mxu0 0
        %2763 = vmatprep.subr.bf16.mxu0 0
        %2764 = vmatpush1.bf16.msra.mxu0 0
        %2765 = vmatprep.subr.bf16.mxu0 0
        %2766 = vmatpush1.bf16.msra.mxu0 0
        %2767 = vmatprep.subr.bf16.mxu0 0
        %2768 = vmatpush1.bf16.msra.mxu0 0
        %2769 = vmatprep.subr.bf16.mxu0 0
        %2770 = vmatpush1.bf16.msra.mxu0 0
        %2771 = vmatprep.subr.bf16.mxu0 0
        %2772 = vmatpush1.bf16.msra.mxu0 0
        %2773 = vmatprep.mubr.bf16.mxu0 0
        %2774 = vmatmul.mubr.bf16.gmra.mrb[0].mxu0 %v2739
        %v2775 = vpop.f32.mrb[0].mxu0
        %v2776 = vadd.f32 %v2685, %v2775
        %v2777 = vpop.f32.mrb[0].mxu0
        %v2778 = vadd.f32 %v2687, %v2777
        %v2779 = vpop.f32.mrb[0].mxu0
        %v2780 = vpop.f32.mrb[0].mxu0
        %2781 = vdwg.mxu0
        %2782 = vmatprep.subr.bf16.mxu0 %v1196
        %2783 = vmatpush1.bf16.msra.mxu0 %v1193
        %2784 = vmatprep.subr.bf16.mxu0 0
        %2785 = vmatpush1.bf16.msra.mxu0 0
        %2786 = vmatprep.subr.bf16.mxu0 0
        %2787 = vmatpush1.bf16.msra.mxu0 0
        %2788 = vmatprep.subr.bf16.mxu0 0
        %2789 = vmatpush1.bf16.msra.mxu0 0
        %2790 = vmatprep.subr.bf16.mxu0 0
        %2791 = vmatpush1.bf16.msra.mxu0 0
        %2792 = vmatprep.subr.bf16.mxu0 0
        %2793 = vmatpush1.bf16.msra.mxu0 0
        %2794 = vmatprep.subr.bf16.mxu0 0
        %2795 = vmatpush1.bf16.msra.mxu0 0
        %2796 = vmatprep.subr.bf16.mxu0 0
        %2797 = vmatpush1.bf16.msra.mxu0 0
        %2798 = vmatprep.subr.bf16.mxu0 0
        %2799 = vmatpush1.bf16.msra.mxu0 0
        %2800 = vmatprep.subr.bf16.mxu0 0
        %2801 = vmatpush1.bf16.msra.mxu0 0
        %2802 = vmatprep.subr.bf16.mxu0 0
        %2803 = vmatpush1.bf16.msra.mxu0 0
        %2804 = vmatprep.subr.bf16.mxu0 0
        %2805 = vmatpush1.bf16.msra.mxu0 0
        %2806 = vmatprep.subr.bf16.mxu0 0
        %2807 = vmatpush1.bf16.msra.mxu0 0
        %2808 = vmatprep.subr.bf16.mxu0 0
        %2809 = vmatpush1.bf16.msra.mxu0 0
        %2810 = vmatprep.subr.bf16.mxu0 0
        %2811 = vmatpush1.bf16.msra.mxu0 0
        %2812 = vmatprep.subr.bf16.mxu0 0
        %2813 = vmatpush1.bf16.msra.mxu0 0
        %2814 = vmatprep.mubr.bf16.mxu0 0
        %2815 = vmatmul.mubr.bf16.gmra.mrb[0].mxu0 %v2739
        %v2816 = vpop.f32.mrb[0].mxu0
        %v2817 = vadd.f32 %v2726, %v2816
        %v2818 = vpop.f32.mrb[0].mxu0
        %v2819 = vadd.f32 %v2728, %v2818
        %v2820 = vpop.f32.mrb[0].mxu0
        %v2821 = vpop.f32.mrb[0].mxu0
        %2822 = vdwg.mxu0
        %v2823 = vadd.f32 %v2776, %v1284
        %v2824 = vadd.f32 %v2778, %v1288
        %v2825 = vadd.f32 %v2817, %v1292
        %v2826 = vadd.f32 %v2819, %v1296
        %v2827 = vmul.f32 %v2823, 0.5
        %v2828 = vtanh.pop %v2827
        %v2829 = vadd.f32 %v2828, 1.0
        %v2830 = vmul.f32 %v2829, 0.5
        %v2831 = vmul.f32 %v2824, 0.5
        %v2832 = vtanh.pop %v2831
        %v2833 = vadd.f32 %v2832, 1.0
        %v2834 = vmul.f32 %v2833, 0.5
        %v2835 = vtanh.pop %v2825
        %v2836 = vmul.f32 %v2826, 0.5
        %v2837 = vtanh.pop %v2836
        %v2838 = vadd.f32 %v2837, 1.0
        %v2839 = vmul.f32 %v2838, 0.5
        %v2840 = vmul.f32 %v2834, %v2646
        %v2841 = vmul.f32 %v2830, %v2835
        %v2842 = vadd.f32 %v2840, %v2841
        %v2843 = vtanh.pop %v2842
        %v2844 = vmul.f32 %v2839, %v2843
        %2845 = vst [vmem:[#allocation2] sm:$0x3] %v2844
        %2846 = vst [vmem:[#allocation3] sm:$0x3] %v2842
        %v2847 = vld [vmem:[%s665] sm:$0x3]
        %v2848 = vld [vmem:[%s1326] sm:$0x3]
        %v2849 = vpack.c.bf16 %v2844, %v2844
        %v2850 = vpack.c.bf16 %v2847, %v2847
        %2851 = vmatprep.subr.bf16.mxu0 %v1427
        %2852 = vmatpush1.bf16.msra.mxu0 %v1426
        %2853 = vmatprep.subr.bf16.mxu0 %v1431
        %2854 = vmatpush1.bf16.msra.mxu0 %v1430
        %2855 = vmatprep.subr.bf16.mxu0 %v1435
        %2856 = vmatpush1.bf16.msra.mxu0 %v1434
        %2857 = vmatprep.subr.bf16.mxu0 %v1439
        %2858 = vmatpush1.bf16.msra.mxu0 %v1438
        %2859 = vmatprep.subr.bf16.mxu0 %v1443
        %2860 = vmatpush1.bf16.msra.mxu0 %v1442
        %2861 = vmatprep.subr.bf16.mxu0 %v1447
        %2862 = vmatpush1.bf16.msra.mxu0 %v1446
        %2863 = vmatprep.subr.bf16.mxu0 %v1451
        %2864 = vmatpush1.bf16.msra.mxu0 %v1450
        %2865 = vmatprep.subr.bf16.mxu0 %v1455
        %2866 = vmatpush1.bf16.msra.mxu0 %v1454
        %2867 = vmatprep.subr.bf16.mxu0 0
        %2868 = vmatpush1.bf16.msra.mxu0 0
        %2869 = vmatprep.subr.bf16.mxu0 0
        %2870 = vmatpush1.bf16.msra.mxu0 0
        %2871 = vmatprep.subr.bf16.mxu0 0
        %2872 = vmatpush1.bf16.msra.mxu0 0
        %2873 = vmatprep.subr.bf16.mxu0 0
        %2874 = vmatpush1.bf16.msra.mxu0 0
        %2875 = vmatprep.subr.bf16.mxu0 0
        %2876 = vmatpush1.bf16.msra.mxu0 0
        %2877 = vmatprep.subr.bf16.mxu0 0
        %2878 = vmatpush1.bf16.msra.mxu0 0
        %2879 = vmatprep.subr.bf16.mxu0 0
        %2880 = vmatpush1.bf16.msra.mxu0 0
        %2881 = vmatprep.subr.bf16.mxu0 0
        %2882 = vmatpush1.bf16.msra.mxu0 0
        %2883 = vmatprep.mubr.bf16.mxu0 0
        %2884 = vmatmul.mubr.bf16.gmra.mrb[0].mxu0 %v2850
        %v2885 = vpop.f32.mrb[0].mxu0
        %v2886 = vadd.f32 0.0, %v2885
        %v2887 = vpop.f32.mrb[0].mxu0
        %v2888 = vadd.f32 0.0, %v2887
        %v2889 = vpop.f32.mrb[0].mxu0
        %v2890 = vpop.f32.mrb[0].mxu0
        %2891 = vdwg.mxu0
        %2892 = vmatprep.subr.bf16.mxu0 %v1429
        %2893 = vmatpush1.bf16.msra.mxu0 %v1428
        %2894 = vmatprep.subr.bf16.mxu0 %v1433
        %2895 = vmatpush1.bf16.msra.mxu0 %v1432
        %2896 = vmatprep.subr.bf16.mxu0 %v1437
        %2897 = vmatpush1.bf16.msra.mxu0 %v1436
        %2898 = vmatprep.subr.bf16.mxu0 %v1441
        %2899 = vmatpush1.bf16.msra.mxu0 %v1440
        %2900 = vmatprep.subr.bf16.mxu0 %v1445
        %2901 = vmatpush1.bf16.msra.mxu0 %v1444
        %2902 = vmatprep.subr.bf16.mxu0 %v1449
        %2903 = vmatpush1.bf16.msra.mxu0 %v1448
        %2904 = vmatprep.subr.bf16.mxu0 %v1453
        %2905 = vmatpush1.bf16.msra.mxu0 %v1452
        %2906 = vmatprep.subr.bf16.mxu0 %v1457
        %2907 = vmatpush1.bf16.msra.mxu0 %v1456
        %2908 = vmatprep.subr.bf16.mxu0 0
        %2909 = vmatpush1.bf16.msra.mxu0 0
        %2910 = vmatprep.subr.bf16.mxu0 0
        %2911 = vmatpush1.bf16.msra.mxu0 0
        %2912 = vmatprep.subr.bf16.mxu0 0
        %2913 = vmatpush1.bf16.msra.mxu0 0
        %2914 = vmatprep.subr.bf16.mxu0 0
        %2915 = vmatpush1.bf16.msra.mxu0 0
        %2916 = vmatprep.subr.bf16.mxu0 0
        %2917 = vmatpush1.bf16.msra.mxu0 0
        %2918 = vmatprep.subr.bf16.mxu0 0
        %2919 = vmatpush1.bf16.msra.mxu0 0
        %2920 = vmatprep.subr.bf16.mxu0 0
        %2921 = vmatpush1.bf16.msra.mxu0 0
        %2922 = vmatprep.subr.bf16.mxu0 0
        %2923 = vmatpush1.bf16.msra.mxu0 0
        %2924 = vmatprep.mubr.bf16.mxu0 0
        %2925 = vmatmul.mubr.bf16.gmra.mrb[0].mxu0 %v2850
        %v2926 = vpop.f32.mrb[0].mxu0
        %v2927 = vadd.f32 0.0, %v2926
        %v2928 = vpop.f32.mrb[0].mxu0
        %v2929 = vadd.f32 0.0, %v2928
        %v2930 = vpop.f32.mrb[0].mxu0
        %v2931 = vpop.f32.mrb[0].mxu0
        %2932 = vdwg.mxu0
        %2933 = vmatprep.subr.bf16.mxu0 %v1669
        %2934 = vmatpush1.bf16.msra.mxu0 %v1668
        %2935 = vmatprep.subr.bf16.mxu0 %v1673
        %2936 = vmatpush1.bf16.msra.mxu0 %v1672
        %2937 = vmatprep.subr.bf16.mxu0 %v1677
        %2938 = vmatpush1.bf16.msra.mxu0 %v1676
        %2939 = vmatprep.subr.bf16.mxu0 %v1681
        %2940 = vmatpush1.bf16.msra.mxu0 %v1680
        %2941 = vmatprep.subr.bf16.mxu0 %v1685
        %2942 = vmatpush1.bf16.msra.mxu0 %v1684
        %2943 = vmatprep.subr.bf16.mxu0 %v1689
        %2944 = vmatpush1.bf16.msra.mxu0 %v1688
        %2945 = vmatprep.subr.bf16.mxu0 %v1693
        %2946 = vmatpush1.bf16.msra.mxu0 %v1692
        %2947 = vmatprep.subr.bf16.mxu0 %v1697
        %2948 = vmatpush1.bf16.msra.mxu0 %v1696
        %2949 = vmatprep.subr.bf16.mxu0 0
        %2950 = vmatpush1.bf16.msra.mxu0 0
        %2951 = vmatprep.subr.bf16.mxu0 0
        %2952 = vmatpush1.bf16.msra.mxu0 0
        %2953 = vmatprep.subr.bf16.mxu0 0
        %2954 = vmatpush1.bf16.msra.mxu0 0
        %2955 = vmatprep.subr.bf16.mxu0 0
        %2956 = vmatpush1.bf16.msra.mxu0 0
        %2957 = vmatprep.subr.bf16.mxu0 0
        %2958 = vmatpush1.bf16.msra.mxu0 0
        %2959 = vmatprep.subr.bf16.mxu0 0
        %2960 = vmatpush1.bf16.msra.mxu0 0
        %2961 = vmatprep.subr.bf16.mxu0 0
        %2962 = vmatpush1.bf16.msra.mxu0 0
        %2963 = vmatprep.subr.bf16.mxu0 0
        %2964 = vmatpush1.bf16.msra.mxu0 0
        %2965 = vmatprep.mubr.bf16.mxu0 0
        %2966 = vmatmul.mubr.bf16.gmra.mrb[0].mxu0 %v2849
        %v2967 = vpop.f32.mrb[0].mxu0
        %v2968 = vadd.f32 %v2886, %v2967
        %v2969 = vpop.f32.mrb[0].mxu0
        %v2970 = vadd.f32 %v2888, %v2969
        %v2971 = vpop.f32.mrb[0].mxu0
        %v2972 = vpop.f32.mrb[0].mxu0
        %2973 = vdwg.mxu0
        %2974 = vmatprep.subr.bf16.mxu0 %v1671
        %2975 = vmatpush1.bf16.msra.mxu0 %v1670
        %2976 = vmatprep.subr.bf16.mxu0 %v1675
        %2977 = vmatpush1.bf16.msra.mxu0 %v1674
        %2978 = vmatprep.subr.bf16.mxu0 %v1679
        %2979 = vmatpush1.bf16.msra.mxu0 %v1678
        %2980 = vmatprep.subr.bf16.mxu0 %v1683
        %2981 = vmatpush1.bf16.msra.mxu0 %v1682
        %2982 = vmatprep.subr.bf16.mxu0 %v1687
        %2983 = vmatpush1.bf16.msra.mxu0 %v1686
        %2984 = vmatprep.subr.bf16.mxu0 %v1691
        %2985 = vmatpush1.bf16.msra.mxu0 %v1690
        %2986 = vmatprep.subr.bf16.mxu0 %v1695
        %2987 = vmatpush1.bf16.msra.mxu0 %v1694
        %2988 = vmatprep.subr.bf16.mxu0 %v1699
        %2989 = vmatpush1.bf16.msra.mxu0 %v1698
        %2990 = vmatprep.subr.bf16.mxu0 0
        %2991 = vmatpush1.bf16.msra.mxu0 0
        %2992 = vmatprep.subr.bf16.mxu0 0
        %2993 = vmatpush1.bf16.msra.mxu0 0
        %2994 = vmatprep.subr.bf16.mxu0 0
        %2995 = vmatpush1.bf16.msra.mxu0 0
        %2996 = vmatprep.subr.bf16.mxu0 0
        %2997 = vmatpush1.bf16.msra.mxu0 0
        %2998 = vmatprep.subr.bf16.mxu0 0
        %2999 = vmatpush1.bf16.msra.mxu0 0
        %3000 = vmatprep.subr.bf16.mxu0 0
        %3001 = vmatpush1.bf16.msra.mxu0 0
        %3002 = vmatprep.subr.bf16.mxu0 0
        %3003 = vmatpush1.bf16.msra.mxu0 0
        %3004 = vmatprep.subr.bf16.mxu0 0
        %3005 = vmatpush1.bf16.msra.mxu0 0
        %3006 = vmatprep.mubr.bf16.mxu0 0
        %3007 = vmatmul.mubr.bf16.gmra.mrb[0].mxu0 %v2849
        %v3008 = vpop.f32.mrb[0].mxu0
        %v3009 = vadd.f32 %v2927, %v3008
        %v3010 = vpop.f32.mrb[0].mxu0
        %v3011 = vadd.f32 %v2929, %v3010
        %v3012 = vpop.f32.mrb[0].mxu0
        %v3013 = vpop.f32.mrb[0].mxu0
        %3014 = vdwg.mxu0
        %v3015 = vadd.f32 %v2968, %v1818
        %v3016 = vadd.f32 %v2970, %v1822
        %v3017 = vadd.f32 %v3009, %v1826
        %v3018 = vadd.f32 %v3011, %v1830
        %v3019 = vmul.f32 %v3015, 0.5
        %v3020 = vtanh.pop %v3019
        %v3021 = vadd.f32 %v3020, 1.0
        %v3022 = vmul.f32 %v3021, 0.5
        %v3023 = vmul.f32 %v3016, 0.5
        %v3024 = vtanh.pop %v3023
        %v3025 = vadd.f32 %v3024, 1.0
        %v3026 = vmul.f32 %v3025, 0.5
        %v3027 = vtanh.pop %v3017
        %v3028 = vmul.f32 %v3018, 0.5
        %v3029 = vtanh.pop %v3028
        %v3030 = vadd.f32 %v3029, 1.0
        %v3031 = vmul.f32 %v3030, 0.5
        %v3032 = vmul.f32 %v3026, %v2848
        %v3033 = vmul.f32 %v3022, %v3027
        %v3034 = vadd.f32 %v3032, %v3033
        %v3035 = vtanh.pop %v3034
        %v3036 = vmul.f32 %v3031, %v3035
        %3037 = vst [vmem:[%s665] sm:$0x3] %v3036
        %3038 = vst [vmem:[%s1326] sm:$0x3] %v3034
        %v3039 = vld [vmem:[%s665] sm:$0x3]
        %v3040 = vpack.c.bf16 %v3039, %v3039
        %3041 = vmatprep.subr.bf16.mxu0 0
        %3042 = vmatpush1.bf16.msra.mxu0 %v706
        %3043 = vmatprep.subr.bf16.mxu0 0
        %3044 = vmatpush1.bf16.msra.mxu0 %v707
        %3045 = vmatprep.subr.bf16.mxu0 0
        %3046 = vmatpush1.bf16.msra.mxu0 %v708
        %3047 = vmatprep.subr.bf16.mxu0 0
        %3048 = vmatpush1.bf16.msra.mxu0 %v709
        %3049 = vmatprep.subr.bf16.mxu0 0
        %3050 = vmatpush1.bf16.msra.mxu0 %v710
        %3051 = vmatprep.subr.bf16.mxu0 0
        %3052 = vmatpush1.bf16.msra.mxu0 %v711
        %3053 = vmatprep.subr.bf16.mxu0 0
        %3054 = vmatpush1.bf16.msra.mxu0 %v712
        %3055 = vmatprep.subr.bf16.mxu0 0
        %3056 = vmatpush1.bf16.msra.mxu0 %v713
        %3057 = vmatprep.subr.bf16.mxu0 0
        %3058 = vmatpush1.bf16.msra.mxu0 0
        %3059 = vmatprep.subr.bf16.mxu0 0
        %3060 = vmatpush1.bf16.msra.mxu0 0
        %3061 = vmatprep.subr.bf16.mxu0 0
        %3062 = vmatpush1.bf16.msra.mxu0 0
        %3063 = vmatprep.subr.bf16.mxu0 0
        %3064 = vmatpush1.bf16.msra.mxu0 0
        %3065 = vmatprep.subr.bf16.mxu0 0
        %3066 = vmatpush1.bf16.msra.mxu0 0
        %3067 = vmatprep.subr.bf16.mxu0 0
        %3068 = vmatpush1.bf16.msra.mxu0 0
        %3069 = vmatprep.subr.bf16.mxu0 0
        %3070 = vmatpush1.bf16.msra.mxu0 0
        %3071 = vmatprep.subr.bf16.mxu0 0
        %3072 = vmatpush1.bf16.msra.mxu0 0
        %3073 = vmatprep.mubr.bf16.mxu0 0
        %3074 = vmatmul.mubr.bf16.gmra.mrb[0].mxu0 %v3040
        %v3075 = vpop.f32.mrb[0].mxu0
        %v3076 = vadd.f32 %v672, %v3075
        %v3077 = vpop.f32.mrb[0].mxu0
        %v3078 = vpop.f32.mrb[0].mxu0
        %v3079 = vpop.f32.mrb[0].mxu0
        %3080 = vdwg.mxu0
        %v3081 = vsel %vm762, %v3076, -inf
        %3082 = vmax.xlane.f32.xlu0 %v3081
        %v3083 = vpop.xlane.xlu0 %3082
        %v3084 = vsub.f32 %v3076, %v3083
        %v3085 = vmul.f32 %v3084, 1.442695
        %v3086 = vpow.pop %v3085
        %v3087 = vsel %vm762, %v3086, 0.0
        %3088 = vadd.xlane.f32.xlu0 %v3087
        %v3089 = vpop.xlane.xlu0 %3088
        %v3090 = vrcp.pop %v3089
        %v3091 = vmul.f32 %v3086, %v3090
        %s3092 = scalar_lea.vmem %s517, 168
        %v3093 = vld [vmem:[%s3092] sm:$0xf]
        %v3094 = vld [vmem:[%s3092 + $0x4] sm:$0xf]
        %v3095 = vld [vmem:[%s3092 + $0x8] sm:$0xf]
        %v3096 = vld [vmem:[%s3092 + $0xc] sm:$0xf]
        %v3097 = vld [vmem:[%s3092 + $0x10] sm:$0xf]
        %v3098 = vld [vmem:[%s3092 + $0x14] sm:$0xf]
        %v3099 = vld [vmem:[%s3092 + $0x18] sm:$0x1]
        %v3100 = vld [vmem:[%s3092 + $0x1c] sm:$0xf]
        %v3101 = vld [vmem:[%s3092 + $0x20] sm:$0xf]
        %v3102 = vld [vmem:[%s3092 + $0x24] sm:$0xf]
        %v3103 = vld [vmem:[%s3092 + $0x28] sm:$0xf]
        %v3104 = vld [vmem:[%s3092 + $0x2c] sm:$0xf]
        %v3105 = vld [vmem:[%s3092 + $0x30] sm:$0xf]
        %v3106 = vld [vmem:[%s3092 + $0x34] sm:$0x1]
        %v3107 = vunpack.c.l.bf16 %v3093
        %v3108 = vunpack.c.l.bf16 %v3094
        %v3109 = vunpack.c.l.bf16 %v3095
        %v3110 = vunpack.c.l.bf16 %v3096
        %v3111 = vunpack.c.l.bf16 %v3097
        %v3112 = vunpack.c.l.bf16 %v3098
        %v3113 = vunpack.c.l.bf16 %v3099
        %v3114 = vunpack.c.l.bf16 %v3100
        %v3115 = vunpack.c.l.bf16 %v3101
        %v3116 = vunpack.c.l.bf16 %v3102
        %v3117 = vunpack.c.l.bf16 %v3103
        %v3118 = vunpack.c.l.bf16 %v3104
        %v3119 = vunpack.c.l.bf16 %v3105
        %v3120 = vunpack.c.l.bf16 %v3106
        %v3121 = vlaneseq
        %v3122 = vshrl.u32 %v3121, 7
        %v3123 = vsub.s32 0, %v3122
        %v3124 = vrot.slane %v3091, %v3123
        %3126 = vbcast.lane.b32.xlu0 %v3124, 256
        %v3127 = vpop.permute.xlu0 %3126
        %s3129 = sor.u32 256, 8
        %3130 = vbcast.lane.b32.xlu0 %v3124, %s3129
        %v3131 = vpop.permute.xlu0 %3130
        %s3133 = sor.u32 256, 16
        %3134 = vbcast.lane.b32.xlu0 %v3124, %s3133
        %v3135 = vpop.permute.xlu0 %3134
        %s3137 = sor.u32 256, 24
        %3138 = vbcast.lane.b32.xlu0 %v3124, %s3137
        %v3139 = vpop.permute.xlu0 %3138
        %s3141 = sor.u32 256, 32
        %3142 = vbcast.lane.b32.xlu0 %v3124, %s3141
        %v3143 = vpop.permute.xlu0 %3142
        %s3145 = sor.u32 256, 40
        %3146 = vbcast.lane.b32.xlu0 %v3124, %s3145
        %v3147 = vpop.permute.xlu0 %3146
        %s3149 = sor.u32 256, 48
        %3150 = vbcast.lane.b32.xlu0 %v3124, %s3149
        %v3151 = vpop.permute.xlu0 %3150
        %v3152 = vlaneseq
        %v3153 = vshrl.u32 %v3152, 7
        %v3154 = vsub.s32 1, %v3153
        %v3155 = vrot.slane %v3091, %v3154
        %3157 = vbcast.lane.b32.xlu0 %v3155, 256
        %v3158 = vpop.permute.xlu0 %3157
        %s3160 = sor.u32 256, 8
        %3161 = vbcast.lane.b32.xlu0 %v3155, %s3160
        %v3162 = vpop.permute.xlu0 %3161
        %s3164 = sor.u32 256, 16
        %3165 = vbcast.lane.b32.xlu0 %v3155, %s3164
        %v3166 = vpop.permute.xlu0 %3165
        %s3168 = sor.u32 256, 24
        %3169 = vbcast.lane.b32.xlu0 %v3155, %s3168
        %v3170 = vpop.permute.xlu0 %3169
        %s3172 = sor.u32 256, 32
        %3173 = vbcast.lane.b32.xlu0 %v3155, %s3172
        %v3174 = vpop.permute.xlu0 %3173
        %s3176 = sor.u32 256, 40
        %3177 = vbcast.lane.b32.xlu0 %v3155, %s3176
        %v3178 = vpop.permute.xlu0 %3177
        %s3180 = sor.u32 256, 48
        %3181 = vbcast.lane.b32.xlu0 %v3155, %s3180
        %v3182 = vpop.permute.xlu0 %3181
        %v3183 = vmul.f32 %v3127, %v3107
        %v3184 = vmul.f32 %v3131, %v3108
        %v3185 = vmul.f32 %v3135, %v3109
        %v3186 = vmul.f32 %v3139, %v3110
        %v3187 = vmul.f32 %v3143, %v3111
        %v3188 = vmul.f32 %v3147, %v3112
        %v3189 = vmul.f32 %v3151, %v3113
        %v3190 = vmul.f32 %v3158, %v3114
        %v3191 = vmul.f32 %v3162, %v3115
        %v3192 = vmul.f32 %v3166, %v3116
        %v3193 = vmul.f32 %v3170, %v3117
        %v3194 = vmul.f32 %v3174, %v3118
        %v3195 = vmul.f32 %v3178, %v3119
        %v3196 = vmul.f32 %v3182, %v3120
        %v3197 = vsel %vm878, %v3183, 0.0
        %v3198 = vsel %vm878, %v3184, 0.0
        %v3199 = vadd.f32 %v3197, %v3198
        %v3200 = vsel %vm878, %v3185, 0.0
        %v3201 = vadd.f32 %v3199, %v3200
        %v3202 = vsel %vm878, %v3186, 0.0
        %v3203 = vadd.f32 %v3201, %v3202
        %v3204 = vsel %vm878, %v3187, 0.0
        %v3205 = vadd.f32 %v3203, %v3204
        %v3206 = vsel %vm878, %v3188, 0.0
        %v3207 = vadd.f32 %v3205, %v3206
        %v3208 = vsel %vm890, %v3189, 0.0
        %v3209 = vadd.f32 %v3207, %v3208
        %v3210 = vrot.slane %v3209, 4
        %v3211 = vadd.f32 %v3209, %v3210
        %v3212 = vrot.slane %v3211, 2
        %v3213 = vadd.f32 %v3211, %v3212
        %v3214 = vrot.slane %v3213, 1
        %v3215 = vadd.f32 %v3213, %v3214
        %v3216 = vsel %vm878, %v3190, 0.0
        %v3217 = vsel %vm878, %v3191, 0.0
        %v3218 = vadd.f32 %v3216, %v3217
        %v3219 = vsel %vm878, %v3192, 0.0
        %v3220 = vadd.f32 %v3218, %v3219
        %v3221 = vsel %vm878, %v3193, 0.0
        %v3222 = vadd.f32 %v3220, %v3221
        %v3223 = vsel %vm878, %v3194, 0.0
        %v3224 = vadd.f32 %v3222, %v3223
        %v3225 = vsel %vm878, %v3195, 0.0
        %v3226 = vadd.f32 %v3224, %v3225
        %v3227 = vsel %vm890, %v3196, 0.0
        %v3228 = vadd.f32 %v3226, %v3227
        %v3229 = vrot.slane %v3228, 4
        %v3230 = vadd.f32 %v3228, %v3229
        %v3231 = vrot.slane %v3230, 2
        %v3232 = vadd.f32 %v3230, %v3231
        %v3233 = vrot.slane %v3232, 1
        %v3234 = vadd.f32 %v3232, %v3233
        %v3235 = vld [vmem:[#allocation2] sm:$0x3]
        %v3236 = vld [vmem:[#allocation3] sm:$0x3]
        %v3237 = vpack.c.bf16 %v3215, %v3215
        %v3238 = vpack.c.bf16 %v3234, %v3234
        %v3239 = vpack.c.bf16 %v3235, %v3235
        %3240 = vmatprep.subr.bf16.mxu0 %v1020
        %3241 = vmatpush1.bf16.msra.mxu0 %v1019
        %3242 = vmatprep.subr.bf16.mxu0 %v1024
        %3243 = vmatpush1.bf16.msra.mxu0 %v1023
        %3244 = vmatprep.subr.bf16.mxu0 %v1028
        %3245 = vmatpush1.bf16.msra.mxu0 %v1027
        %3246 = vmatprep.subr.bf16.mxu0 %v1032
        %3247 = vmatpush1.bf16.msra.mxu0 %v1031
        %3248 = vmatprep.subr.bf16.mxu0 %v1036
        %3249 = vmatpush1.bf16.msra.mxu0 %v1035
        %3250 = vmatprep.subr.bf16.mxu0 %v1040
        %3251 = vmatpush1.bf16.msra.mxu0 %v1039
        %3252 = vmatprep.subr.bf16.mxu0 %v1044
        %3253 = vmatpush1.bf16.msra.mxu0 %v1043
        %3254 = vmatprep.subr.bf16.mxu0 %v1048
        %3255 = vmatpush1.bf16.msra.mxu0 %v1047
        %3256 = vmatprep.subr.bf16.mxu0 0
        %3257 = vmatpush1.bf16.msra.mxu0 0
        %3258 = vmatprep.subr.bf16.mxu0 0
        %3259 = vmatpush1.bf16.msra.mxu0 0
        %3260 = vmatprep.subr.bf16.mxu0 0
        %3261 = vmatpush1.bf16.msra.mxu0 0
        %3262 = vmatprep.subr.bf16.mxu0 0
        %3263 = vmatpush1.bf16.msra.mxu0 0
        %3264 = vmatprep.subr.bf16.mxu0 0
        %3265 = vmatpush1.bf16.msra.mxu0 0
        %3266 = vmatprep.subr.bf16.mxu0 0
        %3267 = vmatpush1.bf16.msra.mxu0 0
        %3268 = vmatprep.subr.bf16.mxu0 0
        %3269 = vmatpush1.bf16.msra.mxu0 0
        %3270 = vmatprep.subr.bf16.mxu0 0
        %3271 = vmatpush1.bf16.msra.mxu0 0
        %3272 = vmatprep.mubr.bf16.mxu0 0
        %3273 = vmatmul.mubr.bf16.gmra.mrb[0].mxu0 %v3239
        %v3274 = vpop.f32.mrb[0].mxu0
        %v3275 = vadd.f32 0.0, %v3274
        %v3276 = vpop.f32.mrb[0].mxu0
        %v3277 = vadd.f32 0.0, %v3276
        %v3278 = vpop.f32.mrb[0].mxu0
        %v3279 = vpop.f32.mrb[0].mxu0
        %3280 = vdwg.mxu0
        %3281 = vmatprep.subr.bf16.mxu0 %v1022
        %3282 = vmatpush1.bf16.msra.mxu0 %v1021
        %3283 = vmatprep.subr.bf16.mxu0 %v1026
        %3284 = vmatpush1.bf16.msra.mxu0 %v1025
        %3285 = vmatprep.subr.bf16.mxu0 %v1030
        %3286 = vmatpush1.bf16.msra.mxu0 %v1029
        %3287 = vmatprep.subr.bf16.mxu0 %v1034
        %3288 = vmatpush1.bf16.msra.mxu0 %v1033
        %3289 = vmatprep.subr.bf16.mxu0 %v1038
        %3290 = vmatpush1.bf16.msra.mxu0 %v1037
        %3291 = vmatprep.subr.bf16.mxu0 %v1042
        %3292 = vmatpush1.bf16.msra.mxu0 %v1041
        %3293 = vmatprep.subr.bf16.mxu0 %v1046
        %3294 = vmatpush1.bf16.msra.mxu0 %v1045
        %3295 = vmatprep.subr.bf16.mxu0 %v1050
        %3296 = vmatpush1.bf16.msra.mxu0 %v1049
        %3297 = vmatprep.subr.bf16.mxu0 0
        %3298 = vmatpush1.bf16.msra.mxu0 0
        %3299 = vmatprep.subr.bf16.mxu0 0
        %3300 = vmatpush1.bf16.msra.mxu0 0
        %3301 = vmatprep.subr.bf16.mxu0 0
        %3302 = vmatpush1.bf16.msra.mxu0 0
        %3303 = vmatprep.subr.bf16.mxu0 0
        %3304 = vmatpush1.bf16.msra.mxu0 0
        %3305 = vmatprep.subr.bf16.mxu0 0
        %3306 = vmatpush1.bf16.msra.mxu0 0
        %3307 = vmatprep.subr.bf16.mxu0 0
        %3308 = vmatpush1.bf16.msra.mxu0 0
        %3309 = vmatprep.subr.bf16.mxu0 0
        %3310 = vmatpush1.bf16.msra.mxu0 0
        %3311 = vmatprep.subr.bf16.mxu0 0
        %3312 = vmatpush1.bf16.msra.mxu0 0
        %3313 = vmatprep.mubr.bf16.mxu0 0
        %3314 = vmatmul.mubr.bf16.gmra.mrb[0].mxu0 %v3239
        %v3315 = vpop.f32.mrb[0].mxu0
        %v3316 = vadd.f32 0.0, %v3315
        %v3317 = vpop.f32.mrb[0].mxu0
        %v3318 = vadd.f32 0.0, %v3317
        %v3319 = vpop.f32.mrb[0].mxu0
        %v3320 = vpop.f32.mrb[0].mxu0
        %3321 = vdwg.mxu0
        %v3324 = vunpack.c.l.b16 %v3237
        %v3325 = vunpack.c.l.b16 %v3238
        %v3326 = vsel %vm1169, %v3325, %v3324
        %v3327 = vpack.c.b16 %v3326, %v3326
        %v3329 = vsel %vm878, %v3327, 0
        %3331 = vmatprep.subr.bf16.mxu0 %v1190
        %3332 = vmatpush1.bf16.msra.mxu0 %v1187
        %3333 = vmatprep.subr.bf16.mxu0 0
        %3334 = vmatpush1.bf16.msra.mxu0 0
        %3335 = vmatprep.subr.bf16.mxu0 0
        %3336 = vmatpush1.bf16.msra.mxu0 0
        %3337 = vmatprep.subr.bf16.mxu0 0
        %3338 = vmatpush1.bf16.msra.mxu0 0
        %3339 = vmatprep.subr.bf16.mxu0 0
        %3340 = vmatpush1.bf16.msra.mxu0 0
        %3341 = vmatprep.subr.bf16.mxu0 0
        %3342 = vmatpush1.bf16.msra.mxu0 0
        %3343 = vmatprep.subr.bf16.mxu0 0
        %3344 = vmatpush1.bf16.msra.mxu0 0
        %3345 = vmatprep.subr.bf16.mxu0 0
        %3346 = vmatpush1.bf16.msra.mxu0 0
        %3347 = vmatprep.subr.bf16.mxu0 0
        %3348 = vmatpush1.bf16.msra.mxu0 0
        %3349 = vmatprep.subr.bf16.mxu0 0
        %3350 = vmatpush1.bf16.msra.mxu0 0
        %3351 = vmatprep.subr.bf16.mxu0 0
        %3352 = vmatpush1.bf16.msra.mxu0 0
        %3353 = vmatprep.subr.bf16.mxu0 0
        %3354 = vmatpush1.bf16.msra.mxu0 0
        %3355 = vmatprep.subr.bf16.mxu0 0
        %3356 = vmatpush1.bf16.msra.mxu0 0
        %3357 = vmatprep.subr.bf16.mxu0 0
        %3358 = vmatpush1.bf16.msra.mxu0 0
        %3359 = vmatprep.subr.bf16.mxu0 0
        %3360 = vmatpush1.bf16.msra.mxu0 0
        %3361 = vmatprep.subr.bf16.mxu0 0
        %3362 = vmatpush1.bf16.msra.mxu0 0
        %3363 = vmatprep.mubr.bf16.mxu0 0
        %3364 = vmatmul.mubr.bf16.gmra.mrb[0].mxu0 %v3329
        %v3365 = vpop.f32.mrb[0].mxu0
        %v3366 = vadd.f32 %v3275, %v3365
        %v3367 = vpop.f32.mrb[0].mxu0
        %v3368 = vadd.f32 %v3277, %v3367
        %v3369 = vpop.f32.mrb[0].mxu0
        %v3370 = vpop.f32.mrb[0].mxu0
        %3371 = vdwg.mxu0
        %3372 = vmatprep.subr.bf16.mxu0 %v1196
        %3373 = vmatpush1.bf16.msra.mxu0 %v1193
        %3374 = vmatprep.subr.bf16.mxu0 0
        %3375 = vmatpush1.bf16.msra.mxu0 0
        %3376 = vmatprep.subr.bf16.mxu0 0
        %3377 = vmatpush1.bf16.msra.mxu0 0
        %3378 = vmatprep.subr.bf16.mxu0 0
        %3379 = vmatpush1.bf16.msra.mxu0 0
        %3380 = vmatprep.subr.bf16.mxu0 0
        %3381 = vmatpush1.bf16.msra.mxu0 0
        %3382 = vmatprep.subr.bf16.mxu0 0
        %3383 = vmatpush1.bf16.msra.mxu0 0
        %3384 = vmatprep.subr.bf16.mxu0 0
        %3385 = vmatpush1.bf16.msra.mxu0 0
        %3386 = vmatprep.subr.bf16.mxu0 0
        %3387 = vmatpush1.bf16.msra.mxu0 0
        %3388 = vmatprep.subr.bf16.mxu0 0
        %3389 = vmatpush1.bf16.msra.mxu0 0
        %3390 = vmatprep.subr.bf16.mxu0 0
        %3391 = vmatpush1.bf16.msra.mxu0 0
        %3392 = vmatprep.subr.bf16.mxu0 0
        %3393 = vmatpush1.bf16.msra.mxu0 0
        %3394 = vmatprep.subr.bf16.mxu0 0
        %3395 = vmatpush1.bf16.msra.mxu0 0
        %3396 = vmatprep.subr.bf16.mxu0 0
        %3397 = vmatpush1.bf16.msra.mxu0 0
        %3398 = vmatprep.subr.bf16.mxu0 0
        %3399 = vmatpush1.bf16.msra.mxu0 0
        %3400 = vmatprep.subr.bf16.mxu0 0
        %3401 = vmatpush1.bf16.msra.mxu0 0
        %3402 = vmatprep.subr.bf16.mxu0 0
        %3403 = vmatpush1.bf16.msra.mxu0 0
        %3404 = vmatprep.mubr.bf16.mxu0 0
        %3405 = vmatmul.mubr.bf16.gmra.mrb[0].mxu0 %v3329
        %v3406 = vpop.f32.mrb[0].mxu0
        %v3407 = vadd.f32 %v3316, %v3406
        %v3408 = vpop.f32.mrb[0].mxu0
        %v3409 = vadd.f32 %v3318, %v3408
        %v3410 = vpop.f32.mrb[0].mxu0
        %v3411 = vpop.f32.mrb[0].mxu0
        %3412 = vdwg.mxu0
        %v3413 = vadd.f32 %v3366, %v1284
        %v3414 = vadd.f32 %v3368, %v1288
        %v3415 = vadd.f32 %v3407, %v1292
        %v3416 = vadd.f32 %v3409, %v1296
        %v3417 = vmul.f32 %v3413, 0.5
        %v3418 = vtanh.pop %v3417
        %v3419 = vadd.f32 %v3418, 1.0
        %v3420 = vmul.f32 %v3419, 0.5
        %v3421 = vmul.f32 %v3414, 0.5
        %v3422 = vtanh.pop %v3421
        %v3423 = vadd.f32 %v3422, 1.0
        %v3424 = vmul.f32 %v3423, 0.5
        %v3425 = vtanh.pop %v3415
        %v3426 = vmul.f32 %v3416, 0.5
        %v3427 = vtanh.pop %v3426
        %v3428 = vadd.f32 %v3427, 1.0
        %v3429 = vmul.f32 %v3428, 0.5
        %v3430 = vmul.f32 %v3424, %v3236
        %v3431 = vmul.f32 %v3420, %v3425
        %v3432 = vadd.f32 %v3430, %v3431
        %v3433 = vtanh.pop %v3432
        %v3434 = vmul.f32 %v3429, %v3433
        %3435 = vst [vmem:[#allocation2] sm:$0x3] %v3434
        %3436 = vst [vmem:[#allocation3] sm:$0x3] %v3432
        %v3437 = vld [vmem:[%s665] sm:$0x3]
        %v3438 = vld [vmem:[%s1326] sm:$0x3]
        %v3439 = vpack.c.bf16 %v3434, %v3434
        %v3440 = vpack.c.bf16 %v3437, %v3437
        %3441 = vmatprep.subr.bf16.mxu0 %v1427
        %3442 = vmatpush1.bf16.msra.mxu0 %v1426
        %3443 = vmatprep.subr.bf16.mxu0 %v1431
        %3444 = vmatpush1.bf16.msra.mxu0 %v1430
        %3445 = vmatprep.subr.bf16.mxu0 %v1435
        %3446 = vmatpush1.bf16.msra.mxu0 %v1434
        %3447 = vmatprep.subr.bf16.mxu0 %v1439
        %3448 = vmatpush1.bf16.msra.mxu0 %v1438
        %3449 = vmatprep.subr.bf16.mxu0 %v1443
        %3450 = vmatpush1.bf16.msra.mxu0 %v1442
        %3451 = vmatprep.subr.bf16.mxu0 %v1447
        %3452 = vmatpush1.bf16.msra.mxu0 %v1446
        %3453 = vmatprep.subr.bf16.mxu0 %v1451
        %3454 = vmatpush1.bf16.msra.mxu0 %v1450
        %3455 = vmatprep.subr.bf16.mxu0 %v1455
        %3456 = vmatpush1.bf16.msra.mxu0 %v1454
        %3457 = vmatprep.subr.bf16.mxu0 0
        %3458 = vmatpush1.bf16.msra.mxu0 0
        %3459 = vmatprep.subr.bf16.mxu0 0
        %3460 = vmatpush1.bf16.msra.mxu0 0
        %3461 = vmatprep.subr.bf16.mxu0 0
        %3462 = vmatpush1.bf16.msra.mxu0 0
        %3463 = vmatprep.subr.bf16.mxu0 0
        %3464 = vmatpush1.bf16.msra.mxu0 0
        %3465 = vmatprep.subr.bf16.mxu0 0
        %3466 = vmatpush1.bf16.msra.mxu0 0
        %3467 = vmatprep.subr.bf16.mxu0 0
        %3468 = vmatpush1.bf16.msra.mxu0 0
        %3469 = vmatprep.subr.bf16.mxu0 0
        %3470 = vmatpush1.bf16.msra.mxu0 0
        %3471 = vmatprep.subr.bf16.mxu0 0
        %3472 = vmatpush1.bf16.msra.mxu0 0
        %3473 = vmatprep.mubr.bf16.mxu0 0
        %3474 = vmatmul.mubr.bf16.gmra.mrb[0].mxu0 %v3440
        %v3475 = vpop.f32.mrb[0].mxu0
        %v3476 = vadd.f32 0.0, %v3475
        %v3477 = vpop.f32.mrb[0].mxu0
        %v3478 = vadd.f32 0.0, %v3477
        %v3479 = vpop.f32.mrb[0].mxu0
        %v3480 = vpop.f32.mrb[0].mxu0
        %3481 = vdwg.mxu0
        %3482 = vmatprep.subr.bf16.mxu0 %v1429
        %3483 = vmatpush1.bf16.msra.mxu0 %v1428
        %3484 = vmatprep.subr.bf16.mxu0 %v1433
        %3485 = vmatpush1.bf16.msra.mxu0 %v1432
        %3486 = vmatprep.subr.bf16.mxu0 %v1437
        %3487 = vmatpush1.bf16.msra.mxu0 %v1436
        %3488 = vmatprep.subr.bf16.mxu0 %v1441
        %3489 = vmatpush1.bf16.msra.mxu0 %v1440
        %3490 = vmatprep.subr.bf16.mxu0 %v1445
        %3491 = vmatpush1.bf16.msra.mxu0 %v1444
        %3492 = vmatprep.subr.bf16.mxu0 %v1449
        %3493 = vmatpush1.bf16.msra.mxu0 %v1448
        %3494 = vmatprep.subr.bf16.mxu0 %v1453
        %3495 = vmatpush1.bf16.msra.mxu0 %v1452
        %3496 = vmatprep.subr.bf16.mxu0 %v1457
        %3497 = vmatpush1.bf16.msra.mxu0 %v1456
        %3498 = vmatprep.subr.bf16.mxu0 0
        %3499 = vmatpush1.bf16.msra.mxu0 0
        %3500 = vmatprep.subr.bf16.mxu0 0
        %3501 = vmatpush1.bf16.msra.mxu0 0
        %3502 = vmatprep.subr.bf16.mxu0 0
        %3503 = vmatpush1.bf16.msra.mxu0 0
        %3504 = vmatprep.subr.bf16.mxu0 0
        %3505 = vmatpush1.bf16.msra.mxu0 0
        %3506 = vmatprep.subr.bf16.mxu0 0
        %3507 = vmatpush1.bf16.msra.mxu0 0
        %3508 = vmatprep.subr.bf16.mxu0 0
        %3509 = vmatpush1.bf16.msra.mxu0 0
        %3510 = vmatprep.subr.bf16.mxu0 0
        %3511 = vmatpush1.bf16.msra.mxu0 0
        %3512 = vmatprep.subr.bf16.mxu0 0
        %3513 = vmatpush1.bf16.msra.mxu0 0
        %3514 = vmatprep.mubr.bf16.mxu0 0
        %3515 = vmatmul.mubr.bf16.gmra.mrb[0].mxu0 %v3440
        %v3516 = vpop.f32.mrb[0].mxu0
        %v3517 = vadd.f32 0.0, %v3516
        %v3518 = vpop.f32.mrb[0].mxu0
        %v3519 = vadd.f32 0.0, %v3518
        %v3520 = vpop.f32.mrb[0].mxu0
        %v3521 = vpop.f32.mrb[0].mxu0
        %3522 = vdwg.mxu0
        %3523 = vmatprep.subr.bf16.mxu0 %v1669
        %3524 = vmatpush1.bf16.msra.mxu0 %v1668
        %3525 = vmatprep.subr.bf16.mxu0 %v1673
        %3526 = vmatpush1.bf16.msra.mxu0 %v1672
        %3527 = vmatprep.subr.bf16.mxu0 %v1677
        %3528 = vmatpush1.bf16.msra.mxu0 %v1676
        %3529 = vmatprep.subr.bf16.mxu0 %v1681
        %3530 = vmatpush1.bf16.msra.mxu0 %v1680
        %3531 = vmatprep.subr.bf16.mxu0 %v1685
        %3532 = vmatpush1.bf16.msra.mxu0 %v1684
        %3533 = vmatprep.subr.bf16.mxu0 %v1689
        %3534 = vmatpush1.bf16.msra.mxu0 %v1688
        %3535 = vmatprep.subr.bf16.mxu0 %v1693
        %3536 = vmatpush1.bf16.msra.mxu0 %v1692
        %3537 = vmatprep.subr.bf16.mxu0 %v1697
        %3538 = vmatpush1.bf16.msra.mxu0 %v1696
        %3539 = vmatprep.subr.bf16.mxu0 0
        %3540 = vmatpush1.bf16.msra.mxu0 0
        %3541 = vmatprep.subr.bf16.mxu0 0
        %3542 = vmatpush1.bf16.msra.mxu0 0
        %3543 = vmatprep.subr.bf16.mxu0 0
        %3544 = vmatpush1.bf16.msra.mxu0 0
        %3545 = vmatprep.subr.bf16.mxu0 0
        %3546 = vmatpush1.bf16.msra.mxu0 0
        %3547 = vmatprep.subr.bf16.mxu0 0
        %3548 = vmatpush1.bf16.msra.mxu0 0
        %3549 = vmatprep.subr.bf16.mxu0 0
        %3550 = vmatpush1.bf16.msra.mxu0 0
        %3551 = vmatprep.subr.bf16.mxu0 0
        %3552 = vmatpush1.bf16.msra.mxu0 0
        %3553 = vmatprep.subr.bf16.mxu0 0
        %3554 = vmatpush1.bf16.msra.mxu0 0
        %3555 = vmatprep.mubr.bf16.mxu0 0
        %3556 = vmatmul.mubr.bf16.gmra.mrb[0].mxu0 %v3439
        %v3557 = vpop.f32.mrb[0].mxu0
        %v3558 = vadd.f32 %v3476, %v3557
        %v3559 = vpop.f32.mrb[0].mxu0
        %v3560 = vadd.f32 %v3478, %v3559
        %v3561 = vpop.f32.mrb[0].mxu0
        %v3562 = vpop.f32.mrb[0].mxu0
        %3563 = vdwg.mxu0
        %3564 = vmatprep.subr.bf16.mxu0 %v1671
        %3565 = vmatpush1.bf16.msra.mxu0 %v1670
        %3566 = vmatprep.subr.bf16.mxu0 %v1675
        %3567 = vmatpush1.bf16.msra.mxu0 %v1674
        %3568 = vmatprep.subr.bf16.mxu0 %v1679
        %3569 = vmatpush1.bf16.msra.mxu0 %v1678
        %3570 = vmatprep.subr.bf16.mxu0 %v1683
        %3571 = vmatpush1.bf16.msra.mxu0 %v1682
        %3572 = vmatprep.subr.bf16.mxu0 %v1687
        %3573 = vmatpush1.bf16.msra.mxu0 %v1686
        %3574 = vmatprep.subr.bf16.mxu0 %v1691
        %3575 = vmatpush1.bf16.msra.mxu0 %v1690
        %3576 = vmatprep.subr.bf16.mxu0 %v1695
        %3577 = vmatpush1.bf16.msra.mxu0 %v1694
        %3578 = vmatprep.subr.bf16.mxu0 %v1699
        %3579 = vmatpush1.bf16.msra.mxu0 %v1698
        %3580 = vmatprep.subr.bf16.mxu0 0
        %3581 = vmatpush1.bf16.msra.mxu0 0
        %3582 = vmatprep.subr.bf16.mxu0 0
        %3583 = vmatpush1.bf16.msra.mxu0 0
        %3584 = vmatprep.subr.bf16.mxu0 0
        %3585 = vmatpush1.bf16.msra.mxu0 0
        %3586 = vmatprep.subr.bf16.mxu0 0
        %3587 = vmatpush1.bf16.msra.mxu0 0
        %3588 = vmatprep.subr.bf16.mxu0 0
        %3589 = vmatpush1.bf16.msra.mxu0 0
        %3590 = vmatprep.subr.bf16.mxu0 0
        %3591 = vmatpush1.bf16.msra.mxu0 0
        %3592 = vmatprep.subr.bf16.mxu0 0
        %3593 = vmatpush1.bf16.msra.mxu0 0
        %3594 = vmatprep.subr.bf16.mxu0 0
        %3595 = vmatpush1.bf16.msra.mxu0 0
        %3596 = vmatprep.mubr.bf16.mxu0 0
        %3597 = vmatmul.mubr.bf16.gmra.mrb[0].mxu0 %v3439
        %v3598 = vpop.f32.mrb[0].mxu0
        %v3599 = vadd.f32 %v3517, %v3598
        %v3600 = vpop.f32.mrb[0].mxu0
        %v3601 = vadd.f32 %v3519, %v3600
        %v3602 = vpop.f32.mrb[0].mxu0
        %v3603 = vpop.f32.mrb[0].mxu0
        %3604 = vdwg.mxu0
        %v3605 = vadd.f32 %v3558, %v1818
        %v3606 = vadd.f32 %v3560, %v1822
        %v3607 = vadd.f32 %v3599, %v1826
        %v3608 = vadd.f32 %v3601, %v1830
        %v3609 = vmul.f32 %v3605, 0.5
        %v3610 = vtanh.pop %v3609
        %v3611 = vadd.f32 %v3610, 1.0
        %v3612 = vmul.f32 %v3611, 0.5
        %v3613 = vmul.f32 %v3606, 0.5
        %v3614 = vtanh.pop %v3613
        %v3615 = vadd.f32 %v3614, 1.0
        %v3616 = vmul.f32 %v3615, 0.5
        %v3617 = vtanh.pop %v3607
        %v3618 = vmul.f32 %v3608, 0.5
        %v3619 = vtanh.pop %v3618
        %v3620 = vadd.f32 %v3619, 1.0
        %v3621 = vmul.f32 %v3620, 0.5
        %v3622 = vmul.f32 %v3616, %v3438
        %v3623 = vmul.f32 %v3612, %v3617
        %v3624 = vadd.f32 %v3622, %v3623
        %v3625 = vtanh.pop %v3624
        %v3626 = vmul.f32 %v3621, %v3625
        %3627 = vst [vmem:[%s665] sm:$0x3] %v3626
        %3628 = vst [vmem:[%s1326] sm:$0x3] %v3624
        %v3637 = vrot.slane %v917, 7
        %v3638 = vsel %vm1169, %v3637, %v898
        %v3639 = vrot.slane %v2054, 7
        %v3640 = vsel %vm1169, %v3639, %v2035
        %v3641 = vrot.slane %v2644, 7
        %v3642 = vsel %vm1169, %v3641, %v2625
        %v3643 = vrot.slane %v3234, 7
        %v3644 = vsel %vm1169, %v3643, %v3215
        %vm3649 = vcmask 58368
        %3650 = vst.msk [vmem:[%s499] sm:$0x3] %vm3649, %v3638
        %3651 = vst.msk [vmem:[%s499 + $0x2] sm:$0x3] %vm3649, %v3640
        %3652 = vst.msk [vmem:[%s499 + $0x4] sm:$0x3] %vm3649, %v3642
        %3653 = vst.msk [vmem:[%s499 + $0x6] sm:$0x3] %vm3649, %v3644
        %v3655 = vrot.slane %v2446, 6
        %v3658 = vrot.slane %v3036, 4
        %v3661 = vrot.slane %v3626, 2
        %v3663 = vsel %vm762, %v1856, %v3655
        %v3664 = vsel %vm1185, %v3663, %v3658
        %vm3665 = vcmask 1045504
        %v3666 = vsel %vm3665, %v3664, %v3661
        %v3667 = vpack.c.bf16 %v3666, %v3666
        %v3669 = vlaneseq
        %v3670 = vshrl.u32 %v3669, 7
        %v3671 = vsub.s32 0, %v3670
        %v3672 = vrot.slane %v564, %v3671
        %v3690 = vunpack.c.l.b16 %v548
        %v3691 = vunpack.c.l.b16 %v549
        %v3692 = vunpack.c.l.b16 %v550
        %v3693 = vunpack.c.l.b16 %v551
        %v3694 = vunpack.c.l.b16 %v552
        %v3695 = vunpack.c.l.b16 %v553
        %v3696 = vunpack.c.l.b16 %v554
        %v3697 = vunpack.c.l.b16 %v555
        %v3698 = vunpack.c.l.b16 %v556
        %v3699 = vunpack.c.l.b16 %v557
        %v3700 = vunpack.c.l.b16 %v558
        %v3701 = vunpack.c.l.b16 %v559
        %v3702 = vunpack.c.l.b16 %v560
        %v3703 = vunpack.c.l.b16 %v561
        %v3704 = vunpack.c.l.b16 %v562
        %v3705 = vunpack.c.l.b16 %v563
        %v3706 = vpack.c.b16 %v3691, %v3690
        %v3707 = vpack.c.b16 %v3693, %v3692
        %v3708 = vpack.c.b16 %v3695, %v3694
        %v3709 = vpack.c.b16 %v3697, %v3696
        %v3710 = vpack.c.b16 %v3699, %v3698
        %v3711 = vpack.c.b16 %v3701, %v3700
        %v3712 = vpack.c.b16 %v3703, %v3702
        %v3713 = vpack.c.b16 %v3705, %v3704
        %3722 = vmatprep.subr.bf16.mxu0 0
        %3723 = vmatpush1.bf16.msra.mxu0 %v3706
        %3724 = vmatprep.subr.bf16.mxu0 0
        %3725 = vmatpush1.bf16.msra.mxu0 %v3707
        %3726 = vmatprep.subr.bf16.mxu0 0
        %3727 = vmatpush1.bf16.msra.mxu0 %v3708
        %3728 = vmatprep.subr.bf16.mxu0 0
        %3729 = vmatpush1.bf16.msra.mxu0 %v3709
        %3730 = vmatprep.subr.bf16.mxu0 0
        %3731 = vmatpush1.bf16.msra.mxu0 %v3710
        %3732 = vmatprep.subr.bf16.mxu0 0
        %3733 = vmatpush1.bf16.msra.mxu0 %v3711
        %3734 = vmatprep.subr.bf16.mxu0 0
        %3735 = vmatpush1.bf16.msra.mxu0 %v3712
        %3736 = vmatprep.subr.bf16.mxu0 0
        %3737 = vmatpush1.bf16.msra.mxu0 %v3713
        %3738 = vmatprep.subr.bf16.mxu0 0
        %3739 = vmatpush1.bf16.msra.mxu0 0
        %3740 = vmatprep.subr.bf16.mxu0 0
        %3741 = vmatpush1.bf16.msra.mxu0 0
        %3742 = vmatprep.subr.bf16.mxu0 0
        %3743 = vmatpush1.bf16.msra.mxu0 0
        %3744 = vmatprep.subr.bf16.mxu0 0
        %3745 = vmatpush1.bf16.msra.mxu0 0
        %3746 = vmatprep.subr.bf16.mxu0 0
        %3747 = vmatpush1.bf16.msra.mxu0 0
        %3748 = vmatprep.subr.bf16.mxu0 0
        %3749 = vmatpush1.bf16.msra.mxu0 0
        %3750 = vmatprep.subr.bf16.mxu0 0
        %3751 = vmatpush1.bf16.msra.mxu0 0
        %3752 = vmatprep.subr.bf16.mxu0 0
        %3753 = vmatpush1.bf16.msra.mxu0 0
        %3754 = vmatprep.mubr.bf16.mxu0 0
        %3755 = vmatmul.mubr.bf16.gmra.mrb[0].mxu0 %v3667
        %v3756 = vpop.f32.mrb[0].mxu0
        %v3757 = vadd.f32 %v3672, %v3756
        %v3758 = vpop.f32.mrb[0].mxu0
        %v3759 = vpop.f32.mrb[0].mxu0
        %v3760 = vpop.f32.mrb[0].mxu0
        %3761 = vdwg.mxu0
        %v3763 = vcombine.high %v3757, %v3757
        %v3765 = vunpack.c.l.s4 1983009808
        %v3766 = vunpack.c.0.s8 %v3765
        %v3767 = vlaneseq
        %v3768 = vshrl.u32 %v3767, 7
        %v3769 = vsub.s32 %v3766, %v3768
        %v3770 = vrot.slane %v3757, %v3769
        %v3772 = vunpack.c.l.s4 1983009808
        %v3773 = vunpack.c.0.s8 %v3772
        %v3774 = vlaneseq
        %v3775 = vshrl.u32 %v3774, 7
        %v3776 = vsub.s32 %v3773, %v3775
        %v3777 = vrot.slane %v3763, %v3776
        %v3778 = vcombine.high %v3770, %v3770
        %v3779 = vcombine.high %v3777, %v3777
        %3784 = vst [vmem:[%s506] sm:$0x3] %v3770
        %3785 = vst [vmem:[%s506 + $0x2] sm:$0x3] %v3778
        %3786 = vst [vmem:[%s506 + $0x4] sm:$0x3] %v3777
        %3787 = vst [vmem:[%s506 + $0x6] sm:$0x3] %v3779
        %s3788 = sand.u32 %s293, 1
        %s3789 = scalar_lea.sflag [#allocation6], %s3788
        %s3790 = sand.u32 %s293, 1
        %s3791 = smul.addr %s3790, 8
        %s3792 = scalar_lea.vmem [#allocation12], %s3791
        %s3793 = sand.u32 %s321, 1
        %s3794 = scalar_lea.sflag [#allocation14], %s3793
        %s3795 = sand.u32 %s321, 1
        %s3796 = smul.addr %s3795, 8
        %s3797 = scalar_lea.vmem [#allocation13], %s3796
        // Predicated region
        $region85: #{tpu_custom_call.1} parent=63 // pred_check
          %p3798 = pneg %p303
        $region86: #{tpu_custom_call.1} parent=63 // pred_check_branch
          %3800 = sbr.rel (%p3798) target = $region88
        $region87: #{tpu_custom_call.1} parent=63 // pred_region
          %s3801 = smul.u32 4, %s38
          %s3803 = ssub.s32 128, 128
          %3804 = vsyncadd %s3789, %s3803
          %s3805 = sadd.s32 %s37, %s3801
          %s3806 = smul.addr %s3805, 32
          %s3807 = scalar_lea.hbm %s11, %s3806
          %s3808 = sshll.u32 %s3792, 4
          %s3809 = int_to_ptr.vmem [resolvable:$true] %s3808
          %3814 = dma.vmem_to_hbm [thread:$0]  %s3809, 128, %s3807, %s3789, 32, 32, 2
        $region88: #{tpu_custom_call.1} parent=63 // pred_fallthru
          _
        // Predicated region
        $region89: #{tpu_custom_call.1} parent=63 // pred_check
          %p3815 = pneg %p331
        $region90: #{tpu_custom_call.1} parent=63 // pred_check_branch
          %3817 = sbr.rel (%p3815) target = $region92
        $region91: #{tpu_custom_call.1} parent=63 // pred_region
          %s3818 = smul.u32 4, %s38
          %s3820 = ssub.s32 128, 128
          %3821 = vsyncadd %s3794, %s3820
          %s3822 = sadd.s32 %s37, %s3818
          %s3823 = smul.addr %s3822, 32
          %s3824 = scalar_lea.hbm %s12, %s3823
          %s3825 = sshll.u32 %s3797, 4
          %s3826 = int_to_ptr.vmem [resolvable:$true] %s3825
          %3831 = dma.vmem_to_hbm [thread:$0]  %s3826, 128, %s3824, %s3794, 32, 32, 2
        $region92: #{tpu_custom_call.1} parent=63 // pred_fallthru
          _
      $region64: #{tpu_custom_call.1} parent=5 // pred_fallthru
        _
      %p3832 = scmp.le.s32.totalorder 2, %s28
      // Predicated region
      $region93: #{tpu_custom_call.1} parent=5 // pred_check
        %p3833 = pneg %p3832
      $region94: #{tpu_custom_call.1} parent=5 // pred_check_branch
        %3835 = sbr.rel (%p3833) target = $region96
      $region95: #{tpu_custom_call.1} parent=5 // pred_region
        %s3836 = ssub.s32 %s28, 2
        // Predicated region
        $region97: #{tpu_custom_call.1} parent=95 // pred_check
          %p3837 = pneg %p309
        $region98: #{tpu_custom_call.1} parent=95 // pred_check_branch
          %3839 = sbr.rel (%p3837) target = $region100
        $region99: #{tpu_custom_call.1} parent=95 // pred_region
          %s3840 = sand.u32 %s294, 1
          %s3841 = scalar_lea.sflag [#allocation6], %s3840
          %s3842 = sand.u32 %s294, 1
          %s3843 = smul.addr %s3842, 8
          %s3844 = scalar_lea.vmem [#allocation12], %s3843
          %3845 = dma.done %s3841, 128
        $region100: #{tpu_custom_call.1} parent=95 // pred_fallthru
          _
        // Predicated region
        $region101: #{tpu_custom_call.1} parent=95 // pred_check
          %p3846 = pneg %p337
        $region102: #{tpu_custom_call.1} parent=95 // pred_check_branch
          %3848 = sbr.rel (%p3846) target = $region104
        $region103: #{tpu_custom_call.1} parent=95 // pred_region
          %s3849 = sand.u32 %s322, 1
          %s3850 = scalar_lea.sflag [#allocation14], %s3849
          %s3851 = sand.u32 %s322, 1
          %s3852 = smul.addr %s3851, 8
          %s3853 = scalar_lea.vmem [#allocation13], %s3852
          %3854 = dma.done %s3850, 128
        $region104: #{tpu_custom_call.1} parent=95 // pred_fallthru
          _
      $region96: #{tpu_custom_call.1} parent=5 // pred_fallthru
        _
    $region6: #{tpu_custom_call.1} parent=1 // loop_footer
      %s32 = sadd.s32 1, %s28
    $region7: #{tpu_custom_call.1} parent=1 // loop_footer_branch
      %27 = sbr.rel target = $region3
    $region8: #{tpu_custom_call.1} parent=1 // loop_exit
      _
    %3855 = vsyncpa [#allocation5], 1
    %s3856 = scalar_lea.sflag [#allocation5], 1
    %3857 = vsyncpa %s3856, 1
    %3858 = vsyncpa [#allocation8], 1
    %3859 = vsyncpa [#allocation11], 1
    %3860 = vsyncpa [#allocation6], 1
    %s3861 = scalar_lea.sflag [#allocation6], 1
    %3862 = vsyncpa %s3861, 1
    %3863 = vsyncpa [#allocation14], 1
    %s3864 = scalar_lea.sflag [#allocation14], 1
    %3865 = vsyncpa %s3864, 1

</llo_original>
